<compile_context>
chip_gen: v5e
topology: v5e:2x2
jax: 0.10.0
libtpu: 0.0.40
codegen_flags: <defaults>
</compile_context>

<pallas_src>
import jax
import jax.numpy as jnp
from jax.experimental import pallas as pl
from jax.experimental.pallas import tpu as pltpu

LANE = 128


def basic_block_kernel(x_ref, w1_ref, s1_ref, b1_ref, w2_ref, s2_ref, b2_ref,
                       o_ref, ywr):
    # x_ref : (1, H, W, Cp)   bf16  (channels pre-padded to Cp, lane-dense)
    # w*_ref: (3, 3*Cp, Cp)   bf16  width-grouped taps: [dh, dw*Cp + ci, co]
    # s*/b* : (1, Cp)         f32   folded BN scale / bias
    # o_ref : (1, H, W, Cp)   f32
    # ywr   : (H+2, W, 3*Cp)  bf16  scratch; ywr[hh, w, dw*Cp+c] = src_pad[hh, w+dw, c]
    _, H, W, Cp = o_ref.shape
    K = 3 * Cp
    bf16 = jnp.bfloat16

    # ---- zero only the halo border (never touched by the data stores) ----
    zrow = jnp.zeros((1, W, K), bf16)
    ywr[0:1, :, :] = zrow                                   # top pad row
    ywr[H + 1:H + 2, :, :] = zrow                           # bottom pad row
    zcol = jnp.zeros((H + 2, 1, Cp), bf16)
    ywr[:, 0:1, 0:Cp] = zcol                                # dw=0 chunk, left pad col
    ywr[:, W - 1:W, 2 * Cp:3 * Cp] = zcol                   # dw=2 chunk, right pad col

    def store_shifted(v):
        # v: (H, W, Cp) bf16 -> the three width-shifted copies (lane-aligned chunks).
        ywr[1:H + 1, 1:W, 0:Cp] = v[:, 0:W - 1, :]          # dw = 0
        ywr[1:H + 1, :, Cp:2 * Cp] = v                      # dw = 1
        ywr[1:H + 1, 0:W - 1, 2 * Cp:3 * Cp] = v[:, 1:W, :] # dw = 2

    def conv3x3(w_ref):
        # 3 MXU matmuls, contraction depth 3*Cp, f32 accumulation.
        acc = None
        for dh in range(3):
            patch = ywr[dh:dh + H, :, :].reshape(H * W, K)
            d = jnp.dot(patch, w_ref[dh, :, :],
                        preferred_element_type=jnp.float32)
            acc = d if acc is None else acc + d
        return acc                                          # (H*W, Cp) f32

    # ---- conv1 + bn1 (folded) + relu ----
    store_shifted(x_ref[0])
    out1 = jnp.maximum(conv3x3(w1_ref) * s1_ref[...] + b1_ref[...], 0.0)

    # ---- conv2 + bn2 (folded); scratch data region is fully overwritten ----
    store_shifted(out1.astype(bf16).reshape(H, W, Cp))
    out2 = conv3x3(w2_ref) * s2_ref[...] + b2_ref[...]

    # ---- residual add (identity = lane-aligned input block) + relu ----
    identity = x_ref[0].reshape(H * W, Cp).astype(jnp.float32)
    o_ref[0] = jnp.maximum(out2 + identity, 0.0).reshape(H, W, Cp)


def basic_block_forward(x_nchw, params, eps=1e-5):
    """BasicBlock.forward (eval-mode BN, stride=1, groups=1, no downsample)."""
    N, Cin, H, W = x_nchw.shape
    w1, w2 = params["w1"], params["w2"]
    Cout = w1.shape[0]
    assert Cin == Cout, "no downsample -> inplanes must equal planes"
    C = Cout
    Cp = ((C + LANE - 1) // LANE) * LANE      # lane-dense channel padding

    # NCHW -> NHWC, bf16, channel pad (padded channels stay exactly zero).
    x = jnp.transpose(x_nchw, (0, 2, 3, 1)).astype(jnp.bfloat16)
    x = jnp.pad(x, ((0, 0), (0, 0), (0, 0), (0, Cp - C)))

    def prep_w(w):
        # (Cout, Cin, 3, 3) -> (3, 3*Cp, Cp) bf16 with index [dh, dw*Cp+ci, co].
        w_ = jnp.transpose(w, (2, 3, 1, 0))                 # (dh, dw, ci, co)
        w_ = jnp.pad(w_, ((0, 0), (0, 0),
                          (0, Cp - w_.shape[2]), (0, Cp - w_.shape[3])))
        return w_.reshape(3, 3 * Cp, Cp).astype(jnp.bfloat16)

    def fold_bn(gamma, beta, mean, var):
        s = gamma / jnp.sqrt(var + eps)
        b = beta - mean * s
        s = jnp.pad(s, (0, Cp - C))
        b = jnp.pad(b, (0, Cp - C))
        return (s.reshape(1, Cp).astype(jnp.float32),
                b.reshape(1, Cp).astype(jnp.float32))

    w1g, w2g = prep_w(w1), prep_w(w2)
    s1, b1 = fold_bn(params["g1"], params["be1"], params["m1"], params["v1"])
    s2, b2 = fold_bn(params["g2"], params["be2"], params["m2"], params["v2"])

    img_spec = pl.BlockSpec((1, H, W, Cp), lambda b: (b, 0, 0, 0))
    w_spec = pl.BlockSpec((3, 3 * Cp, Cp), lambda b: (0, 0, 0))
    vec_spec = pl.BlockSpec((1, Cp), lambda b: (0, 0))

    out_nhwc = pl.pallas_call(
        basic_block_kernel,
        out_shape=jax.ShapeDtypeStruct((N, H, W, Cp), jnp.float32),
        grid_spec=pltpu.PrefetchScalarGridSpec(
            num_scalar_prefetch=0,
            grid=(N,),
            in_specs=[img_spec, w_spec, vec_spec, vec_spec,
                      w_spec, vec_spec, vec_spec],
            out_specs=img_spec,
            scratch_shapes=[pltpu.VMEM((H + 2, W, 3 * Cp), jnp.bfloat16)]),
        compiler_params=pltpu.CompilerParams(
            dimension_semantics=("parallel",)),
    )(x, w1g, s1, b1, w2g, s2, b2)

    return jnp.transpose(out_nhwc[:, :, :, :C], (0, 3, 1, 2))   # back to NCHW


def reference_forward(x, params, eps=1e-5):
    """Pure-JAX f32 reference (lax.conv) for correctness check."""
    def conv(x_, w):
        return jax.lax.conv_general_dilated(
            x_, w, window_strides=(1, 1), padding=((1, 1), (1, 1)),
            dimension_numbers=("NCHW", "OIHW", "NCHW"))

    def bn(x_, g, b, m, v):
        s = g / jnp.sqrt(v + eps)
        return x_ * s[None, :, None, None] + (b - m * s)[None, :, None, None]

    out = conv(x, params["w1"])
    out = jnp.maximum(bn(out, params["g1"], params["be1"],
                         params["m1"], params["v1"]), 0.0)
    out = conv(out, params["w2"])
    out = bn(out, params["g2"], params["be2"], params["m2"], params["v2"])
    return jnp.maximum(out + x, 0.0)


if __name__ == "__main__":
    N, C, H, W = 2, 8, 16, 16          # inplanes == planes == 8, stride 1
    key = jax.random.PRNGKey(0)
    ks = jax.random.split(key, 10)

    params = {
        "w1": 0.1 * jax.random.normal(ks[0], (C, C, 3, 3), jnp.float32),
        "w2": 0.1 * jax.random.normal(ks[1], (C, C, 3, 3), jnp.float32),
        "g1": 1.0 + 0.1 * jax.random.normal(ks[2], (C,), jnp.float32),
        "be1": 0.1 * jax.random.normal(ks[3], (C,), jnp.float32),
        "m1": 0.1 * jax.random.normal(ks[4], (C,), jnp.float32),
        "v1": 1.0 + 0.1 * jax.random.uniform(ks[5], (C,), jnp.float32),
        "g2": 1.0 + 0.1 * jax.random.normal(ks[6], (C,), jnp.float32),
        "be2": 0.1 * jax.random.normal(ks[7], (C,), jnp.float32),
        "m2": 0.1 * jax.random.normal(ks[8], (C,), jnp.float32),
        "v2": 1.0 + 0.1 * jax.random.uniform(ks[9], (C,), jnp.float32),
    }
    x = jax.random.normal(jax.random.PRNGKey(42), (N, C, H, W), jnp.float32)

    out = jax.block_until_ready(basic_block_forward(x, params))
    ref = jax.block_until_ready(reference_forward(x, params))

    assert out.shape == (N, C, H, W)
    # bf16 activations/weights -> relaxed tolerance vs. the f32 reference.
    err = float(jnp.max(jnp.abs(out - ref)))
    scale = float(jnp.max(jnp.abs(ref)))
    assert err <= 2e-2 * (1.0 + scale), f"mismatch vs reference: {err} (scale {scale})"
    print("KERNEL_OK")
</pallas_src>

<mosaic_0001>
module attributes {stable_mosaic.version = 11 : i64} {
  func.func @basic_block_kernel(%arg0: i32, %arg1: memref<1x16x16x128xbf16, #tpu.memory_space<vmem>>, %arg2: memref<3x384x128xbf16, #tpu.memory_space<vmem>>, %arg3: memref<1x128xf32, #tpu.memory_space<vmem>>, %arg4: memref<1x128xf32, #tpu.memory_space<vmem>>, %arg5: memref<3x384x128xbf16, #tpu.memory_space<vmem>>, %arg6: memref<1x128xf32, #tpu.memory_space<vmem>>, %arg7: memref<1x128xf32, #tpu.memory_space<vmem>>, %arg8: memref<1x16x16x128xf32, #tpu.memory_space<vmem>>, %arg9: memref<18x16x384xbf16, #tpu.memory_space<vmem>>) attributes {dimension_semantics = [#tpu.dimension_semantics<parallel>], iteration_bounds = array<i64: 2>, scalar_prefetch = 0 : i64, scratch_operands = 1 : i64, tpu.core_type = #tpu.core_type<tc>, window_params = [{transform_indices = @transform_0, window_bounds = array<i64: 1, 16, 16, 128>}, {pipeline_mode = #tpu.pipeline_mode<synchronous>, transform_indices = @transform_1, window_bounds = array<i64: 3, 384, 128>}, {pipeline_mode = #tpu.pipeline_mode<synchronous>, transform_indices = @transform_2, window_bounds = array<i64: 1, 128>}, {pipeline_mode = #tpu.pipeline_mode<synchronous>, transform_indices = @transform_3, window_bounds = array<i64: 1, 128>}, {pipeline_mode = #tpu.pipeline_mode<synchronous>, transform_indices = @transform_4, window_bounds = array<i64: 3, 384, 128>}, {pipeline_mode = #tpu.pipeline_mode<synchronous>, transform_indices = @transform_5, window_bounds = array<i64: 1, 128>}, {pipeline_mode = #tpu.pipeline_mode<synchronous>, transform_indices = @transform_6, window_bounds = array<i64: 1, 128>}, {transform_indices = @transform_7, window_bounds = array<i64: 1, 16, 16, 128>}]} {
    %cst = arith.constant 0.000000e+00 : bf16
    %0 = vector.broadcast %cst : bf16 to vector<1x16x384xbf16>
    %c0 = arith.constant 0 : index
    %c0_0 = arith.constant 0 : index
    %c0_1 = arith.constant 0 : index
    %1 = vector.load %arg9[%c0, %c0_0, %c0_1] : memref<18x16x384xbf16, #tpu.memory_space<vmem>>, vector<1x16x384xbf16>
    tpu.vector_store %arg9[%c0, %c0_0, %c0_1], %0 {strides = array<i32>} : memref<18x16x384xbf16, #tpu.memory_space<vmem>>, vector<1x16x384xbf16>,
    %c17 = arith.constant 17 : index
    %c0_2 = arith.constant 0 : index
    %c0_3 = arith.constant 0 : index
    %2 = vector.load %arg9[%c17, %c0_2, %c0_3] : memref<18x16x384xbf16, #tpu.memory_space<vmem>>, vector<1x16x384xbf16>
    tpu.vector_store %arg9[%c17, %c0_2, %c0_3], %0 {strides = array<i32>} : memref<18x16x384xbf16, #tpu.memory_space<vmem>>, vector<1x16x384xbf16>,
    %cst_4 = arith.constant 0.000000e+00 : bf16
    %3 = vector.broadcast %cst_4 : bf16 to vector<18x1x128xbf16>
    %c0_5 = arith.constant 0 : index
    %c0_6 = arith.constant 0 : index
    %c0_7 = arith.constant 0 : index
    %4 = vector.load %arg9[%c0_5, %c0_6, %c0_7] : memref<18x16x384xbf16, #tpu.memory_space<vmem>>, vector<18x1x128xbf16>
    tpu.vector_store %arg9[%c0_5, %c0_6, %c0_7], %3 {strides = array<i32>} : memref<18x16x384xbf16, #tpu.memory_space<vmem>>, vector<18x1x128xbf16>,
    %c0_8 = arith.constant 0 : index
    %c15 = arith.constant 15 : index
    %c256 = arith.constant 256 : index
    %5 = vector.load %arg9[%c0_8, %c15, %c256] : memref<18x16x384xbf16, #tpu.memory_space<vmem>>, vector<18x1x128xbf16>
    tpu.vector_store %arg9[%c0_8, %c15, %c256], %3 {strides = array<i32>} : memref<18x16x384xbf16, #tpu.memory_space<vmem>>, vector<18x1x128xbf16>,
    %c0_9 = arith.constant 0 : index
    %c0_10 = arith.constant 0 : index
    %c0_11 = arith.constant 0 : index
    %c0_12 = arith.constant 0 : index
    %6 = vector.load %arg1[%c0_9, %c0_10, %c0_11, %c0_12] : memref<1x16x16x128xbf16, #tpu.memory_space<vmem>>, vector<1x16x16x128xbf16>
    %7 = vector.shape_cast %6 : vector<1x16x16x128xbf16> to vector<16x16x128xbf16>
    %8 = vector.extract_strided_slice %7 {offsets = [0, 0, 0], sizes = [16, 15, 128], strides = [1, 1, 1]} : vector<16x16x128xbf16> to vector<16x15x128xbf16>
    %c1 = arith.constant 1 : index
    %c1_13 = arith.constant 1 : index
    %c0_14 = arith.constant 0 : index
    %9 = vector.load %arg9[%c1, %c1_13, %c0_14] : memref<18x16x384xbf16, #tpu.memory_space<vmem>>, vector<16x15x128xbf16>
    tpu.vector_store %arg9[%c1, %c1_13, %c0_14], %8 {strides = array<i32>} : memref<18x16x384xbf16, #tpu.memory_space<vmem>>, vector<16x15x128xbf16>,
    %c1_15 = arith.constant 1 : index
    %c0_16 = arith.constant 0 : index
    %c128 = arith.constant 128 : index
    %10 = vector.load %arg9[%c1_15, %c0_16, %c128] : memref<18x16x384xbf16, #tpu.memory_space<vmem>>, vector<16x16x128xbf16>
    tpu.vector_store %arg9[%c1_15, %c0_16, %c128], %7 {strides = array<i32>} : memref<18x16x384xbf16, #tpu.memory_space<vmem>>, vector<16x16x128xbf16>,
    %11 = vector.extract_strided_slice %7 {offsets = [0, 1, 0], sizes = [16, 15, 128], strides = [1, 1, 1]} : vector<16x16x128xbf16> to vector<16x15x128xbf16>
    %c1_17 = arith.constant 1 : index
    %c0_18 = arith.constant 0 : index
    %c256_19 = arith.constant 256 : index
    %12 = vector.load %arg9[%c1_17, %c0_18, %c256_19] : memref<18x16x384xbf16, #tpu.memory_space<vmem>>, vector<16x15x128xbf16>
    tpu.vector_store %arg9[%c1_17, %c0_18, %c256_19], %11 {strides = array<i32>} : memref<18x16x384xbf16, #tpu.memory_space<vmem>>, vector<16x15x128xbf16>,
    %c0_20 = arith.constant 0 : index
    %c0_21 = arith.constant 0 : index
    %c0_22 = arith.constant 0 : index
    %13 = vector.load %arg9[%c0_20, %c0_21, %c0_22] : memref<18x16x384xbf16, #tpu.memory_space<vmem>>, vector<16x16x384xbf16>
    %14 = vector.shape_cast %13 : vector<16x16x384xbf16> to vector<256x384xbf16>
    %c0_23 = arith.constant 0 : index
    %c0_24 = arith.constant 0 : index
    %c0_25 = arith.constant 0 : index
    %15 = vector.load %arg2[%c0_23, %c0_24, %c0_25] : memref<3x384x128xbf16, #tpu.memory_space<vmem>>, vector<1x384x128xbf16>
    %16 = vector.shape_cast %15 : vector<1x384x128xbf16> to vector<384x128xbf16>
    %cst_26 = arith.constant dense<0.000000e+00> : vector<256x128xf32>
    %17 = tpu.matmul %14, %16, %cst_26 {dimension_numbers = #tpu.dot_dimension_numbers<[1], [0], [0], [1], [0, 0, 1, 1], [], []>} : vector<256x384xbf16>, vector<384x128xbf16>, vector<256x128xf32> -> vector<256x128xf32>
    %c1_27 = arith.constant 1 : index
    %c0_28 = arith.constant 0 : index
    %c0_29 = arith.constant 0 : index
    %18 = vector.load %arg9[%c1_27, %c0_28, %c0_29] : memref<18x16x384xbf16, #tpu.memory_space<vmem>>, vector<16x16x384xbf16>
    %19 = vector.shape_cast %18 : vector<16x16x384xbf16> to vector<256x384xbf16>
    %c1_30 = arith.constant 1 : index
    %c0_31 = arith.constant 0 : index
    %c0_32 = arith.constant 0 : index
    %20 = vector.load %arg2[%c1_30, %c0_31, %c0_32] : memref<3x384x128xbf16, #tpu.memory_space<vmem>>, vector<1x384x128xbf16>
    %21 = vector.shape_cast %20 : vector<1x384x128xbf16> to vector<384x128xbf16>
    %cst_33 = arith.constant dense<0.000000e+00> : vector<256x128xf32>
    %22 = tpu.matmul %19, %21, %cst_33 {dimension_numbers = #tpu.dot_dimension_numbers<[1], [0], [0], [1], [0, 0, 1, 1], [], []>} : vector<256x384xbf16>, vector<384x128xbf16>, vector<256x128xf32> -> vector<256x128xf32>
    %23 = arith.addf %17, %22 : vector<256x128xf32>
    %c2 = arith.constant 2 : index
    %c0_34 = arith.constant 0 : index
    %c0_35 = arith.constant 0 : index
    %24 = vector.load %arg9[%c2, %c0_34, %c0_35] : memref<18x16x384xbf16, #tpu.memory_space<vmem>>, vector<16x16x384xbf16>
    %25 = vector.shape_cast %24 : vector<16x16x384xbf16> to vector<256x384xbf16>
    %c2_36 = arith.constant 2 : index
    %c0_37 = arith.constant 0 : index
    %c0_38 = arith.constant 0 : index
    %26 = vector.load %arg2[%c2_36, %c0_37, %c0_38] : memref<3x384x128xbf16, #tpu.memory_space<vmem>>, vector<1x384x128xbf16>
    %27 = vector.shape_cast %26 : vector<1x384x128xbf16> to vector<384x128xbf16>
    %cst_39 = arith.constant dense<0.000000e+00> : vector<256x128xf32>
    %28 = tpu.matmul %25, %27, %cst_39 {dimension_numbers = #tpu.dot_dimension_numbers<[1], [0], [0], [1], [0, 0, 1, 1], [], []>} : vector<256x384xbf16>, vector<384x128xbf16>, vector<256x128xf32> -> vector<256x128xf32>
    %29 = arith.addf %23, %28 : vector<256x128xf32>
    %c0_40 = arith.constant 0 : index
    %c0_41 = arith.constant 0 : index
    %30 = vector.load %arg3[%c0_40, %c0_41] : memref<1x128xf32, #tpu.memory_space<vmem>>, vector<1x128xf32>
    %31 = vector.broadcast %30 : vector<1x128xf32> to vector<256x128xf32>
    %32 = arith.mulf %29, %31 : vector<256x128xf32>
    %c0_42 = arith.constant 0 : index
    %c0_43 = arith.constant 0 : index
    %33 = vector.load %arg4[%c0_42, %c0_43] : memref<1x128xf32, #tpu.memory_space<vmem>>, vector<1x128xf32>
    %34 = vector.broadcast %33 : vector<1x128xf32> to vector<256x128xf32>
    %35 = arith.addf %32, %34 : vector<256x128xf32>
    %cst_44 = arith.constant 0.000000e+00 : f32
    %36 = vector.broadcast %cst_44 : f32 to vector<256x128xf32>
    %37 = arith.maximumf %35, %36 : vector<256x128xf32>
    %38 = arith.truncf %37 : vector<256x128xf32> to vector<256x128xbf16>
    %39 = vector.shape_cast %38 : vector<256x128xbf16> to vector<16x16x128xbf16>
    %40 = vector.extract_strided_slice %39 {offsets = [0, 0, 0], sizes = [16, 15, 128], strides = [1, 1, 1]} : vector<16x16x128xbf16> to vector<16x15x128xbf16>
    %c1_45 = arith.constant 1 : index
    %c1_46 = arith.constant 1 : index
    %c0_47 = arith.constant 0 : index
    %41 = vector.load %arg9[%c1_45, %c1_46, %c0_47] : memref<18x16x384xbf16, #tpu.memory_space<vmem>>, vector<16x15x128xbf16>
    tpu.vector_store %arg9[%c1_45, %c1_46, %c0_47], %40 {strides = array<i32>} : memref<18x16x384xbf16, #tpu.memory_space<vmem>>, vector<16x15x128xbf16>,
    %c1_48 = arith.constant 1 : index
    %c0_49 = arith.constant 0 : index
    %c128_50 = arith.constant 128 : index
    %42 = vector.load %arg9[%c1_48, %c0_49, %c128_50] : memref<18x16x384xbf16, #tpu.memory_space<vmem>>, vector<16x16x128xbf16>
    tpu.vector_store %arg9[%c1_48, %c0_49, %c128_50], %39 {strides = array<i32>} : memref<18x16x384xbf16, #tpu.memory_space<vmem>>, vector<16x16x128xbf16>,
    %43 = vector.extract_strided_slice %39 {offsets = [0, 1, 0], sizes = [16, 15, 128], strides = [1, 1, 1]} : vector<16x16x128xbf16> to vector<16x15x128xbf16>
    %c1_51 = arith.constant 1 : index
    %c0_52 = arith.constant 0 : index
    %c256_53 = arith.constant 256 : index
    %44 = vector.load %arg9[%c1_51, %c0_52, %c256_53] : memref<18x16x384xbf16, #tpu.memory_space<vmem>>, vector<16x15x128xbf16>
    tpu.vector_store %arg9[%c1_51, %c0_52, %c256_53], %43 {strides = array<i32>} : memref<18x16x384xbf16, #tpu.memory_space<vmem>>, vector<16x15x128xbf16>,
    %c0_54 = arith.constant 0 : index
    %c0_55 = arith.constant 0 : index
    %c0_56 = arith.constant 0 : index
    %45 = vector.load %arg9[%c0_54, %c0_55, %c0_56] : memref<18x16x384xbf16, #tpu.memory_space<vmem>>, vector<16x16x384xbf16>
    %46 = vector.shape_cast %45 : vector<16x16x384xbf16> to vector<256x384xbf16>
    %c0_57 = arith.constant 0 : index
    %c0_58 = arith.constant 0 : index
    %c0_59 = arith.constant 0 : index
    %47 = vector.load %arg5[%c0_57, %c0_58, %c0_59] : memref<3x384x128xbf16, #tpu.memory_space<vmem>>, vector<1x384x128xbf16>
    %48 = vector.shape_cast %47 : vector<1x384x128xbf16> to vector<384x128xbf16>
    %cst_60 = arith.constant dense<0.000000e+00> : vector<256x128xf32>
    %49 = tpu.matmul %46, %48, %cst_60 {dimension_numbers = #tpu.dot_dimension_numbers<[1], [0], [0], [1], [0, 0, 1, 1], [], []>} : vector<256x384xbf16>, vector<384x128xbf16>, vector<256x128xf32> -> vector<256x128xf32>
    %c1_61 = arith.constant 1 : index
    %c0_62 = arith.constant 0 : index
    %c0_63 = arith.constant 0 : index
    %50 = vector.load %arg9[%c1_61, %c0_62, %c0_63] : memref<18x16x384xbf16, #tpu.memory_space<vmem>>, vector<16x16x384xbf16>
    %51 = vector.shape_cast %50 : vector<16x16x384xbf16> to vector<256x384xbf16>
    %c1_64 = arith.constant 1 : index
    %c0_65 = arith.constant 0 : index
    %c0_66 = arith.constant 0 : index
    %52 = vector.load %arg5[%c1_64, %c0_65, %c0_66] : memref<3x384x128xbf16, #tpu.memory_space<vmem>>, vector<1x384x128xbf16>
    %53 = vector.shape_cast %52 : vector<1x384x128xbf16> to vector<384x128xbf16>
    %cst_67 = arith.constant dense<0.000000e+00> : vector<256x128xf32>
    %54 = tpu.matmul %51, %53, %cst_67 {dimension_numbers = #tpu.dot_dimension_numbers<[1], [0], [0], [1], [0, 0, 1, 1], [], []>} : vector<256x384xbf16>, vector<384x128xbf16>, vector<256x128xf32> -> vector<256x128xf32>
    %55 = arith.addf %49, %54 : vector<256x128xf32>
    %c2_68 = arith.constant 2 : index
    %c0_69 = arith.constant 0 : index
    %c0_70 = arith.constant 0 : index
    %56 = vector.load %arg9[%c2_68, %c0_69, %c0_70] : memref<18x16x384xbf16, #tpu.memory_space<vmem>>, vector<16x16x384xbf16>
    %57 = vector.shape_cast %56 : vector<16x16x384xbf16> to vector<256x384xbf16>
    %c2_71 = arith.constant 2 : index
    %c0_72 = arith.constant 0 : index
    %c0_73 = arith.constant 0 : index
    %58 = vector.load %arg5[%c2_71, %c0_72, %c0_73] : memref<3x384x128xbf16, #tpu.memory_space<vmem>>, vector<1x384x128xbf16>
    %59 = vector.shape_cast %58 : vector<1x384x128xbf16> to vector<384x128xbf16>
    %cst_74 = arith.constant dense<0.000000e+00> : vector<256x128xf32>
    %60 = tpu.matmul %57, %59, %cst_74 {dimension_numbers = #tpu.dot_dimension_numbers<[1], [0], [0], [1], [0, 0, 1, 1], [], []>} : vector<256x384xbf16>, vector<384x128xbf16>, vector<256x128xf32> -> vector<256x128xf32>
    %61 = arith.addf %55, %60 : vector<256x128xf32>
    %c0_75 = arith.constant 0 : index
    %c0_76 = arith.constant 0 : index
    %62 = vector.load %arg6[%c0_75, %c0_76] : memref<1x128xf32, #tpu.memory_space<vmem>>, vector<1x128xf32>
    %63 = vector.broadcast %62 : vector<1x128xf32> to vector<256x128xf32>
    %64 = arith.mulf %61, %63 : vector<256x128xf32>
    %c0_77 = arith.constant 0 : index
    %c0_78 = arith.constant 0 : index
    %65 = vector.load %arg7[%c0_77, %c0_78] : memref<1x128xf32, #tpu.memory_space<vmem>>, vector<1x128xf32>
    %66 = vector.broadcast %65 : vector<1x128xf32> to vector<256x128xf32>
    %67 = arith.addf %64, %66 : vector<256x128xf32>
    %c0_79 = arith.constant 0 : index
    %c0_80 = arith.constant 0 : index
    %c0_81 = arith.constant 0 : index
    %c0_82 = arith.constant 0 : index
    %68 = vector.load %arg1[%c0_79, %c0_80, %c0_81, %c0_82] : memref<1x16x16x128xbf16, #tpu.memory_space<vmem>>, vector<1x16x16x128xbf16>
    %69 = vector.shape_cast %68 : vector<1x16x16x128xbf16> to vector<16x16x128xbf16>
    %70 = vector.shape_cast %69 : vector<16x16x128xbf16> to vector<256x128xbf16>
    %71 = arith.extf %70 : vector<256x128xbf16> to vector<256x128xf32>
    %72 = arith.addf %67, %71 : vector<256x128xf32>
    %cst_83 = arith.constant 0.000000e+00 : f32
    %73 = vector.broadcast %cst_83 : f32 to vector<256x128xf32>
    %74 = arith.maximumf %72, %73 : vector<256x128xf32>
    %75 = vector.shape_cast %74 : vector<256x128xf32> to vector<16x16x128xf32>
    %c0_84 = arith.constant 0 : index
    %c0_85 = arith.constant 0 : index
    %c0_86 = arith.constant 0 : index
    %c0_87 = arith.constant 0 : index
    %76 = vector.load %arg8[%c0_84, %c0_85, %c0_86, %c0_87] : memref<1x16x16x128xf32, #tpu.memory_space<vmem>>, vector<1x16x16x128xf32>
    %77 = vector.shape_cast %76 : vector<1x16x16x128xf32> to vector<16x16x128xf32>
    %78 = vector.shape_cast %75 : vector<16x16x128xf32> to vector<1x16x16x128xf32>
    tpu.vector_store %arg8[%c0_84, %c0_85, %c0_86, %c0_87], %78 {strides = array<i32>} : memref<1x16x16x128xf32, #tpu.memory_space<vmem>>, vector<1x16x16x128xf32>,
    return
  }
  func.func @transform_0(%arg0: i32) -> (i32, i32, i32, i32) {
    %c0_i32 = arith.constant 0 : i32
    %c0_i32_0 = arith.constant 0 : i32
    %c0_i32_1 = arith.constant 0 : i32
    %c0_i32_2 = arith.constant 0 : i32
    return %arg0, %c0_i32, %c0_i32_0, %c0_i32_1 : i32, i32, i32, i32
  }
  func.func @transform_1(%arg0: i32) -> (i32, i32, i32) {
    %c0_i32 = arith.constant 0 : i32
    %c0_i32_0 = arith.constant 0 : i32
    %c0_i32_1 = arith.constant 0 : i32
    %c0_i32_2 = arith.constant 0 : i32
    return %c0_i32, %c0_i32_0, %c0_i32_1 : i32, i32, i32
  }
  func.func @transform_2(%arg0: i32) -> (i32, i32) {
    %c0_i32 = arith.constant 0 : i32
    %c0_i32_0 = arith.constant 0 : i32
    %c0_i32_1 = arith.constant 0 : i32
    return %c0_i32, %c0_i32_0 : i32, i32
  }
  func.func @transform_3(%arg0: i32) -> (i32, i32) {
    %c0_i32 = arith.constant 0 : i32
    %c0_i32_0 = arith.constant 0 : i32
    %c0_i32_1 = arith.constant 0 : i32
    return %c0_i32, %c0_i32_0 : i32, i32
  }
  func.func @transform_4(%arg0: i32) -> (i32, i32, i32) {
    %c0_i32 = arith.constant 0 : i32
    %c0_i32_0 = arith.constant 0 : i32
    %c0_i32_1 = arith.constant 0 : i32
    %c0_i32_2 = arith.constant 0 : i32
    return %c0_i32, %c0_i32_0, %c0_i32_1 : i32, i32, i32
  }
  func.func @transform_5(%arg0: i32) -> (i32, i32) {
    %c0_i32 = arith.constant 0 : i32
    %c0_i32_0 = arith.constant 0 : i32
    %c0_i32_1 = arith.constant 0 : i32
    return %c0_i32, %c0_i32_0 : i32, i32
  }
  func.func @transform_6(%arg0: i32) -> (i32, i32) {
    %c0_i32 = arith.constant 0 : i32
    %c0_i32_0 = arith.constant 0 : i32
    %c0_i32_1 = arith.constant 0 : i32
    return %c0_i32, %c0_i32_0 : i32, i32
  }
  func.func @transform_7(%arg0: i32) -> (i32, i32, i32, i32) {
    %c0_i32 = arith.constant 0 : i32
    %c0_i32_0 = arith.constant 0 : i32
    %c0_i32_1 = arith.constant 0 : i32
    %c0_i32_2 = arith.constant 0 : i32
    return %arg0, %c0_i32, %c0_i32_0, %c0_i32_1 : i32, i32, i32, i32
  }
}

</mosaic_0001>

<llo_original>
// kernel: tpu_custom_call.1
$region0: #{tpu_custom_call.1}
  #allocation0 [shape = 'u32[]', space=smem, size = 0x4, offset = 0x4, fixed_abs, tag = 'smem constant byte address 0x4 - core index']
  #allocation1 [shape = 'u32[72,128]{1,0:T(1,128)}', space=vmem, size = 0x9000, scoped, tag = 'internal scratch']
  #allocation2 [shape = 'bf16[18,16,384]{2,1,0:T(8,128)(2,1)}', space=vmem, size = 0x36000, scoped, tag = 'scratch operand']
  %s0 = inlined_call_operand.hbm [shape: bf16[2,16,16,128], index: 0, kind: input, shape index: {}]
  %s1 = inlined_call_operand.hbm [shape: bf16[3,384,128], index: 1, kind: input, shape index: {}]
  %s2 = inlined_call_operand.vmem [shape: f32[1,128], index: 2, kind: input, shape index: {}]
  %s3 = inlined_call_operand.vmem [shape: f32[1,128], index: 3, kind: input, shape index: {}]
  %s4 = inlined_call_operand.hbm [shape: bf16[3,384,128], index: 4, kind: input, shape index: {}]
  %s5 = inlined_call_operand.vmem [shape: f32[1,128], index: 5, kind: input, shape index: {}]
  %s6 = inlined_call_operand.vmem [shape: f32[1,128], index: 6, kind: input, shape index: {}]
  %s7 = inlined_call_operand.hbm [shape: f32[2,16,16,128], index: 7, kind: output, shape index: {}]
  %s8 = sld [smem:[#allocation0]]
  $region73: #{tpu_custom_call.1} parent=0
    _
  %s10 = ssub.s32 1, %s8
  %s11 = scalar_select 0, %s10, %s8
  $region1: #{tpu_custom_call.1} parent=0
    #allocation3 [shape = 'u8[131072]{0}', space=vmem, size = 0x20000, scoped, tag = 'input window, operand 0']
    #allocation4 [shape = 's32[2]{0}', space=sflag, size = 0x8, scoped, tag = 'scoped memory for tpu_custom_call.1']
    #allocation5 [shape = 's32[2]{0}', space=sflag, size = 0x8, scoped, tag = 'scoped memory for tpu_custom_call.1']
    #allocation6 [shape = 'u8[294912]{0}', space=vmem, size = 0x48000, scoped, tag = 'input window, operand 1, single buffered']
    #allocation7 [shape = 's32[1]{0}', space=sflag, size = 0x4, scoped, tag = 'scoped memory for tpu_custom_call.1']
    #allocation8 [shape = 'u8[294912]{0}', space=vmem, size = 0x48000, scoped, tag = 'input window, operand 4, single buffered']
    #allocation9 [shape = 'u8[262144]{0}', space=vmem, size = 0x40000, scoped, tag = 'output window, operand 0']
    %12 = vsyncpa [#allocation4], 0
    %s13 = scalar_lea.sflag [#allocation4], 1
    %14 = vsyncpa %s13, 0
    %15 = vsyncpa [#allocation7], 0
    %16 = vsyncpa [#allocation5], 0
    %s17 = scalar_lea.sflag [#allocation5], 1
    %18 = vsyncpa %s17, 0
    loop: start=0, step=1, limit=4
    $region2: #{tpu_custom_call.1} parent=1 // loop_pre_header
      _
    $region3: #{tpu_custom_call.1} parent=1 // loop_header
      %s20 = sphi 0, %s24
      %p21 = scmp.ge.s32.totalorder %s20, 4
      %s30 = sphi 0, %s32
      %s33 = sphi 0, %s30
      %s34 = sphi 0, %s33
      %s50 = sphi 0, %s34
      %s54 = sphi 0, %s54
      %s56 = sphi 0, %s54
      %s57 = sphi 0, %s56
      %s71 = sphi 0, %s57
      %s75 = sphi 0, %s75
      %s77 = sphi 0, %s75
      %s78 = sphi 0, %s77
      %s92 = sphi 0, %s78
      %s96 = sphi 0, %s96
      %s98 = sphi 0, %s96
      %s99 = sphi 0, %s98
      %s113 = sphi 0, %s99
      %s117 = sphi 0, %s117
      %s119 = sphi 0, %s117
      %s120 = sphi 0, %s119
      %s134 = sphi 0, %s120
      %s138 = sphi 0, %s138
      %s140 = sphi 0, %s138
      %s141 = sphi 0, %s140
      %s155 = sphi 0, %s141
      %s159 = sphi 0, %s159
      %s161 = sphi 0, %s159
      %s162 = sphi 0, %s161
      %s176 = sphi 0, %s162
      %s182 = sphi 0, %s184
      %s185 = sphi 0, %s182
      %s186 = sphi 0, %s185
      %s202 = sphi 0, %s186
    $region4: #{tpu_custom_call.1} parent=1 // loop_header_branch
      %23 = sbr.rel (%p21) target = $region8
    $region5: #{tpu_custom_call.1} parent=1 // loop_body
      %s25 = ssub.s32 %s20, 1
      %s26 = ssub.s32 %s20, 2
      %s27 = sadd.s32 %s20, 1
      %s28 = ssub.s32 %s20, %s27
      %p29 = scmp.eq.s32.totalorder %s28, 0
      %s31 = sadd.s32 %s30, 1
      %s32 = scalar_select %p29, %s30, %s31
      %p35 = pneg %p29
      %p36 = scmp.eq.s32.totalorder %s20, 1
      %p37 = por %p35, %p36
      %p38 = scmp.ne.s32.totalorder %s30, %s33
      %p39 = scmp.eq.s32.totalorder %s20, 0
      %p40 = por %p38, %p39
      %p41 = scmp.ne.s32.totalorder %s30, %s33
      %p42 = scmp.eq.s32.totalorder %s25, 1
      %p43 = por %p41, %p42
      %p44 = scmp.ne.s32.totalorder %s33, %s34
      %p45 = scmp.eq.s32.totalorder %s25, 0
      %p46 = por %p44, %p45
      %p47 = scmp.ne.s32.totalorder %s33, %s34
      %p48 = scmp.eq.s32.totalorder %s26, 1
      %p49 = por %p47, %p48
      %p51 = scmp.ne.s32.totalorder %s34, %s50
      %p52 = scmp.eq.s32.totalorder %s26, 0
      %p53 = por %p51, %p52
      %s55 = sadd.s32 %s54, 1
      %p58 = scmp.eq.s32.totalorder %s20, 1
      %p59 = scmp.ne.s32.totalorder %s54, %s56
      %p60 = scmp.eq.s32.totalorder %s20, 0
      %p61 = por %p59, %p60
      %p62 = scmp.ne.s32.totalorder %s54, %s56
      %p63 = scmp.eq.s32.totalorder %s25, 1
      %p64 = por %p62, %p63
      %p65 = scmp.ne.s32.totalorder %s56, %s57
      %p66 = scmp.eq.s32.totalorder %s25, 0
      %p67 = por %p65, %p66
      %p68 = scmp.ne.s32.totalorder %s56, %s57
      %p69 = scmp.eq.s32.totalorder %s26, 1
      %p70 = por %p68, %p69
      %p72 = scmp.ne.s32.totalorder %s57, %s71
      %p73 = scmp.eq.s32.totalorder %s26, 0
      %p74 = por %p72, %p73
      %s76 = sadd.s32 %s75, 1
      %p79 = scmp.eq.s32.totalorder %s20, 1
      %p80 = scmp.ne.s32.totalorder %s75, %s77
      %p81 = scmp.eq.s32.totalorder %s20, 0
      %p82 = por %p80, %p81
      %p83 = scmp.ne.s32.totalorder %s75, %s77
      %p84 = scmp.eq.s32.totalorder %s25, 1
      %p85 = por %p83, %p84
      %p86 = scmp.ne.s32.totalorder %s77, %s78
      %p87 = scmp.eq.s32.totalorder %s25, 0
      %p88 = por %p86, %p87
      %p89 = scmp.ne.s32.totalorder %s77, %s78
      %p90 = scmp.eq.s32.totalorder %s26, 1
      %p91 = por %p89, %p90
      %p93 = scmp.ne.s32.totalorder %s78, %s92
      %p94 = scmp.eq.s32.totalorder %s26, 0
      %p95 = por %p93, %p94
      %s97 = sadd.s32 %s96, 1
      %p100 = scmp.eq.s32.totalorder %s20, 1
      %p101 = scmp.ne.s32.totalorder %s96, %s98
      %p102 = scmp.eq.s32.totalorder %s20, 0
      %p103 = por %p101, %p102
      %p104 = scmp.ne.s32.totalorder %s96, %s98
      %p105 = scmp.eq.s32.totalorder %s25, 1
      %p106 = por %p104, %p105
      %p107 = scmp.ne.s32.totalorder %s98, %s99
      %p108 = scmp.eq.s32.totalorder %s25, 0
      %p109 = por %p107, %p108
      %p110 = scmp.ne.s32.totalorder %s98, %s99
      %p111 = scmp.eq.s32.totalorder %s26, 1
      %p112 = por %p110, %p111
      %p114 = scmp.ne.s32.totalorder %s99, %s113
      %p115 = scmp.eq.s32.totalorder %s26, 0
      %p116 = por %p114, %p115
      %s118 = sadd.s32 %s117, 1
      %p121 = scmp.eq.s32.totalorder %s20, 1
      %p122 = scmp.ne.s32.totalorder %s117, %s119
      %p123 = scmp.eq.s32.totalorder %s20, 0
      %p124 = por %p122, %p123
      %p125 = scmp.ne.s32.totalorder %s117, %s119
      %p126 = scmp.eq.s32.totalorder %s25, 1
      %p127 = por %p125, %p126
      %p128 = scmp.ne.s32.totalorder %s119, %s120
      %p129 = scmp.eq.s32.totalorder %s25, 0
      %p130 = por %p128, %p129
      %p131 = scmp.ne.s32.totalorder %s119, %s120
      %p132 = scmp.eq.s32.totalorder %s26, 1
      %p133 = por %p131, %p132
      %p135 = scmp.ne.s32.totalorder %s120, %s134
      %p136 = scmp.eq.s32.totalorder %s26, 0
      %p137 = por %p135, %p136
      %s139 = sadd.s32 %s138, 1
      %p142 = scmp.eq.s32.totalorder %s20, 1
      %p143 = scmp.ne.s32.totalorder %s138, %s140
      %p144 = scmp.eq.s32.totalorder %s20, 0
      %p145 = por %p143, %p144
      %p146 = scmp.ne.s32.totalorder %s138, %s140
      %p147 = scmp.eq.s32.totalorder %s25, 1
      %p148 = por %p146, %p147
      %p149 = scmp.ne.s32.totalorder %s140, %s141
      %p150 = scmp.eq.s32.totalorder %s25, 0
      %p151 = por %p149, %p150
      %p152 = scmp.ne.s32.totalorder %s140, %s141
      %p153 = scmp.eq.s32.totalorder %s26, 1
      %p154 = por %p152, %p153
      %p156 = scmp.ne.s32.totalorder %s141, %s155
      %p157 = scmp.eq.s32.totalorder %s26, 0
      %p158 = por %p156, %p157
      %s160 = sadd.s32 %s159, 1
      %p163 = scmp.eq.s32.totalorder %s20, 1
      %p164 = scmp.ne.s32.totalorder %s159, %s161
      %p165 = scmp.eq.s32.totalorder %s20, 0
      %p166 = por %p164, %p165
      %p167 = scmp.ne.s32.totalorder %s159, %s161
      %p168 = scmp.eq.s32.totalorder %s25, 1
      %p169 = por %p167, %p168
      %p170 = scmp.ne.s32.totalorder %s161, %s162
      %p171 = scmp.eq.s32.totalorder %s25, 0
      %p172 = por %p170, %p171
      %p173 = scmp.ne.s32.totalorder %s161, %s162
      %p174 = scmp.eq.s32.totalorder %s26, 1
      %p175 = por %p173, %p174
      %p177 = scmp.ne.s32.totalorder %s162, %s176
      %p178 = scmp.eq.s32.totalorder %s26, 0
      %p179 = por %p177, %p178
      %s180 = ssub.s32 %s20, %s27
      %p181 = scmp.eq.s32.totalorder %s180, 0
      %s183 = sadd.s32 %s182, 1
      %s184 = scalar_select %p181, %s182, %s183
      %p187 = pneg %p181
      %p188 = scmp.eq.s32.totalorder %s20, 1
      %p189 = por %p187, %p188
      %p190 = scmp.ne.s32.totalorder %s182, %s185
      %p191 = scmp.eq.s32.totalorder %s20, 0
      %p192 = por %p190, %p191
      %p193 = scmp.ne.s32.totalorder %s182, %s185
      %p194 = scmp.eq.s32.totalorder %s25, 1
      %p195 = por %p193, %p194
      %p196 = scmp.ne.s32.totalorder %s185, %s186
      %p197 = scmp.eq.s32.totalorder %s25, 0
      %p198 = por %p196, %p197
      %p199 = scmp.ne.s32.totalorder %s185, %s186
      %p200 = scmp.eq.s32.totalorder %s26, 1
      %p201 = por %p199, %p200
      %p203 = scmp.ne.s32.totalorder %s186, %s202
      %p204 = scmp.eq.s32.totalorder %s26, 0
      %p205 = por %p203, %p204
      %p206 = scmp.le.s32.totalorder 1, %s20
      %p207 = scmp.lt.s32.totalorder %s20, 3
      %p208 = pnand %p206, %p207
      %p209 = pneg %p208
      // Predicated region
      $region9: #{tpu_custom_call.1} parent=5 // pred_check
        _
      $region10: #{tpu_custom_call.1} parent=5 // pred_check_branch
        %211 = sbr.rel (%p208) target = $region12
      $region11: #{tpu_custom_call.1} parent=5 // pred_region
        %s212 = ssub.s32 %s20, 1
        // Predicated region
        $region13: #{tpu_custom_call.1} parent=11 // pred_check
          %p213 = pneg %p67
        $region14: #{tpu_custom_call.1} parent=11 // pred_check_branch
          %215 = sbr.rel (%p213) target = $region16
        $region15: #{tpu_custom_call.1} parent=11 // pred_region
          %217 = vsyncadd [#allocation7], 0
          %s218 = sshll.u32 %s1, 4
          %s219 = int_to_ptr.hbm [resolvable:$true] %s218
          %s220 = sshll.u32 [#allocation6], 4
          %s221 = int_to_ptr.vmem [resolvable:$true] %s220
          %226 = dma.hbm_to_vmem [thread:$0]  %s219, 9216, %s221, [#allocation7], 64, 64, 4
        $region16: #{tpu_custom_call.1} parent=11 // pred_fallthru
          _
        // Predicated region
        $region17: #{tpu_custom_call.1} parent=11 // pred_check
          %p227 = pneg %p88
        $region18: #{tpu_custom_call.1} parent=11 // pred_check_branch
          %229 = sbr.rel (%p227) target = $region20
        $region19: #{tpu_custom_call.1} parent=11 // pred_region
          _
        $region20: #{tpu_custom_call.1} parent=11 // pred_fallthru
          _
        // Predicated region
        $region21: #{tpu_custom_call.1} parent=11 // pred_check
          %p230 = pneg %p109
        $region22: #{tpu_custom_call.1} parent=11 // pred_check_branch
          %232 = sbr.rel (%p230) target = $region24
        $region23: #{tpu_custom_call.1} parent=11 // pred_region
          _
        $region24: #{tpu_custom_call.1} parent=11 // pred_fallthru
          _
        // Predicated region
        $region25: #{tpu_custom_call.1} parent=11 // pred_check
          %p233 = pneg %p130
        $region26: #{tpu_custom_call.1} parent=11 // pred_check_branch
          %235 = sbr.rel (%p233) target = $region28
        $region27: #{tpu_custom_call.1} parent=11 // pred_region
          %237 = vsyncadd [#allocation7], 0
          %s238 = sshll.u32 %s4, 4
          %s239 = int_to_ptr.hbm [resolvable:$true] %s238
          %s240 = sshll.u32 [#allocation8], 4
          %s241 = int_to_ptr.vmem [resolvable:$true] %s240
          %246 = dma.hbm_to_vmem [thread:$0]  %s239, 9216, %s241, [#allocation7], 64, 64, 4
        $region28: #{tpu_custom_call.1} parent=11 // pred_fallthru
          _
        // Predicated region
        $region29: #{tpu_custom_call.1} parent=11 // pred_check
          %p247 = pneg %p151
        $region30: #{tpu_custom_call.1} parent=11 // pred_check_branch
          %249 = sbr.rel (%p247) target = $region32
        $region31: #{tpu_custom_call.1} parent=11 // pred_region
          _
        $region32: #{tpu_custom_call.1} parent=11 // pred_fallthru
          _
        // Predicated region
        $region33: #{tpu_custom_call.1} parent=11 // pred_check
          %p250 = pneg %p172
        $region34: #{tpu_custom_call.1} parent=11 // pred_check_branch
          %252 = sbr.rel (%p250) target = $region36
        $region35: #{tpu_custom_call.1} parent=11 // pred_region
          _
        $region36: #{tpu_custom_call.1} parent=11 // pred_fallthru
          _
      $region12: #{tpu_custom_call.1} parent=5 // pred_fallthru
        _
      %p253 = scmp.lt.s32.totalorder %s20, 2
      // Predicated region
      $region37: #{tpu_custom_call.1} parent=5 // pred_check
        %p254 = pneg %p253
      $region38: #{tpu_custom_call.1} parent=5 // pred_check_branch
        %256 = sbr.rel (%p254) target = $region40
      $region39: #{tpu_custom_call.1} parent=5 // pred_region
        // Predicated region
        $region41: #{tpu_custom_call.1} parent=39 // pred_check
          %p257 = pneg %p40
        $region42: #{tpu_custom_call.1} parent=39 // pred_check_branch
          %259 = sbr.rel (%p257) target = $region44
        $region43: #{tpu_custom_call.1} parent=39 // pred_region
          %s260 = sand.u32 %s30, 1
          %s261 = scalar_lea.sflag [#allocation4], %s260
          %s262 = sand.u32 %s30, 1
          %s263 = smul.addr %s262, 128
          %s264 = scalar_lea.vmem [#allocation3], %s263
          %266 = vsyncadd %s261, 0
          %s267 = smul.addr %s20, 32
          %s268 = smul.addr %s267, 4
          %s269 = scalar_lea.hbm %s0, %s268
          %s270 = sshll.u32 %s269, 4
          %s271 = int_to_ptr.hbm [resolvable:$true] %s270
          %s272 = sshll.u32 %s264, 4
          %s273 = int_to_ptr.vmem [resolvable:$true] %s272
          %278 = dma.hbm_to_vmem [thread:$0]  %s271, 2048, %s273, %s261, 64, 64, 4
        $region44: #{tpu_custom_call.1} parent=39 // pred_fallthru
          _
      $region40: #{tpu_custom_call.1} parent=5 // pred_fallthru
        _
      %p279 = scmp.le.s32.totalorder 1, %s20
      %p280 = scmp.lt.s32.totalorder %s20, 3
      %p281 = pnand %p279, %p280
      %p282 = pneg %p281
      // Predicated region
      $region45: #{tpu_custom_call.1} parent=5 // pred_check
        _
      $region46: #{tpu_custom_call.1} parent=5 // pred_check_branch
        %284 = sbr.rel (%p281) target = $region48
      $region47: #{tpu_custom_call.1} parent=5 // pred_region
        %s285 = ssub.s32 %s20, 1
        %s286 = sand.u32 %s33, 1
        %s287 = scalar_lea.sflag [#allocation4], %s286
        %s288 = sand.u32 %s33, 1
        %s289 = smul.addr %s288, 128
        %s290 = scalar_lea.vmem [#allocation3], %s289
        // Predicated region
        $region49: #{tpu_custom_call.1} parent=47 // pred_check
          %p291 = pneg %p46
        $region50: #{tpu_custom_call.1} parent=47 // pred_check_branch
          %293 = sbr.rel (%p291) target = $region52
        $region51: #{tpu_custom_call.1} parent=47 // pred_region
          %295 = dma.done %s287, 2048
        $region52: #{tpu_custom_call.1} parent=47 // pred_fallthru
          _
        // Predicated region
        $region53: #{tpu_custom_call.1} parent=47 // pred_check
          %p296 = pneg %p67
        $region54: #{tpu_custom_call.1} parent=47 // pred_check_branch
          %298 = sbr.rel (%p296) target = $region56
        $region55: #{tpu_custom_call.1} parent=47 // pred_region
          %300 = dma.done [#allocation7], 9216
        $region56: #{tpu_custom_call.1} parent=47 // pred_fallthru
          _
        // Predicated region
        $region57: #{tpu_custom_call.1} parent=47 // pred_check
          %p301 = pneg %p130
        $region58: #{tpu_custom_call.1} parent=47 // pred_check_branch
          %303 = sbr.rel (%p301) target = $region60
        $region59: #{tpu_custom_call.1} parent=47 // pred_region
          %305 = dma.done [#allocation7], 9216
        $region60: #{tpu_custom_call.1} parent=47 // pred_fallthru
          _
        %s306 = sand.u32 %s33, 1
        %s307 = scalar_lea.sflag [#allocation4], %s306
        %s308 = sand.u32 %s33, 1
        %s309 = smul.addr %s308, 128
        %s310 = scalar_lea.vmem [#allocation3], %s309
        %p311 = pneg %p46
        %p312 = pneg %p43
        %p313 = pneg %p67
        %p314 = pneg %p64
        %p315 = pneg %p88
        %p316 = pneg %p85
        %p317 = pneg %p109
        %p318 = pneg %p106
        %p319 = pneg %p130
        %p320 = pneg %p127
        %p321 = pneg %p151
        %p322 = pneg %p148
        %p323 = pneg %p172
        %p324 = pneg %p169
        %p325 = pneg %p198
        %p326 = pneg %p195
        %s327 = sand.u32 %s185, 1
        %s328 = scalar_lea.sflag [#allocation5], %s327
        %s329 = sand.u32 %s185, 1
        %s330 = smul.addr %s329, 256
        %s331 = scalar_lea.vmem [#allocation9], %s330
        %333 = vst [vmem:[#allocation2] sm:$0xff] 0
        %334 = vst [vmem:[#allocation2 + $0x8] sm:$0xf] 0
        %335 = vst [vmem:[#allocation2 + $0xc] sm:$0xff] 0
        %336 = vst [vmem:[#allocation2 + $0x14] sm:$0xf] 0
        %s337 = scalar_lea.vmem [#allocation2], 408
        %338 = vst [vmem:[%s337] sm:$0xff] 0
        %339 = vst [vmem:[%s337 + $0x8] sm:$0xf] 0
        %340 = vst [vmem:[%s337 + $0xc] sm:$0xff] 0
        %341 = vst [vmem:[%s337 + $0x14] sm:$0xf] 0
        %vm342 = vcmask 1040384
        %vm343 = vsmask.f32 256
        %vm344 = vmand %vm342, %vm343
        %v345 = vld [vmem:[#allocation2] sm:$0x1]
        %v346 = vsel %vm344, 0, %v345
        %347 = vst [vmem:[#allocation2] sm:$0x1] %v346
        %v348 = vld [vmem:[#allocation2 + $0x18] sm:$0x1]
        %v349 = vsel %vm344, 0, %v348
        %350 = vst [vmem:[#allocation2 + $0x18] sm:$0x1] %v349
        %v351 = vld [vmem:[#allocation2 + $0x30] sm:$0x1]
        %v352 = vsel %vm344, 0, %v351
        %353 = vst [vmem:[#allocation2 + $0x30] sm:$0x1] %v352
        %v354 = vld [vmem:[#allocation2 + $0x48] sm:$0x1]
        %v355 = vsel %vm344, 0, %v354
        %356 = vst [vmem:[#allocation2 + $0x48] sm:$0x1] %v355
        %v357 = vld [vmem:[#allocation2 + $0x60] sm:$0x1]
        %v358 = vsel %vm344, 0, %v357
        %359 = vst [vmem:[#allocation2 + $0x60] sm:$0x1] %v358
        %v360 = vld [vmem:[#allocation2 + $0x78] sm:$0x1]
        %v361 = vsel %vm344, 0, %v360
        %362 = vst [vmem:[#allocation2 + $0x78] sm:$0x1] %v361
        %v363 = vld [vmem:[#allocation2 + $0x90] sm:$0x1]
        %v364 = vsel %vm344, 0, %v363
        %365 = vst [vmem:[#allocation2 + $0x90] sm:$0x1] %v364
        %v366 = vld [vmem:[#allocation2 + $0xa8] sm:$0x1]
        %v367 = vsel %vm344, 0, %v366
        %368 = vst [vmem:[#allocation2 + $0xa8] sm:$0x1] %v367
        %v369 = vld [vmem:[#allocation2 + $0xc0] sm:$0x1]
        %v370 = vsel %vm344, 0, %v369
        %371 = vst [vmem:[#allocation2 + $0xc0] sm:$0x1] %v370
        %v372 = vld [vmem:[#allocation2 + $0xd8] sm:$0x1]
        %v373 = vsel %vm344, 0, %v372
        %374 = vst [vmem:[#allocation2 + $0xd8] sm:$0x1] %v373
        %v375 = vld [vmem:[#allocation2 + $0xf0] sm:$0x1]
        %v376 = vsel %vm344, 0, %v375
        %377 = vst [vmem:[#allocation2 + $0xf0] sm:$0x1] %v376
        %v378 = vld [vmem:[#allocation2 + $0x108] sm:$0x1]
        %v379 = vsel %vm344, 0, %v378
        %380 = vst [vmem:[#allocation2 + $0x108] sm:$0x1] %v379
        %v381 = vld [vmem:[#allocation2 + $0x120] sm:$0x1]
        %v382 = vsel %vm344, 0, %v381
        %383 = vst [vmem:[#allocation2 + $0x120] sm:$0x1] %v382
        %v384 = vld [vmem:[#allocation2 + $0x138] sm:$0x1]
        %v385 = vsel %vm344, 0, %v384
        %386 = vst [vmem:[#allocation2 + $0x138] sm:$0x1] %v385
        %v387 = vld [vmem:[#allocation2 + $0x150] sm:$0x1]
        %v388 = vsel %vm344, 0, %v387
        %389 = vst [vmem:[#allocation2 + $0x150] sm:$0x1] %v388
        %v390 = vld [vmem:[#allocation2 + $0x168] sm:$0x1]
        %v391 = vsel %vm344, 0, %v390
        %392 = vst [vmem:[#allocation2 + $0x168] sm:$0x1] %v391
        %v393 = vld [vmem:[#allocation2 + $0x180] sm:$0x1]
        %v394 = vsel %vm344, 0, %v393
        %395 = vst [vmem:[#allocation2 + $0x180] sm:$0x1] %v394
        %v396 = vld [vmem:[#allocation2 + $0x198] sm:$0x1]
        %v397 = vsel %vm344, 0, %v396
        %398 = vst [vmem:[#allocation2 + $0x198] sm:$0x1] %v397
        %vm399 = vcmask 1043459
        %vm400 = vsmask.f32 7950
        %vm401 = vmand %vm399, %vm400
        %v402 = vld [vmem:[#allocation2 + $0x14] sm:$0x8]
        %v403 = vsel %vm401, 0, %v402
        %404 = vst [vmem:[#allocation2 + $0x14] sm:$0x8] %v403
        %v405 = vld [vmem:[#allocation2 + $0x2c] sm:$0x8]
        %v406 = vsel %vm401, 0, %v405
        %407 = vst [vmem:[#allocation2 + $0x2c] sm:$0x8] %v406
        %v408 = vld [vmem:[#allocation2 + $0x44] sm:$0x8]
        %v409 = vsel %vm401, 0, %v408
        %410 = vst [vmem:[#allocation2 + $0x44] sm:$0x8] %v409
        %v411 = vld [vmem:[#allocation2 + $0x5c] sm:$0x8]
        %v412 = vsel %vm401, 0, %v411
        %413 = vst [vmem:[#allocation2 + $0x5c] sm:$0x8] %v412
        %v414 = vld [vmem:[#allocation2 + $0x74] sm:$0x8]
        %v415 = vsel %vm401, 0, %v414
        %416 = vst [vmem:[#allocation2 + $0x74] sm:$0x8] %v415
        %v417 = vld [vmem:[#allocation2 + $0x8c] sm:$0x8]
        %v418 = vsel %vm401, 0, %v417
        %419 = vst [vmem:[#allocation2 + $0x8c] sm:$0x8] %v418
        %v420 = vld [vmem:[#allocation2 + $0xa4] sm:$0x8]
        %v421 = vsel %vm401, 0, %v420
        %422 = vst [vmem:[#allocation2 + $0xa4] sm:$0x8] %v421
        %v423 = vld [vmem:[#allocation2 + $0xbc] sm:$0x8]
        %v424 = vsel %vm401, 0, %v423
        %425 = vst [vmem:[#allocation2 + $0xbc] sm:$0x8] %v424
        %v426 = vld [vmem:[#allocation2 + $0xd4] sm:$0x8]
        %v427 = vsel %vm401, 0, %v426
        %428 = vst [vmem:[#allocation2 + $0xd4] sm:$0x8] %v427
        %v429 = vld [vmem:[#allocation2 + $0xec] sm:$0x8]
        %v430 = vsel %vm401, 0, %v429
        %431 = vst [vmem:[#allocation2 + $0xec] sm:$0x8] %v430
        %v432 = vld [vmem:[#allocation2 + $0x104] sm:$0x8]
        %v433 = vsel %vm401, 0, %v432
        %434 = vst [vmem:[#allocation2 + $0x104] sm:$0x8] %v433
        %v435 = vld [vmem:[#allocation2 + $0x11c] sm:$0x8]
        %v436 = vsel %vm401, 0, %v435
        %437 = vst [vmem:[#allocation2 + $0x11c] sm:$0x8] %v436
        %v438 = vld [vmem:[#allocation2 + $0x134] sm:$0x8]
        %v439 = vsel %vm401, 0, %v438
        %440 = vst [vmem:[#allocation2 + $0x134] sm:$0x8] %v439
        %v441 = vld [vmem:[#allocation2 + $0x14c] sm:$0x8]
        %v442 = vsel %vm401, 0, %v441
        %443 = vst [vmem:[#allocation2 + $0x14c] sm:$0x8] %v442
        %v444 = vld [vmem:[#allocation2 + $0x164] sm:$0x8]
        %v445 = vsel %vm401, 0, %v444
        %446 = vst [vmem:[#allocation2 + $0x164] sm:$0x8] %v445
        %v447 = vld [vmem:[#allocation2 + $0x17c] sm:$0x8]
        %v448 = vsel %vm401, 0, %v447
        %449 = vst [vmem:[#allocation2 + $0x17c] sm:$0x8] %v448
        %v450 = vld [vmem:[#allocation2 + $0x194] sm:$0x8]
        %v451 = vsel %vm401, 0, %v450
        %452 = vst [vmem:[#allocation2 + $0x194] sm:$0x8] %v451
        %v453 = vld [vmem:[#allocation2 + $0x1ac] sm:$0x8]
        %v454 = vsel %vm401, 0, %v453
        %455 = vst [vmem:[#allocation2 + $0x1ac] sm:$0x8] %v454
        %v456 = vld [vmem:[%s290] sm:$0xf]
        %v457 = vld [vmem:[%s290 + $0x4] sm:$0xf]
        %v458 = vld [vmem:[%s290 + $0x8] sm:$0xf]
        %v459 = vld [vmem:[%s290 + $0xc] sm:$0xf]
        %v460 = vld [vmem:[%s290 + $0x10] sm:$0xf]
        %v461 = vld [vmem:[%s290 + $0x14] sm:$0xf]
        %v462 = vld [vmem:[%s290 + $0x18] sm:$0xf]
        %v463 = vld [vmem:[%s290 + $0x1c] sm:$0xf]
        %v464 = vld [vmem:[%s290 + $0x20] sm:$0xf]
        %v465 = vld [vmem:[%s290 + $0x24] sm:$0xf]
        %v466 = vld [vmem:[%s290 + $0x28] sm:$0xf]
        %v467 = vld [vmem:[%s290 + $0x2c] sm:$0xf]
        %v468 = vld [vmem:[%s290 + $0x30] sm:$0xf]
        %v469 = vld [vmem:[%s290 + $0x34] sm:$0xf]
        %v470 = vld [vmem:[%s290 + $0x38] sm:$0xf]
        %v471 = vld [vmem:[%s290 + $0x3c] sm:$0xf]
        %v472 = vld [vmem:[%s290 + $0x40] sm:$0xf]
        %v473 = vld [vmem:[%s290 + $0x44] sm:$0xf]
        %v474 = vld [vmem:[%s290 + $0x48] sm:$0xf]
        %v475 = vld [vmem:[%s290 + $0x4c] sm:$0xf]
        %v476 = vld [vmem:[%s290 + $0x50] sm:$0xf]
        %v477 = vld [vmem:[%s290 + $0x54] sm:$0xf]
        %v478 = vld [vmem:[%s290 + $0x58] sm:$0xf]
        %v479 = vld [vmem:[%s290 + $0x5c] sm:$0xf]
        %v480 = vld [vmem:[%s290 + $0x60] sm:$0xf]
        %v481 = vld [vmem:[%s290 + $0x64] sm:$0xf]
        %v482 = vld [vmem:[%s290 + $0x68] sm:$0xf]
        %v483 = vld [vmem:[%s290 + $0x6c] sm:$0xf]
        %v484 = vld [vmem:[%s290 + $0x70] sm:$0xf]
        %v485 = vld [vmem:[%s290 + $0x74] sm:$0xf]
        %v486 = vld [vmem:[%s290 + $0x78] sm:$0xf]
        %v487 = vld [vmem:[%s290 + $0x7c] sm:$0xf]
        %vm488 = vsmask.f32 4368
        %vm489 = vmor %vm343, %vm488
        %v491 = vshrl.u32 %v456, 16
        %v493 = vrot.slane %v491, 7
        %v494 = vshll.u32 %v456, 16
        %v496 = vor.u32 %v493, %v494
        %v497 = vrot.slane %v493, 4
        %v499 = vshrl.u32 %v457, 16
        %v501 = vrot.slane %v499, 7
        %v502 = vshll.u32 %v457, 16
        %v504 = vor.u32 %v501, %v502
        %v505 = vsel %vm489, %v497, %v504
        %v507 = vshrl.u32 %v458, 16
        %v509 = vrot.slane %v507, 7
        %v510 = vshll.u32 %v458, 16
        %v512 = vor.u32 %v509, %v510
        %v513 = vrot.slane %v509, 4
        %v515 = vshrl.u32 %v459, 16
        %v517 = vrot.slane %v515, 7
        %v518 = vshll.u32 %v459, 16
        %v520 = vor.u32 %v517, %v518
        %v521 = vsel %vm489, %v513, %v520
        %v523 = vshrl.u32 %v460, 16
        %v525 = vrot.slane %v523, 7
        %v526 = vshll.u32 %v460, 16
        %v528 = vor.u32 %v525, %v526
        %v529 = vrot.slane %v525, 4
        %v531 = vshrl.u32 %v461, 16
        %v533 = vrot.slane %v531, 7
        %v534 = vshll.u32 %v461, 16
        %v536 = vor.u32 %v533, %v534
        %v537 = vsel %vm489, %v529, %v536
        %v539 = vshrl.u32 %v462, 16
        %v541 = vrot.slane %v539, 7
        %v542 = vshll.u32 %v462, 16
        %v544 = vor.u32 %v541, %v542
        %v545 = vrot.slane %v541, 4
        %v547 = vshrl.u32 %v463, 16
        %v549 = vrot.slane %v547, 7
        %v550 = vshll.u32 %v463, 16
        %v552 = vor.u32 %v549, %v550
        %v553 = vsel %vm489, %v545, %v552
        %v555 = vshrl.u32 %v464, 16
        %v557 = vrot.slane %v555, 7
        %v558 = vshll.u32 %v464, 16
        %v560 = vor.u32 %v557, %v558
        %v561 = vrot.slane %v557, 4
        %v563 = vshrl.u32 %v465, 16
        %v565 = vrot.slane %v563, 7
        %v566 = vshll.u32 %v465, 16
        %v568 = vor.u32 %v565, %v566
        %v569 = vsel %vm489, %v561, %v568
        %v571 = vshrl.u32 %v466, 16
        %v573 = vrot.slane %v571, 7
        %v574 = vshll.u32 %v466, 16
        %v576 = vor.u32 %v573, %v574
        %v577 = vrot.slane %v573, 4
        %v579 = vshrl.u32 %v467, 16
        %v581 = vrot.slane %v579, 7
        %v582 = vshll.u32 %v467, 16
        %v584 = vor.u32 %v581, %v582
        %v585 = vsel %vm489, %v577, %v584
        %v587 = vshrl.u32 %v468, 16
        %v589 = vrot.slane %v587, 7
        %v590 = vshll.u32 %v468, 16
        %v592 = vor.u32 %v589, %v590
        %v593 = vrot.slane %v589, 4
        %v595 = vshrl.u32 %v469, 16
        %v597 = vrot.slane %v595, 7
        %v598 = vshll.u32 %v469, 16
        %v600 = vor.u32 %v597, %v598
        %v601 = vsel %vm489, %v593, %v600
        %v603 = vshrl.u32 %v470, 16
        %v605 = vrot.slane %v603, 7
        %v606 = vshll.u32 %v470, 16
        %v608 = vor.u32 %v605, %v606
        %v609 = vrot.slane %v605, 4
        %v611 = vshrl.u32 %v471, 16
        %v613 = vrot.slane %v611, 7
        %v614 = vshll.u32 %v471, 16
        %v616 = vor.u32 %v613, %v614
        %v617 = vsel %vm489, %v609, %v616
        %v619 = vshrl.u32 %v472, 16
        %v621 = vrot.slane %v619, 7
        %v622 = vshll.u32 %v472, 16
        %v624 = vor.u32 %v621, %v622
        %v625 = vrot.slane %v621, 4
        %v627 = vshrl.u32 %v473, 16
        %v629 = vrot.slane %v627, 7
        %v630 = vshll.u32 %v473, 16
        %v632 = vor.u32 %v629, %v630
        %v633 = vsel %vm489, %v625, %v632
        %v635 = vshrl.u32 %v474, 16
        %v637 = vrot.slane %v635, 7
        %v638 = vshll.u32 %v474, 16
        %v640 = vor.u32 %v637, %v638
        %v641 = vrot.slane %v637, 4
        %v643 = vshrl.u32 %v475, 16
        %v645 = vrot.slane %v643, 7
        %v646 = vshll.u32 %v475, 16
        %v648 = vor.u32 %v645, %v646
        %v649 = vsel %vm489, %v641, %v648
        %v651 = vshrl.u32 %v476, 16
        %v653 = vrot.slane %v651, 7
        %v654 = vshll.u32 %v476, 16
        %v656 = vor.u32 %v653, %v654
        %v657 = vrot.slane %v653, 4
        %v659 = vshrl.u32 %v477, 16
        %v661 = vrot.slane %v659, 7
        %v662 = vshll.u32 %v477, 16
        %v664 = vor.u32 %v661, %v662
        %v665 = vsel %vm489, %v657, %v664
        %v667 = vshrl.u32 %v478, 16
        %v669 = vrot.slane %v667, 7
        %v670 = vshll.u32 %v478, 16
        %v672 = vor.u32 %v669, %v670
        %v673 = vrot.slane %v669, 4
        %v675 = vshrl.u32 %v479, 16
        %v677 = vrot.slane %v675, 7
        %v678 = vshll.u32 %v479, 16
        %v680 = vor.u32 %v677, %v678
        %v681 = vsel %vm489, %v673, %v680
        %v683 = vshrl.u32 %v480, 16
        %v685 = vrot.slane %v683, 7
        %v686 = vshll.u32 %v480, 16
        %v688 = vor.u32 %v685, %v686
        %v689 = vrot.slane %v685, 4
        %v691 = vshrl.u32 %v481, 16
        %v693 = vrot.slane %v691, 7
        %v694 = vshll.u32 %v481, 16
        %v696 = vor.u32 %v693, %v694
        %v697 = vsel %vm489, %v689, %v696
        %v699 = vshrl.u32 %v482, 16
        %v701 = vrot.slane %v699, 7
        %v702 = vshll.u32 %v482, 16
        %v704 = vor.u32 %v701, %v702
        %v705 = vrot.slane %v701, 4
        %v707 = vshrl.u32 %v483, 16
        %v709 = vrot.slane %v707, 7
        %v710 = vshll.u32 %v483, 16
        %v712 = vor.u32 %v709, %v710
        %v713 = vsel %vm489, %v705, %v712
        %v715 = vshrl.u32 %v484, 16
        %v717 = vrot.slane %v715, 7
        %v718 = vshll.u32 %v484, 16
        %v720 = vor.u32 %v717, %v718
        %v721 = vrot.slane %v717, 4
        %v723 = vshrl.u32 %v485, 16
        %v725 = vrot.slane %v723, 7
        %v726 = vshll.u32 %v485, 16
        %v728 = vor.u32 %v725, %v726
        %v729 = vsel %vm489, %v721, %v728
        %v731 = vshrl.u32 %v486, 16
        %v733 = vrot.slane %v731, 7
        %v734 = vshll.u32 %v486, 16
        %v736 = vor.u32 %v733, %v734
        %v737 = vrot.slane %v733, 4
        %v739 = vshrl.u32 %v487, 16
        %v741 = vrot.slane %v739, 7
        %v742 = vshll.u32 %v487, 16
        %v744 = vor.u32 %v741, %v742
        %v745 = vsel %vm489, %v737, %v744
        %s778 = scalar_lea.vmem [#allocation2], 24
        %vm779 = vcmask 1043456
        %vm780 = vsmask.f32 7938
        %vm781 = vmand %vm779, %vm780
        %v782 = vld [vmem:[%s778] sm:$0xf]
        %v783 = vsel %vm781, %v496, %v782
        %784 = vst [vmem:[%s778] sm:$0xf] %v783
        %785 = vst [vmem:[%s778 + $0xc] sm:$0xf] %v505
        %v786 = vld [vmem:[%s778 + $0x18] sm:$0xf]
        %v787 = vsel %vm781, %v512, %v786
        %788 = vst [vmem:[%s778 + $0x18] sm:$0xf] %v787
        %789 = vst [vmem:[%s778 + $0x24] sm:$0xf] %v521
        %v790 = vld [vmem:[%s778 + $0x30] sm:$0xf]
        %v791 = vsel %vm781, %v528, %v790
        %792 = vst [vmem:[%s778 + $0x30] sm:$0xf] %v791
        %793 = vst [vmem:[%s778 + $0x3c] sm:$0xf] %v537
        %v794 = vld [vmem:[%s778 + $0x48] sm:$0xf]
        %v795 = vsel %vm781, %v544, %v794
        %796 = vst [vmem:[%s778 + $0x48] sm:$0xf] %v795
        %797 = vst [vmem:[%s778 + $0x54] sm:$0xf] %v553
        %v798 = vld [vmem:[%s778 + $0x60] sm:$0xf]
        %v799 = vsel %vm781, %v560, %v798
        %800 = vst [vmem:[%s778 + $0x60] sm:$0xf] %v799
        %801 = vst [vmem:[%s778 + $0x6c] sm:$0xf] %v569
        %v802 = vld [vmem:[%s778 + $0x78] sm:$0xf]
        %v803 = vsel %vm781, %v576, %v802
        %804 = vst [vmem:[%s778 + $0x78] sm:$0xf] %v803
        %805 = vst [vmem:[%s778 + $0x84] sm:$0xf] %v585
        %v806 = vld [vmem:[%s778 + $0x90] sm:$0xf]
        %v807 = vsel %vm781, %v592, %v806
        %808 = vst [vmem:[%s778 + $0x90] sm:$0xf] %v807
        %809 = vst [vmem:[%s778 + $0x9c] sm:$0xf] %v601
        %v810 = vld [vmem:[%s778 + $0xa8] sm:$0xf]
        %v811 = vsel %vm781, %v608, %v810
        %812 = vst [vmem:[%s778 + $0xa8] sm:$0xf] %v811
        %813 = vst [vmem:[%s778 + $0xb4] sm:$0xf] %v617
        %v814 = vld [vmem:[%s778 + $0xc0] sm:$0xf]
        %v815 = vsel %vm781, %v624, %v814
        %816 = vst [vmem:[%s778 + $0xc0] sm:$0xf] %v815
        %817 = vst [vmem:[%s778 + $0xcc] sm:$0xf] %v633
        %v818 = vld [vmem:[%s778 + $0xd8] sm:$0xf]
        %v819 = vsel %vm781, %v640, %v818
        %820 = vst [vmem:[%s778 + $0xd8] sm:$0xf] %v819
        %821 = vst [vmem:[%s778 + $0xe4] sm:$0xf] %v649
        %v822 = vld [vmem:[%s778 + $0xf0] sm:$0xf]
        %v823 = vsel %vm781, %v656, %v822
        %824 = vst [vmem:[%s778 + $0xf0] sm:$0xf] %v823
        %825 = vst [vmem:[%s778 + $0xfc] sm:$0xf] %v665
        %v826 = vld [vmem:[%s778 + $0x108] sm:$0xf]
        %v827 = vsel %vm781, %v672, %v826
        %828 = vst [vmem:[%s778 + $0x108] sm:$0xf] %v827
        %829 = vst [vmem:[%s778 + $0x114] sm:$0xf] %v681
        %v830 = vld [vmem:[%s778 + $0x120] sm:$0xf]
        %v831 = vsel %vm781, %v688, %v830
        %832 = vst [vmem:[%s778 + $0x120] sm:$0xf] %v831
        %833 = vst [vmem:[%s778 + $0x12c] sm:$0xf] %v697
        %v834 = vld [vmem:[%s778 + $0x138] sm:$0xf]
        %v835 = vsel %vm781, %v704, %v834
        %836 = vst [vmem:[%s778 + $0x138] sm:$0xf] %v835
        %837 = vst [vmem:[%s778 + $0x144] sm:$0xf] %v713
        %v838 = vld [vmem:[%s778 + $0x150] sm:$0xf]
        %v839 = vsel %vm781, %v720, %v838
        %840 = vst [vmem:[%s778 + $0x150] sm:$0xf] %v839
        %841 = vst [vmem:[%s778 + $0x15c] sm:$0xf] %v729
        %v842 = vld [vmem:[%s778 + $0x168] sm:$0xf]
        %v843 = vsel %vm781, %v736, %v842
        %844 = vst [vmem:[%s778 + $0x168] sm:$0xf] %v843
        %845 = vst [vmem:[%s778 + $0x174] sm:$0xf] %v745
        %846 = vst [vmem:[%s778 + $0x4] sm:$0xf] %v456
        %847 = vst [vmem:[%s778 + $0x10] sm:$0xf] %v457
        %848 = vst [vmem:[%s778 + $0x1c] sm:$0xf] %v458
        %849 = vst [vmem:[%s778 + $0x28] sm:$0xf] %v459
        %850 = vst [vmem:[%s778 + $0x34] sm:$0xf] %v460
        %851 = vst [vmem:[%s778 + $0x40] sm:$0xf] %v461
        %852 = vst [vmem:[%s778 + $0x4c] sm:$0xf] %v462
        %853 = vst [vmem:[%s778 + $0x58] sm:$0xf] %v463
        %854 = vst [vmem:[%s778 + $0x64] sm:$0xf] %v464
        %855 = vst [vmem:[%s778 + $0x70] sm:$0xf] %v465
        %856 = vst [vmem:[%s778 + $0x7c] sm:$0xf] %v466
        %857 = vst [vmem:[%s778 + $0x88] sm:$0xf] %v467
        %858 = vst [vmem:[%s778 + $0x94] sm:$0xf] %v468
        %859 = vst [vmem:[%s778 + $0xa0] sm:$0xf] %v469
        %860 = vst [vmem:[%s778 + $0xac] sm:$0xf] %v470
        %861 = vst [vmem:[%s778 + $0xb8] sm:$0xf] %v471
        %862 = vst [vmem:[%s778 + $0xc4] sm:$0xf] %v472
        %863 = vst [vmem:[%s778 + $0xd0] sm:$0xf] %v473
        %864 = vst [vmem:[%s778 + $0xdc] sm:$0xf] %v474
        %865 = vst [vmem:[%s778 + $0xe8] sm:$0xf] %v475
        %866 = vst [vmem:[%s778 + $0xf4] sm:$0xf] %v476
        %867 = vst [vmem:[%s778 + $0x100] sm:$0xf] %v477
        %868 = vst [vmem:[%s778 + $0x10c] sm:$0xf] %v478
        %869 = vst [vmem:[%s778 + $0x118] sm:$0xf] %v479
        %870 = vst [vmem:[%s778 + $0x124] sm:$0xf] %v480
        %871 = vst [vmem:[%s778 + $0x130] sm:$0xf] %v481
        %872 = vst [vmem:[%s778 + $0x13c] sm:$0xf] %v482
        %873 = vst [vmem:[%s778 + $0x148] sm:$0xf] %v483
        %874 = vst [vmem:[%s778 + $0x154] sm:$0xf] %v484
        %875 = vst [vmem:[%s778 + $0x160] sm:$0xf] %v485
        %876 = vst [vmem:[%s778 + $0x16c] sm:$0xf] %v486
        %877 = vst [vmem:[%s778 + $0x178] sm:$0xf] %v487
        %vm878 = vsmask.f32 3328
        %vm879 = vsmask.f32 7440
        %vm880 = vmor %vm878, %vm879
        %v881 = vrot.slane %v491, 4
        %v882 = vrot.slane %v494, 5
        %v883 = vor.u32 %v881, %v882
        %v884 = vrot.slane %v883, 4
        %v885 = vrot.slane %v502, 5
        %v886 = vsel %vm880, %v884, %v885
        %v887 = vrot.slane %v499, 4
        %v888 = vor.u32 %v887, %v885
        %v889 = vrot.slane %v888, 4
        %v890 = vrot.slane %v507, 4
        %v891 = vrot.slane %v510, 5
        %v892 = vor.u32 %v890, %v891
        %v893 = vrot.slane %v892, 4
        %v894 = vrot.slane %v518, 5
        %v895 = vsel %vm880, %v893, %v894
        %v896 = vrot.slane %v515, 4
        %v897 = vor.u32 %v896, %v894
        %v898 = vrot.slane %v897, 4
        %v899 = vrot.slane %v523, 4
        %v900 = vrot.slane %v526, 5
        %v901 = vor.u32 %v899, %v900
        %v902 = vrot.slane %v901, 4
        %v903 = vrot.slane %v534, 5
        %v904 = vsel %vm880, %v902, %v903
        %v905 = vrot.slane %v531, 4
        %v906 = vor.u32 %v905, %v903
        %v907 = vrot.slane %v906, 4
        %v908 = vrot.slane %v539, 4
        %v909 = vrot.slane %v542, 5
        %v910 = vor.u32 %v908, %v909
        %v911 = vrot.slane %v910, 4
        %v912 = vrot.slane %v550, 5
        %v913 = vsel %vm880, %v911, %v912
        %v914 = vrot.slane %v547, 4
        %v915 = vor.u32 %v914, %v912
        %v916 = vrot.slane %v915, 4
        %v917 = vrot.slane %v555, 4
        %v918 = vrot.slane %v558, 5
        %v919 = vor.u32 %v917, %v918
        %v920 = vrot.slane %v919, 4
        %v921 = vrot.slane %v566, 5
        %v922 = vsel %vm880, %v920, %v921
        %v923 = vrot.slane %v563, 4
        %v924 = vor.u32 %v923, %v921
        %v925 = vrot.slane %v924, 4
        %v926 = vrot.slane %v571, 4
        %v927 = vrot.slane %v574, 5
        %v928 = vor.u32 %v926, %v927
        %v929 = vrot.slane %v928, 4
        %v930 = vrot.slane %v582, 5
        %v931 = vsel %vm880, %v929, %v930
        %v932 = vrot.slane %v579, 4
        %v933 = vor.u32 %v932, %v930
        %v934 = vrot.slane %v933, 4
        %v935 = vrot.slane %v587, 4
        %v936 = vrot.slane %v590, 5
        %v937 = vor.u32 %v935, %v936
        %v938 = vrot.slane %v937, 4
        %v939 = vrot.slane %v598, 5
        %v940 = vsel %vm880, %v938, %v939
        %v941 = vrot.slane %v595, 4
        %v942 = vor.u32 %v941, %v939
        %v943 = vrot.slane %v942, 4
        %v944 = vrot.slane %v603, 4
        %v945 = vrot.slane %v606, 5
        %v946 = vor.u32 %v944, %v945
        %v947 = vrot.slane %v946, 4
        %v948 = vrot.slane %v614, 5
        %v949 = vsel %vm880, %v947, %v948
        %v950 = vrot.slane %v611, 4
        %v951 = vor.u32 %v950, %v948
        %v952 = vrot.slane %v951, 4
        %v953 = vrot.slane %v619, 4
        %v954 = vrot.slane %v622, 5
        %v955 = vor.u32 %v953, %v954
        %v956 = vrot.slane %v955, 4
        %v957 = vrot.slane %v630, 5
        %v958 = vsel %vm880, %v956, %v957
        %v959 = vrot.slane %v627, 4
        %v960 = vor.u32 %v959, %v957
        %v961 = vrot.slane %v960, 4
        %v962 = vrot.slane %v635, 4
        %v963 = vrot.slane %v638, 5
        %v964 = vor.u32 %v962, %v963
        %v965 = vrot.slane %v964, 4
        %v966 = vrot.slane %v646, 5
        %v967 = vsel %vm880, %v965, %v966
        %v968 = vrot.slane %v643, 4
        %v969 = vor.u32 %v968, %v966
        %v970 = vrot.slane %v969, 4
        %v971 = vrot.slane %v651, 4
        %v972 = vrot.slane %v654, 5
        %v973 = vor.u32 %v971, %v972
        %v974 = vrot.slane %v973, 4
        %v975 = vrot.slane %v662, 5
        %v976 = vsel %vm880, %v974, %v975
        %v977 = vrot.slane %v659, 4
        %v978 = vor.u32 %v977, %v975
        %v979 = vrot.slane %v978, 4
        %v980 = vrot.slane %v667, 4
        %v981 = vrot.slane %v670, 5
        %v982 = vor.u32 %v980, %v981
        %v983 = vrot.slane %v982, 4
        %v984 = vrot.slane %v678, 5
        %v985 = vsel %vm880, %v983, %v984
        %v986 = vrot.slane %v675, 4
        %v987 = vor.u32 %v986, %v984
        %v988 = vrot.slane %v987, 4
        %v989 = vrot.slane %v683, 4
        %v990 = vrot.slane %v686, 5
        %v991 = vor.u32 %v989, %v990
        %v992 = vrot.slane %v991, 4
        %v993 = vrot.slane %v694, 5
        %v994 = vsel %vm880, %v992, %v993
        %v995 = vrot.slane %v691, 4
        %v996 = vor.u32 %v995, %v993
        %v997 = vrot.slane %v996, 4
        %v998 = vrot.slane %v699, 4
        %v999 = vrot.slane %v702, 5
        %v1000 = vor.u32 %v998, %v999
        %v1001 = vrot.slane %v1000, 4
        %v1002 = vrot.slane %v710, 5
        %v1003 = vsel %vm880, %v1001, %v1002
        %v1004 = vrot.slane %v707, 4
        %v1005 = vor.u32 %v1004, %v1002
        %v1006 = vrot.slane %v1005, 4
        %v1007 = vrot.slane %v715, 4
        %v1008 = vrot.slane %v718, 5
        %v1009 = vor.u32 %v1007, %v1008
        %v1010 = vrot.slane %v1009, 4
        %v1011 = vrot.slane %v726, 5
        %v1012 = vsel %vm880, %v1010, %v1011
        %v1013 = vrot.slane %v723, 4
        %v1014 = vor.u32 %v1013, %v1011
        %v1015 = vrot.slane %v1014, 4
        %v1016 = vrot.slane %v731, 4
        %v1017 = vrot.slane %v734, 5
        %v1018 = vor.u32 %v1016, %v1017
        %v1019 = vrot.slane %v1018, 4
        %v1020 = vrot.slane %v742, 5
        %v1021 = vsel %vm880, %v1019, %v1020
        %v1022 = vrot.slane %v739, 4
        %v1023 = vor.u32 %v1022, %v1020
        %v1024 = vrot.slane %v1023, 4
        %1057 = vst [vmem:[%s778 + $0x8] sm:$0xf] %v886
        %vm1058 = vmand %vm779, %vm878
        %v1059 = vld [vmem:[%s778 + $0x14] sm:$0xf]
        %v1060 = vsel %vm1058, %v889, %v1059
        %1061 = vst [vmem:[%s778 + $0x14] sm:$0xf] %v1060
        %1062 = vst [vmem:[%s778 + $0x20] sm:$0xf] %v895
        %v1063 = vld [vmem:[%s778 + $0x2c] sm:$0xf]
        %v1064 = vsel %vm1058, %v898, %v1063
        %1065 = vst [vmem:[%s778 + $0x2c] sm:$0xf] %v1064
        %1066 = vst [vmem:[%s778 + $0x38] sm:$0xf] %v904
        %v1067 = vld [vmem:[%s778 + $0x44] sm:$0xf]
        %v1068 = vsel %vm1058, %v907, %v1067
        %1069 = vst [vmem:[%s778 + $0x44] sm:$0xf] %v1068
        %1070 = vst [vmem:[%s778 + $0x50] sm:$0xf] %v913
        %v1071 = vld [vmem:[%s778 + $0x5c] sm:$0xf]
        %v1072 = vsel %vm1058, %v916, %v1071
        %1073 = vst [vmem:[%s778 + $0x5c] sm:$0xf] %v1072
        %1074 = vst [vmem:[%s778 + $0x68] sm:$0xf] %v922
        %v1075 = vld [vmem:[%s778 + $0x74] sm:$0xf]
        %v1076 = vsel %vm1058, %v925, %v1075
        %1077 = vst [vmem:[%s778 + $0x74] sm:$0xf] %v1076
        %1078 = vst [vmem:[%s778 + $0x80] sm:$0xf] %v931
        %v1079 = vld [vmem:[%s778 + $0x8c] sm:$0xf]
        %v1080 = vsel %vm1058, %v934, %v1079
        %1081 = vst [vmem:[%s778 + $0x8c] sm:$0xf] %v1080
        %1082 = vst [vmem:[%s778 + $0x98] sm:$0xf] %v940
        %v1083 = vld [vmem:[%s778 + $0xa4] sm:$0xf]
        %v1084 = vsel %vm1058, %v943, %v1083
        %1085 = vst [vmem:[%s778 + $0xa4] sm:$0xf] %v1084
        %1086 = vst [vmem:[%s778 + $0xb0] sm:$0xf] %v949
        %v1087 = vld [vmem:[%s778 + $0xbc] sm:$0xf]
        %v1088 = vsel %vm1058, %v952, %v1087
        %1089 = vst [vmem:[%s778 + $0xbc] sm:$0xf] %v1088
        %1090 = vst [vmem:[%s778 + $0xc8] sm:$0xf] %v958
        %v1091 = vld [vmem:[%s778 + $0xd4] sm:$0xf]
        %v1092 = vsel %vm1058, %v961, %v1091
        %1093 = vst [vmem:[%s778 + $0xd4] sm:$0xf] %v1092
        %1094 = vst [vmem:[%s778 + $0xe0] sm:$0xf] %v967
        %v1095 = vld [vmem:[%s778 + $0xec] sm:$0xf]
        %v1096 = vsel %vm1058, %v970, %v1095
        %1097 = vst [vmem:[%s778 + $0xec] sm:$0xf] %v1096
        %1098 = vst [vmem:[%s778 + $0xf8] sm:$0xf] %v976
        %v1099 = vld [vmem:[%s778 + $0x104] sm:$0xf]
        %v1100 = vsel %vm1058, %v979, %v1099
        %1101 = vst [vmem:[%s778 + $0x104] sm:$0xf] %v1100
        %1102 = vst [vmem:[%s778 + $0x110] sm:$0xf] %v985
        %v1103 = vld [vmem:[%s778 + $0x11c] sm:$0xf]
        %v1104 = vsel %vm1058, %v988, %v1103
        %1105 = vst [vmem:[%s778 + $0x11c] sm:$0xf] %v1104
        %1106 = vst [vmem:[%s778 + $0x128] sm:$0xf] %v994
        %v1107 = vld [vmem:[%s778 + $0x134] sm:$0xf]
        %v1108 = vsel %vm1058, %v997, %v1107
        %1109 = vst [vmem:[%s778 + $0x134] sm:$0xf] %v1108
        %1110 = vst [vmem:[%s778 + $0x140] sm:$0xf] %v1003
        %v1111 = vld [vmem:[%s778 + $0x14c] sm:$0xf]
        %v1112 = vsel %vm1058, %v1006, %v1111
        %1113 = vst [vmem:[%s778 + $0x14c] sm:$0xf] %v1112
        %1114 = vst [vmem:[%s778 + $0x158] sm:$0xf] %v1012
        %v1115 = vld [vmem:[%s778 + $0x164] sm:$0xf]
        %v1116 = vsel %vm1058, %v1015, %v1115
        %1117 = vst [vmem:[%s778 + $0x164] sm:$0xf] %v1116
        %1118 = vst [vmem:[%s778 + $0x170] sm:$0xf] %v1021
        %v1119 = vld [vmem:[%s778 + $0x17c] sm:$0xf]
        %v1120 = vsel %vm1058, %v1024, %v1119
        %1121 = vst [vmem:[%s778 + $0x17c] sm:$0xf] %v1120
        %v1122 = vld [vmem:[#allocation2] sm:$0xff]
        %v1123 = vld [vmem:[#allocation2 + $0x8] sm:$0xf]
        %v1124 = vld [vmem:[#allocation2 + $0xc] sm:$0xff]
        %v1125 = vld [vmem:[#allocation2 + $0x14] sm:$0xf]
        %v1126 = vld [vmem:[#allocation2 + $0x18] sm:$0xff]
        %v1127 = vld [vmem:[#allocation2 + $0x20] sm:$0xf]
        %v1128 = vld [vmem:[#allocation2 + $0x24] sm:$0xff]
        %v1129 = vld [vmem:[#allocation2 + $0x2c] sm:$0xf]
        %v1130 = vld [vmem:[#allocation2 + $0x30] sm:$0xff]
        %v1131 = vld [vmem:[#allocation2 + $0x38] sm:$0xf]
        %v1132 = vld [vmem:[#allocation2 + $0x3c] sm:$0xff]
        %v1133 = vld [vmem:[#allocation2 + $0x44] sm:$0xf]
        %v1134 = vld [vmem:[#allocation2 + $0x48] sm:$0xff]
        %v1135 = vld [vmem:[#allocation2 + $0x50] sm:$0xf]
        %v1136 = vld [vmem:[#allocation2 + $0x54] sm:$0xff]
        %v1137 = vld [vmem:[#allocation2 + $0x5c] sm:$0xf]
        %v1138 = vld [vmem:[#allocation2 + $0x60] sm:$0xff]
        %v1139 = vld [vmem:[#allocation2 + $0x68] sm:$0xf]
        %v1140 = vld [vmem:[#allocation2 + $0x6c] sm:$0xff]
        %v1141 = vld [vmem:[#allocation2 + $0x74] sm:$0xf]
        %v1142 = vld [vmem:[#allocation2 + $0x78] sm:$0xff]
        %v1143 = vld [vmem:[#allocation2 + $0x80] sm:$0xf]
        %v1144 = vld [vmem:[#allocation2 + $0x84] sm:$0xff]
        %v1145 = vld [vmem:[#allocation2 + $0x8c] sm:$0xf]
        %v1146 = vld [vmem:[#allocation2 + $0x90] sm:$0xff]
        %v1147 = vld [vmem:[#allocation2 + $0x98] sm:$0xf]
        %v1148 = vld [vmem:[#allocation2 + $0x9c] sm:$0xff]
        %v1149 = vld [vmem:[#allocation2 + $0xa4] sm:$0xf]
        %v1150 = vld [vmem:[#allocation2 + $0xa8] sm:$0xff]
        %v1151 = vld [vmem:[#allocation2 + $0xb0] sm:$0xf]
        %v1152 = vld [vmem:[#allocation2 + $0xb4] sm:$0xff]
        %v1153 = vld [vmem:[#allocation2 + $0xbc] sm:$0xf]
        %v1154 = vld [vmem:[#allocation2 + $0xc0] sm:$0xff]
        %v1155 = vld [vmem:[#allocation2 + $0xc8] sm:$0xf]
        %v1156 = vld [vmem:[#allocation2 + $0xcc] sm:$0xff]
        %v1157 = vld [vmem:[#allocation2 + $0xd4] sm:$0xf]
        %v1158 = vld [vmem:[#allocation2 + $0xd8] sm:$0xff]
        %v1159 = vld [vmem:[#allocation2 + $0xe0] sm:$0xf]
        %v1160 = vld [vmem:[#allocation2 + $0xe4] sm:$0xff]
        %v1161 = vld [vmem:[#allocation2 + $0xec] sm:$0xf]
        %v1162 = vld [vmem:[#allocation2 + $0xf0] sm:$0xff]
        %v1163 = vld [vmem:[#allocation2 + $0xf8] sm:$0xf]
        %v1164 = vld [vmem:[#allocation2 + $0xfc] sm:$0xff]
        %v1165 = vld [vmem:[#allocation2 + $0x104] sm:$0xf]
        %v1166 = vld [vmem:[#allocation2 + $0x108] sm:$0xff]
        %v1167 = vld [vmem:[#allocation2 + $0x110] sm:$0xf]
        %v1168 = vld [vmem:[#allocation2 + $0x114] sm:$0xff]
        %v1169 = vld [vmem:[#allocation2 + $0x11c] sm:$0xf]
        %v1170 = vld [vmem:[#allocation2 + $0x120] sm:$0xff]
        %v1171 = vld [vmem:[#allocation2 + $0x128] sm:$0xf]
        %v1172 = vld [vmem:[#allocation2 + $0x12c] sm:$0xff]
        %v1173 = vld [vmem:[#allocation2 + $0x134] sm:$0xf]
        %v1174 = vld [vmem:[#allocation2 + $0x138] sm:$0xff]
        %v1175 = vld [vmem:[#allocation2 + $0x140] sm:$0xf]
        %v1176 = vld [vmem:[#allocation2 + $0x144] sm:$0xff]
        %v1177 = vld [vmem:[#allocation2 + $0x14c] sm:$0xf]
        %v1178 = vld [vmem:[#allocation2 + $0x150] sm:$0xff]
        %v1179 = vld [vmem:[#allocation2 + $0x158] sm:$0xf]
        %v1180 = vld [vmem:[#allocation2 + $0x15c] sm:$0xff]
        %v1181 = vld [vmem:[#allocation2 + $0x164] sm:$0xf]
        %v1182 = vld [vmem:[#allocation2 + $0x168] sm:$0xff]
        %v1183 = vld [vmem:[#allocation2 + $0x170] sm:$0xf]
        %v1184 = vld [vmem:[#allocation2 + $0x174] sm:$0xff]
        %v1185 = vld [vmem:[#allocation2 + $0x17c] sm:$0xf]
        %v1186 = vld [vmem:[#allocation6] sm:$0xf]
        %v1187 = vld [vmem:[#allocation6 + $0x4] sm:$0xf]
        %v1188 = vld [vmem:[#allocation6 + $0x8] sm:$0xf]
        %v1189 = vld [vmem:[#allocation6 + $0xc] sm:$0xf]
        %v1190 = vld [vmem:[#allocation6 + $0x10] sm:$0xf]
        %v1191 = vld [vmem:[#allocation6 + $0x14] sm:$0xf]
        %v1192 = vld [vmem:[#allocation6 + $0x18] sm:$0xf]
        %v1193 = vld [vmem:[#allocation6 + $0x1c] sm:$0xf]
        %v1194 = vld [vmem:[#allocation6 + $0x20] sm:$0xf]
        %v1195 = vld [vmem:[#allocation6 + $0x24] sm:$0xf]
        %v1196 = vld [vmem:[#allocation6 + $0x28] sm:$0xf]
        %v1197 = vld [vmem:[#allocation6 + $0x2c] sm:$0xf]
        %v1198 = vld [vmem:[#allocation6 + $0x30] sm:$0xf]
        %v1199 = vld [vmem:[#allocation6 + $0x34] sm:$0xf]
        %v1200 = vld [vmem:[#allocation6 + $0x38] sm:$0xf]
        %v1201 = vld [vmem:[#allocation6 + $0x3c] sm:$0xf]
        %v1202 = vld [vmem:[#allocation6 + $0x40] sm:$0xf]
        %v1203 = vld [vmem:[#allocation6 + $0x44] sm:$0xf]
        %v1204 = vld [vmem:[#allocation6 + $0x48] sm:$0xf]
        %v1205 = vld [vmem:[#allocation6 + $0x4c] sm:$0xf]
        %v1206 = vld [vmem:[#allocation6 + $0x50] sm:$0xf]
        %v1207 = vld [vmem:[#allocation6 + $0x54] sm:$0xf]
        %v1208 = vld [vmem:[#allocation6 + $0x58] sm:$0xf]
        %v1209 = vld [vmem:[#allocation6 + $0x5c] sm:$0xf]
        %v1210 = vld [vmem:[#allocation6 + $0x60] sm:$0xf]
        %v1211 = vld [vmem:[#allocation6 + $0x64] sm:$0xf]
        %v1212 = vld [vmem:[#allocation6 + $0x68] sm:$0xf]
        %v1213 = vld [vmem:[#allocation6 + $0x6c] sm:$0xf]
        %v1214 = vld [vmem:[#allocation6 + $0x70] sm:$0xf]
        %v1215 = vld [vmem:[#allocation6 + $0x74] sm:$0xf]
        %v1216 = vld [vmem:[#allocation6 + $0x78] sm:$0xf]
        %v1217 = vld [vmem:[#allocation6 + $0x7c] sm:$0xf]
        %v1218 = vld [vmem:[#allocation6 + $0x80] sm:$0xf]
        %v1219 = vld [vmem:[#allocation6 + $0x84] sm:$0xf]
        %v1220 = vld [vmem:[#allocation6 + $0x88] sm:$0xf]
        %v1221 = vld [vmem:[#allocation6 + $0x8c] sm:$0xf]
        %v1222 = vld [vmem:[#allocation6 + $0x90] sm:$0xf]
        %v1223 = vld [vmem:[#allocation6 + $0x94] sm:$0xf]
        %v1224 = vld [vmem:[#allocation6 + $0x98] sm:$0xf]
        %v1225 = vld [vmem:[#allocation6 + $0x9c] sm:$0xf]
        %v1226 = vld [vmem:[#allocation6 + $0xa0] sm:$0xf]
        %v1227 = vld [vmem:[#allocation6 + $0xa4] sm:$0xf]
        %v1228 = vld [vmem:[#allocation6 + $0xa8] sm:$0xf]
        %v1229 = vld [vmem:[#allocation6 + $0xac] sm:$0xf]
        %v1230 = vld [vmem:[#allocation6 + $0xb0] sm:$0xf]
        %v1231 = vld [vmem:[#allocation6 + $0xb4] sm:$0xf]
        %v1232 = vld [vmem:[#allocation6 + $0xb8] sm:$0xf]
        %v1233 = vld [vmem:[#allocation6 + $0xbc] sm:$0xf]
        %v1234 = vld [vmem:[%s778] sm:$0xff]
        %v1235 = vld [vmem:[%s778 + $0x8] sm:$0xf]
        %v1236 = vld [vmem:[%s778 + $0xc] sm:$0xff]
        %v1237 = vld [vmem:[%s778 + $0x14] sm:$0xf]
        %v1238 = vld [vmem:[%s778 + $0x18] sm:$0xff]
        %v1239 = vld [vmem:[%s778 + $0x20] sm:$0xf]
        %v1240 = vld [vmem:[%s778 + $0x24] sm:$0xff]
        %v1241 = vld [vmem:[%s778 + $0x2c] sm:$0xf]
        %v1242 = vld [vmem:[%s778 + $0x30] sm:$0xff]
        %v1243 = vld [vmem:[%s778 + $0x38] sm:$0xf]
        %v1244 = vld [vmem:[%s778 + $0x3c] sm:$0xff]
        %v1245 = vld [vmem:[%s778 + $0x44] sm:$0xf]
        %v1246 = vld [vmem:[%s778 + $0x48] sm:$0xff]
        %v1247 = vld [vmem:[%s778 + $0x50] sm:$0xf]
        %v1248 = vld [vmem:[%s778 + $0x54] sm:$0xff]
        %v1249 = vld [vmem:[%s778 + $0x5c] sm:$0xf]
        %v1250 = vld [vmem:[%s778 + $0x60] sm:$0xff]
        %v1251 = vld [vmem:[%s778 + $0x68] sm:$0xf]
        %v1252 = vld [vmem:[%s778 + $0x6c] sm:$0xff]
        %v1253 = vld [vmem:[%s778 + $0x74] sm:$0xf]
        %v1254 = vld [vmem:[%s778 + $0x78] sm:$0xff]
        %v1255 = vld [vmem:[%s778 + $0x80] sm:$0xf]
        %v1256 = vld [vmem:[%s778 + $0x84] sm:$0xff]
        %v1257 = vld [vmem:[%s778 + $0x8c] sm:$0xf]
        %v1258 = vld [vmem:[%s778 + $0x90] sm:$0xff]
        %v1259 = vld [vmem:[%s778 + $0x98] sm:$0xf]
        %v1260 = vld [vmem:[%s778 + $0x9c] sm:$0xff]
        %v1261 = vld [vmem:[%s778 + $0xa4] sm:$0xf]
        %v1262 = vld [vmem:[%s778 + $0xa8] sm:$0xff]
        %v1263 = vld [vmem:[%s778 + $0xb0] sm:$0xf]
        %v1264 = vld [vmem:[%s778 + $0xb4] sm:$0xff]
        %v1265 = vld [vmem:[%s778 + $0xbc] sm:$0xf]
        %v1266 = vld [vmem:[%s778 + $0xc0] sm:$0xff]
        %v1267 = vld [vmem:[%s778 + $0xc8] sm:$0xf]
        %v1268 = vld [vmem:[%s778 + $0xcc] sm:$0xff]
        %v1269 = vld [vmem:[%s778 + $0xd4] sm:$0xf]
        %v1270 = vld [vmem:[%s778 + $0xd8] sm:$0xff]
        %v1271 = vld [vmem:[%s778 + $0xe0] sm:$0xf]
        %v1272 = vld [vmem:[%s778 + $0xe4] sm:$0xff]
        %v1273 = vld [vmem:[%s778 + $0xec] sm:$0xf]
        %v1274 = vld [vmem:[%s778 + $0xf0] sm:$0xff]
        %v1275 = vld [vmem:[%s778 + $0xf8] sm:$0xf]
        %v1276 = vld [vmem:[%s778 + $0xfc] sm:$0xff]
        %v1277 = vld [vmem:[%s778 + $0x104] sm:$0xf]
        %v1278 = vld [vmem:[%s778 + $0x108] sm:$0xff]
        %v1279 = vld [vmem:[%s778 + $0x110] sm:$0xf]
        %v1280 = vld [vmem:[%s778 + $0x114] sm:$0xff]
        %v1281 = vld [vmem:[%s778 + $0x11c] sm:$0xf]
        %v1282 = vld [vmem:[%s778 + $0x120] sm:$0xff]
        %v1283 = vld [vmem:[%s778 + $0x128] sm:$0xf]
        %v1284 = vld [vmem:[%s778 + $0x12c] sm:$0xff]
        %v1285 = vld [vmem:[%s778 + $0x134] sm:$0xf]
        %v1286 = vld [vmem:[%s778 + $0x138] sm:$0xff]
        %v1287 = vld [vmem:[%s778 + $0x140] sm:$0xf]
        %v1288 = vld [vmem:[%s778 + $0x144] sm:$0xff]
        %v1289 = vld [vmem:[%s778 + $0x14c] sm:$0xf]
        %v1290 = vld [vmem:[%s778 + $0x150] sm:$0xff]
        %v1291 = vld [vmem:[%s778 + $0x158] sm:$0xf]
        %v1292 = vld [vmem:[%s778 + $0x15c] sm:$0xff]
        %v1293 = vld [vmem:[%s778 + $0x164] sm:$0xf]
        %v1294 = vld [vmem:[%s778 + $0x168] sm:$0xff]
        %v1295 = vld [vmem:[%s778 + $0x170] sm:$0xf]
        %v1296 = vld [vmem:[%s778 + $0x174] sm:$0xff]
        %v1297 = vld [vmem:[%s778 + $0x17c] sm:$0xf]
        %s1298 = scalar_lea.vmem [#allocation6], 192
        %v1299 = vld [vmem:[%s1298] sm:$0xf]
        %v1300 = vld [vmem:[%s1298 + $0x4] sm:$0xf]
        %v1301 = vld [vmem:[%s1298 + $0x8] sm:$0xf]
        %v1302 = vld [vmem:[%s1298 + $0xc] sm:$0xf]
        %v1303 = vld [vmem:[%s1298 + $0x10] sm:$0xf]
        %v1304 = vld [vmem:[%s1298 + $0x14] sm:$0xf]
        %v1305 = vld [vmem:[%s1298 + $0x18] sm:$0xf]
        %v1306 = vld [vmem:[%s1298 + $0x1c] sm:$0xf]
        %v1307 = vld [vmem:[%s1298 + $0x20] sm:$0xf]
        %v1308 = vld [vmem:[%s1298 + $0x24] sm:$0xf]
        %v1309 = vld [vmem:[%s1298 + $0x28] sm:$0xf]
        %v1310 = vld [vmem:[%s1298 + $0x2c] sm:$0xf]
        %v1311 = vld [vmem:[%s1298 + $0x30] sm:$0xf]
        %v1312 = vld [vmem:[%s1298 + $0x34] sm:$0xf]
        %v1313 = vld [vmem:[%s1298 + $0x38] sm:$0xf]
        %v1314 = vld [vmem:[%s1298 + $0x3c] sm:$0xf]
        %v1315 = vld [vmem:[%s1298 + $0x40] sm:$0xf]
        %v1316 = vld [vmem:[%s1298 + $0x44] sm:$0xf]
        %v1317 = vld [vmem:[%s1298 + $0x48] sm:$0xf]
        %v1318 = vld [vmem:[%s1298 + $0x4c] sm:$0xf]
        %v1319 = vld [vmem:[%s1298 + $0x50] sm:$0xf]
        %v1320 = vld [vmem:[%s1298 + $0x54] sm:$0xf]
        %v1321 = vld [vmem:[%s1298 + $0x58] sm:$0xf]
        %v1322 = vld [vmem:[%s1298 + $0x5c] sm:$0xf]
        %v1323 = vld [vmem:[%s1298 + $0x60] sm:$0xf]
        %v1324 = vld [vmem:[%s1298 + $0x64] sm:$0xf]
        %v1325 = vld [vmem:[%s1298 + $0x68] sm:$0xf]
        %v1326 = vld [vmem:[%s1298 + $0x6c] sm:$0xf]
        %v1327 = vld [vmem:[%s1298 + $0x70] sm:$0xf]
        %v1328 = vld [vmem:[%s1298 + $0x74] sm:$0xf]
        %v1329 = vld [vmem:[%s1298 + $0x78] sm:$0xf]
        %v1330 = vld [vmem:[%s1298 + $0x7c] sm:$0xf]
        %v1331 = vld [vmem:[%s1298 + $0x80] sm:$0xf]
        %v1332 = vld [vmem:[%s1298 + $0x84] sm:$0xf]
        %v1333 = vld [vmem:[%s1298 + $0x88] sm:$0xf]
        %v1334 = vld [vmem:[%s1298 + $0x8c] sm:$0xf]
        %v1335 = vld [vmem:[%s1298 + $0x90] sm:$0xf]
        %v1336 = vld [vmem:[%s1298 + $0x94] sm:$0xf]
        %v1337 = vld [vmem:[%s1298 + $0x98] sm:$0xf]
        %v1338 = vld [vmem:[%s1298 + $0x9c] sm:$0xf]
        %v1339 = vld [vmem:[%s1298 + $0xa0] sm:$0xf]
        %v1340 = vld [vmem:[%s1298 + $0xa4] sm:$0xf]
        %v1341 = vld [vmem:[%s1298 + $0xa8] sm:$0xf]
        %v1342 = vld [vmem:[%s1298 + $0xac] sm:$0xf]
        %v1343 = vld [vmem:[%s1298 + $0xb0] sm:$0xf]
        %v1344 = vld [vmem:[%s1298 + $0xb4] sm:$0xf]
        %v1345 = vld [vmem:[%s1298 + $0xb8] sm:$0xf]
        %v1346 = vld [vmem:[%s1298 + $0xbc] sm:$0xf]
        %v1411 = vunpack.c.l.b16 %v1234
        %v1412 = vunpack.c.h.b16 %v1234
        %v1413 = vunpack.c.l.b16 %v1235
        %v1414 = vunpack.c.l.b16 %v1236
        %v1415 = vunpack.c.h.b16 %v1236
        %v1416 = vunpack.c.l.b16 %v1237
        %v1417 = vunpack.c.l.b16 %v1238
        %v1418 = vunpack.c.h.b16 %v1238
        %v1419 = vunpack.c.l.b16 %v1239
        %v1420 = vunpack.c.l.b16 %v1240
        %v1421 = vunpack.c.h.b16 %v1240
        %v1422 = vunpack.c.l.b16 %v1241
        %v1423 = vunpack.c.l.b16 %v1242
        %v1424 = vunpack.c.h.b16 %v1242
        %v1425 = vunpack.c.l.b16 %v1243
        %v1426 = vunpack.c.l.b16 %v1244
        %v1427 = vunpack.c.h.b16 %v1244
        %v1428 = vunpack.c.l.b16 %v1245
        %v1429 = vunpack.c.l.b16 %v1246
        %v1430 = vunpack.c.h.b16 %v1246
        %v1431 = vunpack.c.l.b16 %v1247
        %v1432 = vunpack.c.l.b16 %v1248
        %v1433 = vunpack.c.h.b16 %v1248
        %v1434 = vunpack.c.l.b16 %v1249
        %v1435 = vunpack.c.l.b16 %v1250
        %v1436 = vunpack.c.h.b16 %v1250
        %v1437 = vunpack.c.l.b16 %v1251
        %v1438 = vunpack.c.l.b16 %v1252
        %v1439 = vunpack.c.h.b16 %v1252
        %v1440 = vunpack.c.l.b16 %v1253
        %v1441 = vunpack.c.l.b16 %v1254
        %v1442 = vunpack.c.h.b16 %v1254
        %v1443 = vunpack.c.l.b16 %v1255
        %v1444 = vunpack.c.l.b16 %v1256
        %v1445 = vunpack.c.h.b16 %v1256
        %v1446 = vunpack.c.l.b16 %v1257
        %v1447 = vunpack.c.l.b16 %v1258
        %v1448 = vunpack.c.h.b16 %v1258
        %v1449 = vunpack.c.l.b16 %v1259
        %v1450 = vunpack.c.l.b16 %v1260
        %v1451 = vunpack.c.h.b16 %v1260
        %v1452 = vunpack.c.l.b16 %v1261
        %v1453 = vunpack.c.l.b16 %v1262
        %v1454 = vunpack.c.h.b16 %v1262
        %v1455 = vunpack.c.l.b16 %v1263
        %v1456 = vunpack.c.l.b16 %v1264
        %v1457 = vunpack.c.h.b16 %v1264
        %v1458 = vunpack.c.l.b16 %v1265
        %v1459 = vunpack.c.l.b16 %v1266
        %v1460 = vunpack.c.h.b16 %v1266
        %v1461 = vunpack.c.l.b16 %v1267
        %v1462 = vunpack.c.l.b16 %v1268
        %v1463 = vunpack.c.h.b16 %v1268
        %v1464 = vunpack.c.l.b16 %v1269
        %v1465 = vunpack.c.l.b16 %v1270
        %v1466 = vunpack.c.h.b16 %v1270
        %v1467 = vunpack.c.l.b16 %v1271
        %v1468 = vunpack.c.l.b16 %v1272
        %v1469 = vunpack.c.h.b16 %v1272
        %v1470 = vunpack.c.l.b16 %v1273
        %v1471 = vunpack.c.l.b16 %v1274
        %v1472 = vunpack.c.h.b16 %v1274
        %v1473 = vunpack.c.l.b16 %v1275
        %v1474 = vunpack.c.l.b16 %v1276
        %v1475 = vunpack.c.h.b16 %v1276
        %v1476 = vunpack.c.l.b16 %v1277
        %v1477 = vunpack.c.l.b16 %v1278
        %v1478 = vunpack.c.h.b16 %v1278
        %v1479 = vunpack.c.l.b16 %v1279
        %v1480 = vunpack.c.l.b16 %v1280
        %v1481 = vunpack.c.h.b16 %v1280
        %v1482 = vunpack.c.l.b16 %v1281
        %v1483 = vunpack.c.l.b16 %v1282
        %v1484 = vunpack.c.h.b16 %v1282
        %v1485 = vunpack.c.l.b16 %v1283
        %v1486 = vunpack.c.l.b16 %v1284
        %v1487 = vunpack.c.h.b16 %v1284
        %v1488 = vunpack.c.l.b16 %v1285
        %v1489 = vunpack.c.l.b16 %v1286
        %v1490 = vunpack.c.h.b16 %v1286
        %v1491 = vunpack.c.l.b16 %v1287
        %v1492 = vunpack.c.l.b16 %v1288
        %v1493 = vunpack.c.h.b16 %v1288
        %v1494 = vunpack.c.l.b16 %v1289
        %v1495 = vunpack.c.l.b16 %v1290
        %v1496 = vunpack.c.h.b16 %v1290
        %v1497 = vunpack.c.l.b16 %v1291
        %v1498 = vunpack.c.l.b16 %v1292
        %v1499 = vunpack.c.h.b16 %v1292
        %v1500 = vunpack.c.l.b16 %v1293
        %v1501 = vunpack.c.l.b16 %v1294
        %v1502 = vunpack.c.h.b16 %v1294
        %v1503 = vunpack.c.l.b16 %v1295
        %v1504 = vunpack.c.l.b16 %v1296
        %v1505 = vunpack.c.h.b16 %v1296
        %v1506 = vunpack.c.l.b16 %v1297
        %v1507 = vpack.c.b16 %v1414, %v1411
        %v1508 = vpack.c.b16 %v1415, %v1412
        %v1509 = vpack.c.b16 %v1416, %v1413
        %v1510 = vpack.c.b16 %v1420, %v1417
        %v1511 = vpack.c.b16 %v1421, %v1418
        %v1512 = vpack.c.b16 %v1422, %v1419
        %v1513 = vpack.c.b16 %v1426, %v1423
        %v1514 = vpack.c.b16 %v1427, %v1424
        %v1515 = vpack.c.b16 %v1428, %v1425
        %v1516 = vpack.c.b16 %v1432, %v1429
        %v1517 = vpack.c.b16 %v1433, %v1430
        %v1518 = vpack.c.b16 %v1434, %v1431
        %v1519 = vpack.c.b16 %v1438, %v1435
        %v1520 = vpack.c.b16 %v1439, %v1436
        %v1521 = vpack.c.b16 %v1440, %v1437
        %v1522 = vpack.c.b16 %v1444, %v1441
        %v1523 = vpack.c.b16 %v1445, %v1442
        %v1524 = vpack.c.b16 %v1446, %v1443
        %v1525 = vpack.c.b16 %v1450, %v1447
        %v1526 = vpack.c.b16 %v1451, %v1448
        %v1527 = vpack.c.b16 %v1452, %v1449
        %v1528 = vpack.c.b16 %v1456, %v1453
        %v1529 = vpack.c.b16 %v1457, %v1454
        %v1530 = vpack.c.b16 %v1458, %v1455
        %v1531 = vpack.c.b16 %v1462, %v1459
        %v1532 = vpack.c.b16 %v1463, %v1460
        %v1533 = vpack.c.b16 %v1464, %v1461
        %v1534 = vpack.c.b16 %v1468, %v1465
        %v1535 = vpack.c.b16 %v1469, %v1466
        %v1536 = vpack.c.b16 %v1470, %v1467
        %v1537 = vpack.c.b16 %v1474, %v1471
        %v1538 = vpack.c.b16 %v1475, %v1472
        %v1539 = vpack.c.b16 %v1476, %v1473
        %v1540 = vpack.c.b16 %v1480, %v1477
        %v1541 = vpack.c.b16 %v1481, %v1478
        %v1542 = vpack.c.b16 %v1482, %v1479
        %v1543 = vpack.c.b16 %v1486, %v1483
        %v1544 = vpack.c.b16 %v1487, %v1484
        %v1545 = vpack.c.b16 %v1488, %v1485
        %v1546 = vpack.c.b16 %v1492, %v1489
        %v1547 = vpack.c.b16 %v1493, %v1490
        %v1548 = vpack.c.b16 %v1494, %v1491
        %v1549 = vpack.c.b16 %v1498, %v1495
        %v1550 = vpack.c.b16 %v1499, %v1496
        %v1551 = vpack.c.b16 %v1500, %v1497
        %v1552 = vpack.c.b16 %v1504, %v1501
        %v1553 = vpack.c.b16 %v1505, %v1502
        %v1554 = vpack.c.b16 %v1506, %v1503
        %v1651 = vunpack.c.l.b16 %v1299
        %v1652 = vunpack.c.l.b16 %v1300
        %v1653 = vunpack.c.l.b16 %v1301
        %v1654 = vunpack.c.l.b16 %v1302
        %v1655 = vunpack.c.l.b16 %v1303
        %v1656 = vunpack.c.l.b16 %v1304
        %v1657 = vunpack.c.l.b16 %v1305
        %v1658 = vunpack.c.l.b16 %v1306
        %v1659 = vunpack.c.l.b16 %v1307
        %v1660 = vunpack.c.l.b16 %v1308
        %v1661 = vunpack.c.l.b16 %v1309
        %v1662 = vunpack.c.l.b16 %v1310
        %v1663 = vunpack.c.l.b16 %v1311
        %v1664 = vunpack.c.l.b16 %v1312
        %v1665 = vunpack.c.l.b16 %v1313
        %v1666 = vunpack.c.l.b16 %v1314
        %v1667 = vunpack.c.l.b16 %v1315
        %v1668 = vunpack.c.l.b16 %v1316
        %v1669 = vunpack.c.l.b16 %v1317
        %v1670 = vunpack.c.l.b16 %v1318
        %v1671 = vunpack.c.l.b16 %v1319
        %v1672 = vunpack.c.l.b16 %v1320
        %v1673 = vunpack.c.l.b16 %v1321
        %v1674 = vunpack.c.l.b16 %v1322
        %v1675 = vunpack.c.l.b16 %v1323
        %v1676 = vunpack.c.l.b16 %v1324
        %v1677 = vunpack.c.l.b16 %v1325
        %v1678 = vunpack.c.l.b16 %v1326
        %v1679 = vunpack.c.l.b16 %v1327
        %v1680 = vunpack.c.l.b16 %v1328
        %v1681 = vunpack.c.l.b16 %v1329
        %v1682 = vunpack.c.l.b16 %v1330
        %v1683 = vunpack.c.l.b16 %v1331
        %v1684 = vunpack.c.l.b16 %v1332
        %v1685 = vunpack.c.l.b16 %v1333
        %v1686 = vunpack.c.l.b16 %v1334
        %v1687 = vunpack.c.l.b16 %v1335
        %v1688 = vunpack.c.l.b16 %v1336
        %v1689 = vunpack.c.l.b16 %v1337
        %v1690 = vunpack.c.l.b16 %v1338
        %v1691 = vunpack.c.l.b16 %v1339
        %v1692 = vunpack.c.l.b16 %v1340
        %v1693 = vunpack.c.l.b16 %v1341
        %v1694 = vunpack.c.l.b16 %v1342
        %v1695 = vunpack.c.l.b16 %v1343
        %v1696 = vunpack.c.l.b16 %v1344
        %v1697 = vunpack.c.l.b16 %v1345
        %v1698 = vunpack.c.l.b16 %v1346
        %v1699 = vpack.c.b16 %v1652, %v1651
        %v1700 = vpack.c.b16 %v1654, %v1653
        %v1701 = vpack.c.b16 %v1656, %v1655
        %v1702 = vpack.c.b16 %v1658, %v1657
        %v1703 = vpack.c.b16 %v1660, %v1659
        %v1704 = vpack.c.b16 %v1662, %v1661
        %v1705 = vpack.c.b16 %v1664, %v1663
        %v1706 = vpack.c.b16 %v1666, %v1665
        %v1707 = vpack.c.b16 %v1668, %v1667
        %v1708 = vpack.c.b16 %v1670, %v1669
        %v1709 = vpack.c.b16 %v1672, %v1671
        %v1710 = vpack.c.b16 %v1674, %v1673
        %v1711 = vpack.c.b16 %v1676, %v1675
        %v1712 = vpack.c.b16 %v1678, %v1677
        %v1713 = vpack.c.b16 %v1680, %v1679
        %v1714 = vpack.c.b16 %v1682, %v1681
        %v1715 = vpack.c.b16 %v1684, %v1683
        %v1716 = vpack.c.b16 %v1686, %v1685
        %v1717 = vpack.c.b16 %v1688, %v1687
        %v1718 = vpack.c.b16 %v1690, %v1689
        %v1719 = vpack.c.b16 %v1692, %v1691
        %v1720 = vpack.c.b16 %v1694, %v1693
        %v1721 = vpack.c.b16 %v1696, %v1695
        %v1722 = vpack.c.b16 %v1698, %v1697
        %1747 = vmatpush.bf16.msra.mxu0 %v1706
        %1748 = vmatpush.bf16.msra.mxu0 %v1705
        %1749 = vmatpush.bf16.msra.mxu0 %v1704
        %1750 = vmatpush.bf16.msra.mxu0 %v1703
        %1751 = vmatpush.bf16.msra.mxu0 %v1702
        %1752 = vmatpush.bf16.msra.mxu0 %v1701
        %1753 = vmatpush.bf16.msra.mxu0 %v1700
        %1754 = vmatpush.bf16.msra.mxu0 %v1699
        %1755 = vmatmul.bf16.gmra.mxu0 %v1507
        %v1756 = vpop.f32.mrf.mxu0
        %v1757 = vadd.f32 0.0, %v1756
        %v1758 = vpop.f32.mrf.mxu0
        %v1759 = vadd.f32 0.0, %v1758
        %1760 = vmatmul.bf16.gmra.mxu0 %v1510
        %v1761 = vpop.f32.mrf.mxu0
        %v1762 = vadd.f32 0.0, %v1761
        %v1763 = vpop.f32.mrf.mxu0
        %v1764 = vadd.f32 0.0, %v1763
        %1765 = vmatmul.bf16.gmra.mxu0 %v1513
        %v1766 = vpop.f32.mrf.mxu0
        %v1767 = vadd.f32 0.0, %v1766
        %v1768 = vpop.f32.mrf.mxu0
        %v1769 = vadd.f32 0.0, %v1768
        %1770 = vmatmul.bf16.gmra.mxu0 %v1516
        %v1771 = vpop.f32.mrf.mxu0
        %v1772 = vadd.f32 0.0, %v1771
        %v1773 = vpop.f32.mrf.mxu0
        %v1774 = vadd.f32 0.0, %v1773
        %1775 = vmatmul.bf16.gmra.mxu0 %v1519
        %v1776 = vpop.f32.mrf.mxu0
        %v1777 = vadd.f32 0.0, %v1776
        %v1778 = vpop.f32.mrf.mxu0
        %v1779 = vadd.f32 0.0, %v1778
        %1780 = vmatmul.bf16.gmra.mxu0 %v1522
        %v1781 = vpop.f32.mrf.mxu0
        %v1782 = vadd.f32 0.0, %v1781
        %v1783 = vpop.f32.mrf.mxu0
        %v1784 = vadd.f32 0.0, %v1783
        %1785 = vmatmul.bf16.gmra.mxu0 %v1525
        %v1786 = vpop.f32.mrf.mxu0
        %v1787 = vadd.f32 0.0, %v1786
        %v1788 = vpop.f32.mrf.mxu0
        %v1789 = vadd.f32 0.0, %v1788
        %1790 = vmatmul.bf16.gmra.mxu0 %v1528
        %v1791 = vpop.f32.mrf.mxu0
        %v1792 = vadd.f32 0.0, %v1791
        %v1793 = vpop.f32.mrf.mxu0
        %v1794 = vadd.f32 0.0, %v1793
        %1795 = vmatmul.bf16.gmra.mxu0 %v1531
        %v1796 = vpop.f32.mrf.mxu0
        %v1797 = vadd.f32 0.0, %v1796
        %v1798 = vpop.f32.mrf.mxu0
        %v1799 = vadd.f32 0.0, %v1798
        %1800 = vmatmul.bf16.gmra.mxu0 %v1534
        %v1801 = vpop.f32.mrf.mxu0
        %v1802 = vadd.f32 0.0, %v1801
        %v1803 = vpop.f32.mrf.mxu0
        %v1804 = vadd.f32 0.0, %v1803
        %1805 = vmatmul.bf16.gmra.mxu0 %v1537
        %v1806 = vpop.f32.mrf.mxu0
        %v1807 = vadd.f32 0.0, %v1806
        %v1808 = vpop.f32.mrf.mxu0
        %v1809 = vadd.f32 0.0, %v1808
        %1810 = vmatmul.bf16.gmra.mxu0 %v1540
        %v1811 = vpop.f32.mrf.mxu0
        %v1812 = vadd.f32 0.0, %v1811
        %v1813 = vpop.f32.mrf.mxu0
        %v1814 = vadd.f32 0.0, %v1813
        %1815 = vmatmul.bf16.gmra.mxu0 %v1543
        %v1816 = vpop.f32.mrf.mxu0
        %v1817 = vadd.f32 0.0, %v1816
        %v1818 = vpop.f32.mrf.mxu0
        %v1819 = vadd.f32 0.0, %v1818
        %1820 = vmatmul.bf16.gmra.mxu0 %v1546
        %v1821 = vpop.f32.mrf.mxu0
        %v1822 = vadd.f32 0.0, %v1821
        %v1823 = vpop.f32.mrf.mxu0
        %v1824 = vadd.f32 0.0, %v1823
        %1825 = vmatmul.bf16.gmra.mxu0 %v1549
        %v1826 = vpop.f32.mrf.mxu0
        %v1827 = vadd.f32 0.0, %v1826
        %v1828 = vpop.f32.mrf.mxu0
        %v1829 = vadd.f32 0.0, %v1828
        %1830 = vmatmul.bf16.gmra.mxu0 %v1552
        %v1831 = vpop.f32.mrf.mxu0
        %v1832 = vadd.f32 0.0, %v1831
        %v1833 = vpop.f32.mrf.mxu0
        %v1834 = vadd.f32 0.0, %v1833
        %1835 = vdwg.mxu0
        %1836 = vmatpush.bf16.msra.mxu0 %v1714
        %1837 = vmatpush.bf16.msra.mxu0 %v1713
        %1838 = vmatpush.bf16.msra.mxu0 %v1712
        %1839 = vmatpush.bf16.msra.mxu0 %v1711
        %1840 = vmatpush.bf16.msra.mxu0 %v1710
        %1841 = vmatpush.bf16.msra.mxu0 %v1709
        %1842 = vmatpush.bf16.msra.mxu0 %v1708
        %1843 = vmatpush.bf16.msra.mxu0 %v1707
        %1844 = vmatmul.bf16.gmra.mxu0 %v1508
        %v1845 = vpop.f32.mrf.mxu0
        %v1846 = vadd.f32 %v1757, %v1845
        %v1847 = vpop.f32.mrf.mxu0
        %v1848 = vadd.f32 %v1759, %v1847
        %1849 = vmatmul.bf16.gmra.mxu0 %v1511
        %v1850 = vpop.f32.mrf.mxu0
        %v1851 = vadd.f32 %v1762, %v1850
        %v1852 = vpop.f32.mrf.mxu0
        %v1853 = vadd.f32 %v1764, %v1852
        %1854 = vmatmul.bf16.gmra.mxu0 %v1514
        %v1855 = vpop.f32.mrf.mxu0
        %v1856 = vadd.f32 %v1767, %v1855
        %v1857 = vpop.f32.mrf.mxu0
        %v1858 = vadd.f32 %v1769, %v1857
        %1859 = vmatmul.bf16.gmra.mxu0 %v1517
        %v1860 = vpop.f32.mrf.mxu0
        %v1861 = vadd.f32 %v1772, %v1860
        %v1862 = vpop.f32.mrf.mxu0
        %v1863 = vadd.f32 %v1774, %v1862
        %1864 = vmatmul.bf16.gmra.mxu0 %v1520
        %v1865 = vpop.f32.mrf.mxu0
        %v1866 = vadd.f32 %v1777, %v1865
        %v1867 = vpop.f32.mrf.mxu0
        %v1868 = vadd.f32 %v1779, %v1867
        %1869 = vmatmul.bf16.gmra.mxu0 %v1523
        %v1870 = vpop.f32.mrf.mxu0
        %v1871 = vadd.f32 %v1782, %v1870
        %v1872 = vpop.f32.mrf.mxu0
        %v1873 = vadd.f32 %v1784, %v1872
        %1874 = vmatmul.bf16.gmra.mxu0 %v1526
        %v1875 = vpop.f32.mrf.mxu0
        %v1876 = vadd.f32 %v1787, %v1875
        %v1877 = vpop.f32.mrf.mxu0
        %v1878 = vadd.f32 %v1789, %v1877
        %1879 = vmatmul.bf16.gmra.mxu0 %v1529
        %v1880 = vpop.f32.mrf.mxu0
        %v1881 = vadd.f32 %v1792, %v1880
        %v1882 = vpop.f32.mrf.mxu0
        %v1883 = vadd.f32 %v1794, %v1882
        %1884 = vmatmul.bf16.gmra.mxu0 %v1532
        %v1885 = vpop.f32.mrf.mxu0
        %v1886 = vadd.f32 %v1797, %v1885
        %v1887 = vpop.f32.mrf.mxu0
        %v1888 = vadd.f32 %v1799, %v1887
        %1889 = vmatmul.bf16.gmra.mxu0 %v1535
        %v1890 = vpop.f32.mrf.mxu0
        %v1891 = vadd.f32 %v1802, %v1890
        %v1892 = vpop.f32.mrf.mxu0
        %v1893 = vadd.f32 %v1804, %v1892
        %1894 = vmatmul.bf16.gmra.mxu0 %v1538
        %v1895 = vpop.f32.mrf.mxu0
        %v1896 = vadd.f32 %v1807, %v1895
        %v1897 = vpop.f32.mrf.mxu0
        %v1898 = vadd.f32 %v1809, %v1897
        %1899 = vmatmul.bf16.gmra.mxu0 %v1541
        %v1900 = vpop.f32.mrf.mxu0
        %v1901 = vadd.f32 %v1812, %v1900
        %v1902 = vpop.f32.mrf.mxu0
        %v1903 = vadd.f32 %v1814, %v1902
        %1904 = vmatmul.bf16.gmra.mxu0 %v1544
        %v1905 = vpop.f32.mrf.mxu0
        %v1906 = vadd.f32 %v1817, %v1905
        %v1907 = vpop.f32.mrf.mxu0
        %v1908 = vadd.f32 %v1819, %v1907
        %1909 = vmatmul.bf16.gmra.mxu0 %v1547
        %v1910 = vpop.f32.mrf.mxu0
        %v1911 = vadd.f32 %v1822, %v1910
        %v1912 = vpop.f32.mrf.mxu0
        %v1913 = vadd.f32 %v1824, %v1912
        %1914 = vmatmul.bf16.gmra.mxu0 %v1550
        %v1915 = vpop.f32.mrf.mxu0
        %v1916 = vadd.f32 %v1827, %v1915
        %v1917 = vpop.f32.mrf.mxu0
        %v1918 = vadd.f32 %v1829, %v1917
        %1919 = vmatmul.bf16.gmra.mxu0 %v1553
        %v1920 = vpop.f32.mrf.mxu0
        %v1921 = vadd.f32 %v1832, %v1920
        %v1922 = vpop.f32.mrf.mxu0
        %v1923 = vadd.f32 %v1834, %v1922
        %1924 = vdwg.mxu0
        %1925 = vmatpush.bf16.msra.mxu0 %v1722
        %1926 = vmatpush.bf16.msra.mxu0 %v1721
        %1927 = vmatpush.bf16.msra.mxu0 %v1720
        %1928 = vmatpush.bf16.msra.mxu0 %v1719
        %1929 = vmatpush.bf16.msra.mxu0 %v1718
        %1930 = vmatpush.bf16.msra.mxu0 %v1717
        %1931 = vmatpush.bf16.msra.mxu0 %v1716
        %1932 = vmatpush.bf16.msra.mxu0 %v1715
        %1933 = vmatmul.bf16.gmra.mxu0 %v1509
        %v1934 = vpop.f32.mrf.mxu0
        %v1935 = vadd.f32 %v1846, %v1934
        %v1936 = vpop.f32.mrf.mxu0
        %v1937 = vadd.f32 %v1848, %v1936
        %1938 = vmatmul.bf16.gmra.mxu0 %v1512
        %v1939 = vpop.f32.mrf.mxu0
        %v1940 = vadd.f32 %v1851, %v1939
        %v1941 = vpop.f32.mrf.mxu0
        %v1942 = vadd.f32 %v1853, %v1941
        %1943 = vmatmul.bf16.gmra.mxu0 %v1515
        %v1944 = vpop.f32.mrf.mxu0
        %v1945 = vadd.f32 %v1856, %v1944
        %v1946 = vpop.f32.mrf.mxu0
        %v1947 = vadd.f32 %v1858, %v1946
        %1948 = vmatmul.bf16.gmra.mxu0 %v1518
        %v1949 = vpop.f32.mrf.mxu0
        %v1950 = vadd.f32 %v1861, %v1949
        %v1951 = vpop.f32.mrf.mxu0
        %v1952 = vadd.f32 %v1863, %v1951
        %1953 = vmatmul.bf16.gmra.mxu0 %v1521
        %v1954 = vpop.f32.mrf.mxu0
        %v1955 = vadd.f32 %v1866, %v1954
        %v1956 = vpop.f32.mrf.mxu0
        %v1957 = vadd.f32 %v1868, %v1956
        %1958 = vmatmul.bf16.gmra.mxu0 %v1524
        %v1959 = vpop.f32.mrf.mxu0
        %v1960 = vadd.f32 %v1871, %v1959
        %v1961 = vpop.f32.mrf.mxu0
        %v1962 = vadd.f32 %v1873, %v1961
        %1963 = vmatmul.bf16.gmra.mxu0 %v1527
        %v1964 = vpop.f32.mrf.mxu0
        %v1965 = vadd.f32 %v1876, %v1964
        %v1966 = vpop.f32.mrf.mxu0
        %v1967 = vadd.f32 %v1878, %v1966
        %1968 = vmatmul.bf16.gmra.mxu0 %v1530
        %v1969 = vpop.f32.mrf.mxu0
        %v1970 = vadd.f32 %v1881, %v1969
        %v1971 = vpop.f32.mrf.mxu0
        %v1972 = vadd.f32 %v1883, %v1971
        %1973 = vmatmul.bf16.gmra.mxu0 %v1533
        %v1974 = vpop.f32.mrf.mxu0
        %v1975 = vadd.f32 %v1886, %v1974
        %v1976 = vpop.f32.mrf.mxu0
        %v1977 = vadd.f32 %v1888, %v1976
        %1978 = vmatmul.bf16.gmra.mxu0 %v1536
        %v1979 = vpop.f32.mrf.mxu0
        %v1980 = vadd.f32 %v1891, %v1979
        %v1981 = vpop.f32.mrf.mxu0
        %v1982 = vadd.f32 %v1893, %v1981
        %1983 = vmatmul.bf16.gmra.mxu0 %v1539
        %v1984 = vpop.f32.mrf.mxu0
        %v1985 = vadd.f32 %v1896, %v1984
        %v1986 = vpop.f32.mrf.mxu0
        %v1987 = vadd.f32 %v1898, %v1986
        %1988 = vmatmul.bf16.gmra.mxu0 %v1542
        %v1989 = vpop.f32.mrf.mxu0
        %v1990 = vadd.f32 %v1901, %v1989
        %v1991 = vpop.f32.mrf.mxu0
        %v1992 = vadd.f32 %v1903, %v1991
        %1993 = vmatmul.bf16.gmra.mxu0 %v1545
        %v1994 = vpop.f32.mrf.mxu0
        %v1995 = vadd.f32 %v1906, %v1994
        %v1996 = vpop.f32.mrf.mxu0
        %v1997 = vadd.f32 %v1908, %v1996
        %1998 = vmatmul.bf16.gmra.mxu0 %v1548
        %v1999 = vpop.f32.mrf.mxu0
        %v2000 = vadd.f32 %v1911, %v1999
        %v2001 = vpop.f32.mrf.mxu0
        %v2002 = vadd.f32 %v1913, %v2001
        %2003 = vmatmul.bf16.gmra.mxu0 %v1551
        %v2004 = vpop.f32.mrf.mxu0
        %v2005 = vadd.f32 %v1916, %v2004
        %v2006 = vpop.f32.mrf.mxu0
        %v2007 = vadd.f32 %v1918, %v2006
        %2008 = vmatmul.bf16.gmra.mxu0 %v1554
        %v2009 = vpop.f32.mrf.mxu0
        %v2010 = vadd.f32 %v1921, %v2009
        %v2011 = vpop.f32.mrf.mxu0
        %v2012 = vadd.f32 %v1923, %v2011
        %2013 = vdwg.mxu0
        %v2078 = vunpack.c.l.b16 %v1122
        %v2079 = vunpack.c.h.b16 %v1122
        %v2080 = vunpack.c.l.b16 %v1123
        %v2081 = vunpack.c.l.b16 %v1124
        %v2082 = vunpack.c.h.b16 %v1124
        %v2083 = vunpack.c.l.b16 %v1125
        %v2084 = vunpack.c.l.b16 %v1126
        %v2085 = vunpack.c.h.b16 %v1126
        %v2086 = vunpack.c.l.b16 %v1127
        %v2087 = vunpack.c.l.b16 %v1128
        %v2088 = vunpack.c.h.b16 %v1128
        %v2089 = vunpack.c.l.b16 %v1129
        %v2090 = vunpack.c.l.b16 %v1130
        %v2091 = vunpack.c.h.b16 %v1130
        %v2092 = vunpack.c.l.b16 %v1131
        %v2093 = vunpack.c.l.b16 %v1132
        %v2094 = vunpack.c.h.b16 %v1132
        %v2095 = vunpack.c.l.b16 %v1133
        %v2096 = vunpack.c.l.b16 %v1134
        %v2097 = vunpack.c.h.b16 %v1134
        %v2098 = vunpack.c.l.b16 %v1135
        %v2099 = vunpack.c.l.b16 %v1136
        %v2100 = vunpack.c.h.b16 %v1136
        %v2101 = vunpack.c.l.b16 %v1137
        %v2102 = vunpack.c.l.b16 %v1138
        %v2103 = vunpack.c.h.b16 %v1138
        %v2104 = vunpack.c.l.b16 %v1139
        %v2105 = vunpack.c.l.b16 %v1140
        %v2106 = vunpack.c.h.b16 %v1140
        %v2107 = vunpack.c.l.b16 %v1141
        %v2108 = vunpack.c.l.b16 %v1142
        %v2109 = vunpack.c.h.b16 %v1142
        %v2110 = vunpack.c.l.b16 %v1143
        %v2111 = vunpack.c.l.b16 %v1144
        %v2112 = vunpack.c.h.b16 %v1144
        %v2113 = vunpack.c.l.b16 %v1145
        %v2114 = vunpack.c.l.b16 %v1146
        %v2115 = vunpack.c.h.b16 %v1146
        %v2116 = vunpack.c.l.b16 %v1147
        %v2117 = vunpack.c.l.b16 %v1148
        %v2118 = vunpack.c.h.b16 %v1148
        %v2119 = vunpack.c.l.b16 %v1149
        %v2120 = vunpack.c.l.b16 %v1150
        %v2121 = vunpack.c.h.b16 %v1150
        %v2122 = vunpack.c.l.b16 %v1151
        %v2123 = vunpack.c.l.b16 %v1152
        %v2124 = vunpack.c.h.b16 %v1152
        %v2125 = vunpack.c.l.b16 %v1153
        %v2126 = vunpack.c.l.b16 %v1154
        %v2127 = vunpack.c.h.b16 %v1154
        %v2128 = vunpack.c.l.b16 %v1155
        %v2129 = vunpack.c.l.b16 %v1156
        %v2130 = vunpack.c.h.b16 %v1156
        %v2131 = vunpack.c.l.b16 %v1157
        %v2132 = vunpack.c.l.b16 %v1158
        %v2133 = vunpack.c.h.b16 %v1158
        %v2134 = vunpack.c.l.b16 %v1159
        %v2135 = vunpack.c.l.b16 %v1160
        %v2136 = vunpack.c.h.b16 %v1160
        %v2137 = vunpack.c.l.b16 %v1161
        %v2138 = vunpack.c.l.b16 %v1162
        %v2139 = vunpack.c.h.b16 %v1162
        %v2140 = vunpack.c.l.b16 %v1163
        %v2141 = vunpack.c.l.b16 %v1164
        %v2142 = vunpack.c.h.b16 %v1164
        %v2143 = vunpack.c.l.b16 %v1165
        %v2144 = vunpack.c.l.b16 %v1166
        %v2145 = vunpack.c.h.b16 %v1166
        %v2146 = vunpack.c.l.b16 %v1167
        %v2147 = vunpack.c.l.b16 %v1168
        %v2148 = vunpack.c.h.b16 %v1168
        %v2149 = vunpack.c.l.b16 %v1169
        %v2150 = vunpack.c.l.b16 %v1170
        %v2151 = vunpack.c.h.b16 %v1170
        %v2152 = vunpack.c.l.b16 %v1171
        %v2153 = vunpack.c.l.b16 %v1172
        %v2154 = vunpack.c.h.b16 %v1172
        %v2155 = vunpack.c.l.b16 %v1173
        %v2156 = vunpack.c.l.b16 %v1174
        %v2157 = vunpack.c.h.b16 %v1174
        %v2158 = vunpack.c.l.b16 %v1175
        %v2159 = vunpack.c.l.b16 %v1176
        %v2160 = vunpack.c.h.b16 %v1176
        %v2161 = vunpack.c.l.b16 %v1177
        %v2162 = vunpack.c.l.b16 %v1178
        %v2163 = vunpack.c.h.b16 %v1178
        %v2164 = vunpack.c.l.b16 %v1179
        %v2165 = vunpack.c.l.b16 %v1180
        %v2166 = vunpack.c.h.b16 %v1180
        %v2167 = vunpack.c.l.b16 %v1181
        %v2168 = vunpack.c.l.b16 %v1182
        %v2169 = vunpack.c.h.b16 %v1182
        %v2170 = vunpack.c.l.b16 %v1183
        %v2171 = vunpack.c.l.b16 %v1184
        %v2172 = vunpack.c.h.b16 %v1184
        %v2173 = vunpack.c.l.b16 %v1185
        %v2174 = vpack.c.b16 %v2081, %v2078
        %v2175 = vpack.c.b16 %v2082, %v2079
        %v2176 = vpack.c.b16 %v2083, %v2080
        %v2177 = vpack.c.b16 %v2087, %v2084
        %v2178 = vpack.c.b16 %v2088, %v2085
        %v2179 = vpack.c.b16 %v2089, %v2086
        %v2180 = vpack.c.b16 %v2093, %v2090
        %v2181 = vpack.c.b16 %v2094, %v2091
        %v2182 = vpack.c.b16 %v2095, %v2092
        %v2183 = vpack.c.b16 %v2099, %v2096
        %v2184 = vpack.c.b16 %v2100, %v2097
        %v2185 = vpack.c.b16 %v2101, %v2098
        %v2186 = vpack.c.b16 %v2105, %v2102
        %v2187 = vpack.c.b16 %v2106, %v2103
        %v2188 = vpack.c.b16 %v2107, %v2104
        %v2189 = vpack.c.b16 %v2111, %v2108
        %v2190 = vpack.c.b16 %v2112, %v2109
        %v2191 = vpack.c.b16 %v2113, %v2110
        %v2192 = vpack.c.b16 %v2117, %v2114
        %v2193 = vpack.c.b16 %v2118, %v2115
        %v2194 = vpack.c.b16 %v2119, %v2116
        %v2195 = vpack.c.b16 %v2123, %v2120
        %v2196 = vpack.c.b16 %v2124, %v2121
        %v2197 = vpack.c.b16 %v2125, %v2122
        %v2198 = vpack.c.b16 %v2129, %v2126
        %v2199 = vpack.c.b16 %v2130, %v2127
        %v2200 = vpack.c.b16 %v2131, %v2128
        %v2201 = vpack.c.b16 %v2135, %v2132
        %v2202 = vpack.c.b16 %v2136, %v2133
        %v2203 = vpack.c.b16 %v2137, %v2134
        %v2204 = vpack.c.b16 %v2141, %v2138
        %v2205 = vpack.c.b16 %v2142, %v2139
        %v2206 = vpack.c.b16 %v2143, %v2140
        %v2207 = vpack.c.b16 %v2147, %v2144
        %v2208 = vpack.c.b16 %v2148, %v2145
        %v2209 = vpack.c.b16 %v2149, %v2146
        %v2210 = vpack.c.b16 %v2153, %v2150
        %v2211 = vpack.c.b16 %v2154, %v2151
        %v2212 = vpack.c.b16 %v2155, %v2152
        %v2213 = vpack.c.b16 %v2159, %v2156
        %v2214 = vpack.c.b16 %v2160, %v2157
        %v2215 = vpack.c.b16 %v2161, %v2158
        %v2216 = vpack.c.b16 %v2165, %v2162
        %v2217 = vpack.c.b16 %v2166, %v2163
        %v2218 = vpack.c.b16 %v2167, %v2164
        %v2219 = vpack.c.b16 %v2171, %v2168
        %v2220 = vpack.c.b16 %v2172, %v2169
        %v2221 = vpack.c.b16 %v2173, %v2170
        %v2318 = vunpack.c.l.b16 %v1186
        %v2319 = vunpack.c.l.b16 %v1187
        %v2320 = vunpack.c.l.b16 %v1188
        %v2321 = vunpack.c.l.b16 %v1189
        %v2322 = vunpack.c.l.b16 %v1190
        %v2323 = vunpack.c.l.b16 %v1191
        %v2324 = vunpack.c.l.b16 %v1192
        %v2325 = vunpack.c.l.b16 %v1193
        %v2326 = vunpack.c.l.b16 %v1194
        %v2327 = vunpack.c.l.b16 %v1195
        %v2328 = vunpack.c.l.b16 %v1196
        %v2329 = vunpack.c.l.b16 %v1197
        %v2330 = vunpack.c.l.b16 %v1198
        %v2331 = vunpack.c.l.b16 %v1199
        %v2332 = vunpack.c.l.b16 %v1200
        %v2333 = vunpack.c.l.b16 %v1201
        %v2334 = vunpack.c.l.b16 %v1202
        %v2335 = vunpack.c.l.b16 %v1203
        %v2336 = vunpack.c.l.b16 %v1204
        %v2337 = vunpack.c.l.b16 %v1205
        %v2338 = vunpack.c.l.b16 %v1206
        %v2339 = vunpack.c.l.b16 %v1207
        %v2340 = vunpack.c.l.b16 %v1208
        %v2341 = vunpack.c.l.b16 %v1209
        %v2342 = vunpack.c.l.b16 %v1210
        %v2343 = vunpack.c.l.b16 %v1211
        %v2344 = vunpack.c.l.b16 %v1212
        %v2345 = vunpack.c.l.b16 %v1213
        %v2346 = vunpack.c.l.b16 %v1214
        %v2347 = vunpack.c.l.b16 %v1215
        %v2348 = vunpack.c.l.b16 %v1216
        %v2349 = vunpack.c.l.b16 %v1217
        %v2350 = vunpack.c.l.b16 %v1218
        %v2351 = vunpack.c.l.b16 %v1219
        %v2352 = vunpack.c.l.b16 %v1220
        %v2353 = vunpack.c.l.b16 %v1221
        %v2354 = vunpack.c.l.b16 %v1222
        %v2355 = vunpack.c.l.b16 %v1223
        %v2356 = vunpack.c.l.b16 %v1224
        %v2357 = vunpack.c.l.b16 %v1225
        %v2358 = vunpack.c.l.b16 %v1226
        %v2359 = vunpack.c.l.b16 %v1227
        %v2360 = vunpack.c.l.b16 %v1228
        %v2361 = vunpack.c.l.b16 %v1229
        %v2362 = vunpack.c.l.b16 %v1230
        %v2363 = vunpack.c.l.b16 %v1231
        %v2364 = vunpack.c.l.b16 %v1232
        %v2365 = vunpack.c.l.b16 %v1233
        %v2366 = vpack.c.b16 %v2319, %v2318
        %v2367 = vpack.c.b16 %v2321, %v2320
        %v2368 = vpack.c.b16 %v2323, %v2322
        %v2369 = vpack.c.b16 %v2325, %v2324
        %v2370 = vpack.c.b16 %v2327, %v2326
        %v2371 = vpack.c.b16 %v2329, %v2328
        %v2372 = vpack.c.b16 %v2331, %v2330
        %v2373 = vpack.c.b16 %v2333, %v2332
        %v2374 = vpack.c.b16 %v2335, %v2334
        %v2375 = vpack.c.b16 %v2337, %v2336
        %v2376 = vpack.c.b16 %v2339, %v2338
        %v2377 = vpack.c.b16 %v2341, %v2340
        %v2378 = vpack.c.b16 %v2343, %v2342
        %v2379 = vpack.c.b16 %v2345, %v2344
        %v2380 = vpack.c.b16 %v2347, %v2346
        %v2381 = vpack.c.b16 %v2349, %v2348
        %v2382 = vpack.c.b16 %v2351, %v2350
        %v2383 = vpack.c.b16 %v2353, %v2352
        %v2384 = vpack.c.b16 %v2355, %v2354
        %v2385 = vpack.c.b16 %v2357, %v2356
        %v2386 = vpack.c.b16 %v2359, %v2358
        %v2387 = vpack.c.b16 %v2361, %v2360
        %v2388 = vpack.c.b16 %v2363, %v2362
        %v2389 = vpack.c.b16 %v2365, %v2364
        %2414 = vmatpush.bf16.msra.mxu0 %v2373
        %2415 = vmatpush.bf16.msra.mxu0 %v2372
        %2416 = vmatpush.bf16.msra.mxu0 %v2371
        %2417 = vmatpush.bf16.msra.mxu0 %v2370
        %2418 = vmatpush.bf16.msra.mxu0 %v2369
        %2419 = vmatpush.bf16.msra.mxu0 %v2368
        %2420 = vmatpush.bf16.msra.mxu0 %v2367
        %2421 = vmatpush.bf16.msra.mxu0 %v2366
        %2422 = vmatmul.bf16.gmra.mxu0 %v2174
        %v2423 = vpop.f32.mrf.mxu0
        %v2424 = vadd.f32 %v1935, %v2423
        %v2425 = vpop.f32.mrf.mxu0
        %v2426 = vadd.f32 %v1937, %v2425
        %2427 = vmatmul.bf16.gmra.mxu0 %v2177
        %v2428 = vpop.f32.mrf.mxu0
        %v2429 = vadd.f32 %v1940, %v2428
        %v2430 = vpop.f32.mrf.mxu0
        %v2431 = vadd.f32 %v1942, %v2430
        %2432 = vmatmul.bf16.gmra.mxu0 %v2180
        %v2433 = vpop.f32.mrf.mxu0
        %v2434 = vadd.f32 %v1945, %v2433
        %v2435 = vpop.f32.mrf.mxu0
        %v2436 = vadd.f32 %v1947, %v2435
        %2437 = vmatmul.bf16.gmra.mxu0 %v2183
        %v2438 = vpop.f32.mrf.mxu0
        %v2439 = vadd.f32 %v1950, %v2438
        %v2440 = vpop.f32.mrf.mxu0
        %v2441 = vadd.f32 %v1952, %v2440
        %2442 = vmatmul.bf16.gmra.mxu0 %v2186
        %v2443 = vpop.f32.mrf.mxu0
        %v2444 = vadd.f32 %v1955, %v2443
        %v2445 = vpop.f32.mrf.mxu0
        %v2446 = vadd.f32 %v1957, %v2445
        %2447 = vmatmul.bf16.gmra.mxu0 %v2189
        %v2448 = vpop.f32.mrf.mxu0
        %v2449 = vadd.f32 %v1960, %v2448
        %v2450 = vpop.f32.mrf.mxu0
        %v2451 = vadd.f32 %v1962, %v2450
        %2452 = vmatmul.bf16.gmra.mxu0 %v2192
        %v2453 = vpop.f32.mrf.mxu0
        %v2454 = vadd.f32 %v1965, %v2453
        %v2455 = vpop.f32.mrf.mxu0
        %v2456 = vadd.f32 %v1967, %v2455
        %2457 = vmatmul.bf16.gmra.mxu0 %v2195
        %v2458 = vpop.f32.mrf.mxu0
        %v2459 = vadd.f32 %v1970, %v2458
        %v2460 = vpop.f32.mrf.mxu0
        %v2461 = vadd.f32 %v1972, %v2460
        %2462 = vmatmul.bf16.gmra.mxu0 %v2198
        %v2463 = vpop.f32.mrf.mxu0
        %v2464 = vadd.f32 %v1975, %v2463
        %v2465 = vpop.f32.mrf.mxu0
        %v2466 = vadd.f32 %v1977, %v2465
        %2467 = vmatmul.bf16.gmra.mxu0 %v2201
        %v2468 = vpop.f32.mrf.mxu0
        %v2469 = vadd.f32 %v1980, %v2468
        %v2470 = vpop.f32.mrf.mxu0
        %v2471 = vadd.f32 %v1982, %v2470
        %2472 = vmatmul.bf16.gmra.mxu0 %v2204
        %v2473 = vpop.f32.mrf.mxu0
        %v2474 = vadd.f32 %v1985, %v2473
        %v2475 = vpop.f32.mrf.mxu0
        %v2476 = vadd.f32 %v1987, %v2475
        %2477 = vmatmul.bf16.gmra.mxu0 %v2207
        %v2478 = vpop.f32.mrf.mxu0
        %v2479 = vadd.f32 %v1990, %v2478
        %v2480 = vpop.f32.mrf.mxu0
        %v2481 = vadd.f32 %v1992, %v2480
        %2482 = vmatmul.bf16.gmra.mxu0 %v2210
        %v2483 = vpop.f32.mrf.mxu0
        %v2484 = vadd.f32 %v1995, %v2483
        %v2485 = vpop.f32.mrf.mxu0
        %v2486 = vadd.f32 %v1997, %v2485
        %2487 = vmatmul.bf16.gmra.mxu0 %v2213
        %v2488 = vpop.f32.mrf.mxu0
        %v2489 = vadd.f32 %v2000, %v2488
        %v2490 = vpop.f32.mrf.mxu0
        %v2491 = vadd.f32 %v2002, %v2490
        %2492 = vmatmul.bf16.gmra.mxu0 %v2216
        %v2493 = vpop.f32.mrf.mxu0
        %v2494 = vadd.f32 %v2005, %v2493
        %v2495 = vpop.f32.mrf.mxu0
        %v2496 = vadd.f32 %v2007, %v2495
        %2497 = vmatmul.bf16.gmra.mxu0 %v2219
        %v2498 = vpop.f32.mrf.mxu0
        %v2499 = vadd.f32 %v2010, %v2498
        %v2500 = vpop.f32.mrf.mxu0
        %v2501 = vadd.f32 %v2012, %v2500
        %2502 = vdwg.mxu0
        %2503 = vmatpush.bf16.msra.mxu0 %v2381
        %2504 = vmatpush.bf16.msra.mxu0 %v2380
        %2505 = vmatpush.bf16.msra.mxu0 %v2379
        %2506 = vmatpush.bf16.msra.mxu0 %v2378
        %2507 = vmatpush.bf16.msra.mxu0 %v2377
        %2508 = vmatpush.bf16.msra.mxu0 %v2376
        %2509 = vmatpush.bf16.msra.mxu0 %v2375
        %2510 = vmatpush.bf16.msra.mxu0 %v2374
        %2511 = vmatmul.bf16.gmra.mxu0 %v2175
        %v2512 = vpop.f32.mrf.mxu0
        %v2513 = vadd.f32 %v2424, %v2512
        %v2514 = vpop.f32.mrf.mxu0
        %v2515 = vadd.f32 %v2426, %v2514
        %2516 = vmatmul.bf16.gmra.mxu0 %v2178
        %v2517 = vpop.f32.mrf.mxu0
        %v2518 = vadd.f32 %v2429, %v2517
        %v2519 = vpop.f32.mrf.mxu0
        %v2520 = vadd.f32 %v2431, %v2519
        %2521 = vmatmul.bf16.gmra.mxu0 %v2181
        %v2522 = vpop.f32.mrf.mxu0
        %v2523 = vadd.f32 %v2434, %v2522
        %v2524 = vpop.f32.mrf.mxu0
        %v2525 = vadd.f32 %v2436, %v2524
        %2526 = vmatmul.bf16.gmra.mxu0 %v2184
        %v2527 = vpop.f32.mrf.mxu0
        %v2528 = vadd.f32 %v2439, %v2527
        %v2529 = vpop.f32.mrf.mxu0
        %v2530 = vadd.f32 %v2441, %v2529
        %2531 = vmatmul.bf16.gmra.mxu0 %v2187
        %v2532 = vpop.f32.mrf.mxu0
        %v2533 = vadd.f32 %v2444, %v2532
        %v2534 = vpop.f32.mrf.mxu0
        %v2535 = vadd.f32 %v2446, %v2534
        %2536 = vmatmul.bf16.gmra.mxu0 %v2190
        %v2537 = vpop.f32.mrf.mxu0
        %v2538 = vadd.f32 %v2449, %v2537
        %v2539 = vpop.f32.mrf.mxu0
        %v2540 = vadd.f32 %v2451, %v2539
        %2541 = vmatmul.bf16.gmra.mxu0 %v2193
        %v2542 = vpop.f32.mrf.mxu0
        %v2543 = vadd.f32 %v2454, %v2542
        %v2544 = vpop.f32.mrf.mxu0
        %v2545 = vadd.f32 %v2456, %v2544
        %2546 = vmatmul.bf16.gmra.mxu0 %v2196
        %v2547 = vpop.f32.mrf.mxu0
        %v2548 = vadd.f32 %v2459, %v2547
        %v2549 = vpop.f32.mrf.mxu0
        %v2550 = vadd.f32 %v2461, %v2549
        %2551 = vmatmul.bf16.gmra.mxu0 %v2199
        %v2552 = vpop.f32.mrf.mxu0
        %v2553 = vadd.f32 %v2464, %v2552
        %v2554 = vpop.f32.mrf.mxu0
        %v2555 = vadd.f32 %v2466, %v2554
        %2556 = vmatmul.bf16.gmra.mxu0 %v2202
        %v2557 = vpop.f32.mrf.mxu0
        %v2558 = vadd.f32 %v2469, %v2557
        %v2559 = vpop.f32.mrf.mxu0
        %v2560 = vadd.f32 %v2471, %v2559
        %2561 = vmatmul.bf16.gmra.mxu0 %v2205
        %v2562 = vpop.f32.mrf.mxu0
        %v2563 = vadd.f32 %v2474, %v2562
        %v2564 = vpop.f32.mrf.mxu0
        %v2565 = vadd.f32 %v2476, %v2564
        %2566 = vmatmul.bf16.gmra.mxu0 %v2208
        %v2567 = vpop.f32.mrf.mxu0
        %v2568 = vadd.f32 %v2479, %v2567
        %v2569 = vpop.f32.mrf.mxu0
        %v2570 = vadd.f32 %v2481, %v2569
        %2571 = vmatmul.bf16.gmra.mxu0 %v2211
        %v2572 = vpop.f32.mrf.mxu0
        %v2573 = vadd.f32 %v2484, %v2572
        %v2574 = vpop.f32.mrf.mxu0
        %v2575 = vadd.f32 %v2486, %v2574
        %2576 = vmatmul.bf16.gmra.mxu0 %v2214
        %v2577 = vpop.f32.mrf.mxu0
        %v2578 = vadd.f32 %v2489, %v2577
        %v2579 = vpop.f32.mrf.mxu0
        %v2580 = vadd.f32 %v2491, %v2579
        %2581 = vmatmul.bf16.gmra.mxu0 %v2217
        %v2582 = vpop.f32.mrf.mxu0
        %v2583 = vadd.f32 %v2494, %v2582
        %v2584 = vpop.f32.mrf.mxu0
        %v2585 = vadd.f32 %v2496, %v2584
        %2586 = vmatmul.bf16.gmra.mxu0 %v2220
        %v2587 = vpop.f32.mrf.mxu0
        %v2588 = vadd.f32 %v2499, %v2587
        %v2589 = vpop.f32.mrf.mxu0
        %v2590 = vadd.f32 %v2501, %v2589
        %2591 = vdwg.mxu0
        %2592 = vmatpush.bf16.msra.mxu0 %v2389
        %2593 = vmatpush.bf16.msra.mxu0 %v2388
        %2594 = vmatpush.bf16.msra.mxu0 %v2387
        %2595 = vmatpush.bf16.msra.mxu0 %v2386
        %2596 = vmatpush.bf16.msra.mxu0 %v2385
        %2597 = vmatpush.bf16.msra.mxu0 %v2384
        %2598 = vmatpush.bf16.msra.mxu0 %v2383
        %2599 = vmatpush.bf16.msra.mxu0 %v2382
        %2600 = vmatmul.bf16.gmra.mxu0 %v2176
        %v2601 = vpop.f32.mrf.mxu0
        %v2602 = vadd.f32 %v2513, %v2601
        %v2603 = vpop.f32.mrf.mxu0
        %v2604 = vadd.f32 %v2515, %v2603
        %2605 = vmatmul.bf16.gmra.mxu0 %v2179
        %v2606 = vpop.f32.mrf.mxu0
        %v2607 = vadd.f32 %v2518, %v2606
        %v2608 = vpop.f32.mrf.mxu0
        %v2609 = vadd.f32 %v2520, %v2608
        %2610 = vmatmul.bf16.gmra.mxu0 %v2182
        %v2611 = vpop.f32.mrf.mxu0
        %v2612 = vadd.f32 %v2523, %v2611
        %v2613 = vpop.f32.mrf.mxu0
        %v2614 = vadd.f32 %v2525, %v2613
        %2615 = vmatmul.bf16.gmra.mxu0 %v2185
        %v2616 = vpop.f32.mrf.mxu0
        %v2617 = vadd.f32 %v2528, %v2616
        %v2618 = vpop.f32.mrf.mxu0
        %v2619 = vadd.f32 %v2530, %v2618
        %2620 = vmatmul.bf16.gmra.mxu0 %v2188
        %v2621 = vpop.f32.mrf.mxu0
        %v2622 = vadd.f32 %v2533, %v2621
        %v2623 = vpop.f32.mrf.mxu0
        %v2624 = vadd.f32 %v2535, %v2623
        %2625 = vmatmul.bf16.gmra.mxu0 %v2191
        %v2626 = vpop.f32.mrf.mxu0
        %v2627 = vadd.f32 %v2538, %v2626
        %v2628 = vpop.f32.mrf.mxu0
        %v2629 = vadd.f32 %v2540, %v2628
        %2630 = vmatmul.bf16.gmra.mxu0 %v2194
        %v2631 = vpop.f32.mrf.mxu0
        %v2632 = vadd.f32 %v2543, %v2631
        %v2633 = vpop.f32.mrf.mxu0
        %v2634 = vadd.f32 %v2545, %v2633
        %2635 = vmatmul.bf16.gmra.mxu0 %v2197
        %v2636 = vpop.f32.mrf.mxu0
        %v2637 = vadd.f32 %v2548, %v2636
        %v2638 = vpop.f32.mrf.mxu0
        %v2639 = vadd.f32 %v2550, %v2638
        %2640 = vmatmul.bf16.gmra.mxu0 %v2200
        %v2641 = vpop.f32.mrf.mxu0
        %v2642 = vadd.f32 %v2553, %v2641
        %v2643 = vpop.f32.mrf.mxu0
        %v2644 = vadd.f32 %v2555, %v2643
        %2645 = vmatmul.bf16.gmra.mxu0 %v2203
        %v2646 = vpop.f32.mrf.mxu0
        %v2647 = vadd.f32 %v2558, %v2646
        %v2648 = vpop.f32.mrf.mxu0
        %v2649 = vadd.f32 %v2560, %v2648
        %2650 = vmatmul.bf16.gmra.mxu0 %v2206
        %v2651 = vpop.f32.mrf.mxu0
        %v2652 = vadd.f32 %v2563, %v2651
        %v2653 = vpop.f32.mrf.mxu0
        %v2654 = vadd.f32 %v2565, %v2653
        %2655 = vmatmul.bf16.gmra.mxu0 %v2209
        %v2656 = vpop.f32.mrf.mxu0
        %v2657 = vadd.f32 %v2568, %v2656
        %v2658 = vpop.f32.mrf.mxu0
        %v2659 = vadd.f32 %v2570, %v2658
        %2660 = vmatmul.bf16.gmra.mxu0 %v2212
        %v2661 = vpop.f32.mrf.mxu0
        %v2662 = vadd.f32 %v2573, %v2661
        %v2663 = vpop.f32.mrf.mxu0
        %v2664 = vadd.f32 %v2575, %v2663
        %2665 = vmatmul.bf16.gmra.mxu0 %v2215
        %v2666 = vpop.f32.mrf.mxu0
        %v2667 = vadd.f32 %v2578, %v2666
        %v2668 = vpop.f32.mrf.mxu0
        %v2669 = vadd.f32 %v2580, %v2668
        %2670 = vmatmul.bf16.gmra.mxu0 %v2218
        %v2671 = vpop.f32.mrf.mxu0
        %v2672 = vadd.f32 %v2583, %v2671
        %v2673 = vpop.f32.mrf.mxu0
        %v2674 = vadd.f32 %v2585, %v2673
        %2675 = vmatmul.bf16.gmra.mxu0 %v2221
        %v2676 = vpop.f32.mrf.mxu0
        %v2677 = vadd.f32 %v2588, %v2676
        %v2678 = vpop.f32.mrf.mxu0
        %v2679 = vadd.f32 %v2590, %v2678
        %2680 = vdwg.mxu0
        %s2681 = scalar_lea.vmem [#allocation2], 48
        %v2682 = vld [vmem:[%s2681] sm:$0xff]
        %v2683 = vld [vmem:[%s2681 + $0x8] sm:$0xf]
        %v2684 = vld [vmem:[%s2681 + $0xc] sm:$0xff]
        %v2685 = vld [vmem:[%s2681 + $0x14] sm:$0xf]
        %v2686 = vld [vmem:[%s2681 + $0x18] sm:$0xff]
        %v2687 = vld [vmem:[%s2681 + $0x20] sm:$0xf]
        %v2688 = vld [vmem:[%s2681 + $0x24] sm:$0xff]
        %v2689 = vld [vmem:[%s2681 + $0x2c] sm:$0xf]
        %v2690 = vld [vmem:[%s2681 + $0x30] sm:$0xff]
        %v2691 = vld [vmem:[%s2681 + $0x38] sm:$0xf]
        %v2692 = vld [vmem:[%s2681 + $0x3c] sm:$0xff]
        %v2693 = vld [vmem:[%s2681 + $0x44] sm:$0xf]
        %v2694 = vld [vmem:[%s2681 + $0x48] sm:$0xff]
        %v2695 = vld [vmem:[%s2681 + $0x50] sm:$0xf]
        %v2696 = vld [vmem:[%s2681 + $0x54] sm:$0xff]
        %v2697 = vld [vmem:[%s2681 + $0x5c] sm:$0xf]
        %v2698 = vld [vmem:[%s2681 + $0x60] sm:$0xff]
        %v2699 = vld [vmem:[%s2681 + $0x68] sm:$0xf]
        %v2700 = vld [vmem:[%s2681 + $0x6c] sm:$0xff]
        %v2701 = vld [vmem:[%s2681 + $0x74] sm:$0xf]
        %v2702 = vld [vmem:[%s2681 + $0x78] sm:$0xff]
        %v2703 = vld [vmem:[%s2681 + $0x80] sm:$0xf]
        %v2704 = vld [vmem:[%s2681 + $0x84] sm:$0xff]
        %v2705 = vld [vmem:[%s2681 + $0x8c] sm:$0xf]
        %v2706 = vld [vmem:[%s2681 + $0x90] sm:$0xff]
        %v2707 = vld [vmem:[%s2681 + $0x98] sm:$0xf]
        %v2708 = vld [vmem:[%s2681 + $0x9c] sm:$0xff]
        %v2709 = vld [vmem:[%s2681 + $0xa4] sm:$0xf]
        %v2710 = vld [vmem:[%s2681 + $0xa8] sm:$0xff]
        %v2711 = vld [vmem:[%s2681 + $0xb0] sm:$0xf]
        %v2712 = vld [vmem:[%s2681 + $0xb4] sm:$0xff]
        %v2713 = vld [vmem:[%s2681 + $0xbc] sm:$0xf]
        %v2714 = vld [vmem:[%s2681 + $0xc0] sm:$0xff]
        %v2715 = vld [vmem:[%s2681 + $0xc8] sm:$0xf]
        %v2716 = vld [vmem:[%s2681 + $0xcc] sm:$0xff]
        %v2717 = vld [vmem:[%s2681 + $0xd4] sm:$0xf]
        %v2718 = vld [vmem:[%s2681 + $0xd8] sm:$0xff]
        %v2719 = vld [vmem:[%s2681 + $0xe0] sm:$0xf]
        %v2720 = vld [vmem:[%s2681 + $0xe4] sm:$0xff]
        %v2721 = vld [vmem:[%s2681 + $0xec] sm:$0xf]
        %v2722 = vld [vmem:[%s2681 + $0xf0] sm:$0xff]
        %v2723 = vld [vmem:[%s2681 + $0xf8] sm:$0xf]
        %v2724 = vld [vmem:[%s2681 + $0xfc] sm:$0xff]
        %v2725 = vld [vmem:[%s2681 + $0x104] sm:$0xf]
        %v2726 = vld [vmem:[%s2681 + $0x108] sm:$0xff]
        %v2727 = vld [vmem:[%s2681 + $0x110] sm:$0xf]
        %v2728 = vld [vmem:[%s2681 + $0x114] sm:$0xff]
        %v2729 = vld [vmem:[%s2681 + $0x11c] sm:$0xf]
        %v2730 = vld [vmem:[%s2681 + $0x120] sm:$0xff]
        %v2731 = vld [vmem:[%s2681 + $0x128] sm:$0xf]
        %v2732 = vld [vmem:[%s2681 + $0x12c] sm:$0xff]
        %v2733 = vld [vmem:[%s2681 + $0x134] sm:$0xf]
        %v2734 = vld [vmem:[%s2681 + $0x138] sm:$0xff]
        %v2735 = vld [vmem:[%s2681 + $0x140] sm:$0xf]
        %v2736 = vld [vmem:[%s2681 + $0x144] sm:$0xff]
        %v2737 = vld [vmem:[%s2681 + $0x14c] sm:$0xf]
        %v2738 = vld [vmem:[%s2681 + $0x150] sm:$0xff]
        %v2739 = vld [vmem:[%s2681 + $0x158] sm:$0xf]
        %v2740 = vld [vmem:[%s2681 + $0x15c] sm:$0xff]
        %v2741 = vld [vmem:[%s2681 + $0x164] sm:$0xf]
        %v2742 = vld [vmem:[%s2681 + $0x168] sm:$0xff]
        %v2743 = vld [vmem:[%s2681 + $0x170] sm:$0xf]
        %v2744 = vld [vmem:[%s2681 + $0x174] sm:$0xff]
        %v2745 = vld [vmem:[%s2681 + $0x17c] sm:$0xf]
        %s2746 = scalar_lea.vmem [#allocation6], 384
        %v2747 = vld [vmem:[%s2746] sm:$0xf]
        %v2748 = vld [vmem:[%s2746 + $0x4] sm:$0xf]
        %v2749 = vld [vmem:[%s2746 + $0x8] sm:$0xf]
        %v2750 = vld [vmem:[%s2746 + $0xc] sm:$0xf]
        %v2751 = vld [vmem:[%s2746 + $0x10] sm:$0xf]
        %v2752 = vld [vmem:[%s2746 + $0x14] sm:$0xf]
        %v2753 = vld [vmem:[%s2746 + $0x18] sm:$0xf]
        %v2754 = vld [vmem:[%s2746 + $0x1c] sm:$0xf]
        %v2755 = vld [vmem:[%s2746 + $0x20] sm:$0xf]
        %v2756 = vld [vmem:[%s2746 + $0x24] sm:$0xf]
        %v2757 = vld [vmem:[%s2746 + $0x28] sm:$0xf]
        %v2758 = vld [vmem:[%s2746 + $0x2c] sm:$0xf]
        %v2759 = vld [vmem:[%s2746 + $0x30] sm:$0xf]
        %v2760 = vld [vmem:[%s2746 + $0x34] sm:$0xf]
        %v2761 = vld [vmem:[%s2746 + $0x38] sm:$0xf]
        %v2762 = vld [vmem:[%s2746 + $0x3c] sm:$0xf]
        %v2763 = vld [vmem:[%s2746 + $0x40] sm:$0xf]
        %v2764 = vld [vmem:[%s2746 + $0x44] sm:$0xf]
        %v2765 = vld [vmem:[%s2746 + $0x48] sm:$0xf]
        %v2766 = vld [vmem:[%s2746 + $0x4c] sm:$0xf]
        %v2767 = vld [vmem:[%s2746 + $0x50] sm:$0xf]
        %v2768 = vld [vmem:[%s2746 + $0x54] sm:$0xf]
        %v2769 = vld [vmem:[%s2746 + $0x58] sm:$0xf]
        %v2770 = vld [vmem:[%s2746 + $0x5c] sm:$0xf]
        %v2771 = vld [vmem:[%s2746 + $0x60] sm:$0xf]
        %v2772 = vld [vmem:[%s2746 + $0x64] sm:$0xf]
        %v2773 = vld [vmem:[%s2746 + $0x68] sm:$0xf]
        %v2774 = vld [vmem:[%s2746 + $0x6c] sm:$0xf]
        %v2775 = vld [vmem:[%s2746 + $0x70] sm:$0xf]
        %v2776 = vld [vmem:[%s2746 + $0x74] sm:$0xf]
        %v2777 = vld [vmem:[%s2746 + $0x78] sm:$0xf]
        %v2778 = vld [vmem:[%s2746 + $0x7c] sm:$0xf]
        %v2779 = vld [vmem:[%s2746 + $0x80] sm:$0xf]
        %v2780 = vld [vmem:[%s2746 + $0x84] sm:$0xf]
        %v2781 = vld [vmem:[%s2746 + $0x88] sm:$0xf]
        %v2782 = vld [vmem:[%s2746 + $0x8c] sm:$0xf]
        %v2783 = vld [vmem:[%s2746 + $0x90] sm:$0xf]
        %v2784 = vld [vmem:[%s2746 + $0x94] sm:$0xf]
        %v2785 = vld [vmem:[%s2746 + $0x98] sm:$0xf]
        %v2786 = vld [vmem:[%s2746 + $0x9c] sm:$0xf]
        %v2787 = vld [vmem:[%s2746 + $0xa0] sm:$0xf]
        %v2788 = vld [vmem:[%s2746 + $0xa4] sm:$0xf]
        %v2789 = vld [vmem:[%s2746 + $0xa8] sm:$0xf]
        %v2790 = vld [vmem:[%s2746 + $0xac] sm:$0xf]
        %v2791 = vld [vmem:[%s2746 + $0xb0] sm:$0xf]
        %v2792 = vld [vmem:[%s2746 + $0xb4] sm:$0xf]
        %v2793 = vld [vmem:[%s2746 + $0xb8] sm:$0xf]
        %v2794 = vld [vmem:[%s2746 + $0xbc] sm:$0xf]
        %v2859 = vunpack.c.l.b16 %v2682
        %v2860 = vunpack.c.h.b16 %v2682
        %v2861 = vunpack.c.l.b16 %v2683
        %v2862 = vunpack.c.l.b16 %v2684
        %v2863 = vunpack.c.h.b16 %v2684
        %v2864 = vunpack.c.l.b16 %v2685
        %v2865 = vunpack.c.l.b16 %v2686
        %v2866 = vunpack.c.h.b16 %v2686
        %v2867 = vunpack.c.l.b16 %v2687
        %v2868 = vunpack.c.l.b16 %v2688
        %v2869 = vunpack.c.h.b16 %v2688
        %v2870 = vunpack.c.l.b16 %v2689
        %v2871 = vunpack.c.l.b16 %v2690
        %v2872 = vunpack.c.h.b16 %v2690
        %v2873 = vunpack.c.l.b16 %v2691
        %v2874 = vunpack.c.l.b16 %v2692
        %v2875 = vunpack.c.h.b16 %v2692
        %v2876 = vunpack.c.l.b16 %v2693
        %v2877 = vunpack.c.l.b16 %v2694
        %v2878 = vunpack.c.h.b16 %v2694
        %v2879 = vunpack.c.l.b16 %v2695
        %v2880 = vunpack.c.l.b16 %v2696
        %v2881 = vunpack.c.h.b16 %v2696
        %v2882 = vunpack.c.l.b16 %v2697
        %v2883 = vunpack.c.l.b16 %v2698
        %v2884 = vunpack.c.h.b16 %v2698
        %v2885 = vunpack.c.l.b16 %v2699
        %v2886 = vunpack.c.l.b16 %v2700
        %v2887 = vunpack.c.h.b16 %v2700
        %v2888 = vunpack.c.l.b16 %v2701
        %v2889 = vunpack.c.l.b16 %v2702
        %v2890 = vunpack.c.h.b16 %v2702
        %v2891 = vunpack.c.l.b16 %v2703
        %v2892 = vunpack.c.l.b16 %v2704
        %v2893 = vunpack.c.h.b16 %v2704
        %v2894 = vunpack.c.l.b16 %v2705
        %v2895 = vunpack.c.l.b16 %v2706
        %v2896 = vunpack.c.h.b16 %v2706
        %v2897 = vunpack.c.l.b16 %v2707
        %v2898 = vunpack.c.l.b16 %v2708
        %v2899 = vunpack.c.h.b16 %v2708
        %v2900 = vunpack.c.l.b16 %v2709
        %v2901 = vunpack.c.l.b16 %v2710
        %v2902 = vunpack.c.h.b16 %v2710
        %v2903 = vunpack.c.l.b16 %v2711
        %v2904 = vunpack.c.l.b16 %v2712
        %v2905 = vunpack.c.h.b16 %v2712
        %v2906 = vunpack.c.l.b16 %v2713
        %v2907 = vunpack.c.l.b16 %v2714
        %v2908 = vunpack.c.h.b16 %v2714
        %v2909 = vunpack.c.l.b16 %v2715
        %v2910 = vunpack.c.l.b16 %v2716
        %v2911 = vunpack.c.h.b16 %v2716
        %v2912 = vunpack.c.l.b16 %v2717
        %v2913 = vunpack.c.l.b16 %v2718
        %v2914 = vunpack.c.h.b16 %v2718
        %v2915 = vunpack.c.l.b16 %v2719
        %v2916 = vunpack.c.l.b16 %v2720
        %v2917 = vunpack.c.h.b16 %v2720
        %v2918 = vunpack.c.l.b16 %v2721
        %v2919 = vunpack.c.l.b16 %v2722
        %v2920 = vunpack.c.h.b16 %v2722
        %v2921 = vunpack.c.l.b16 %v2723
        %v2922 = vunpack.c.l.b16 %v2724
        %v2923 = vunpack.c.h.b16 %v2724
        %v2924 = vunpack.c.l.b16 %v2725
        %v2925 = vunpack.c.l.b16 %v2726
        %v2926 = vunpack.c.h.b16 %v2726
        %v2927 = vunpack.c.l.b16 %v2727
        %v2928 = vunpack.c.l.b16 %v2728
        %v2929 = vunpack.c.h.b16 %v2728
        %v2930 = vunpack.c.l.b16 %v2729
        %v2931 = vunpack.c.l.b16 %v2730
        %v2932 = vunpack.c.h.b16 %v2730
        %v2933 = vunpack.c.l.b16 %v2731
        %v2934 = vunpack.c.l.b16 %v2732
        %v2935 = vunpack.c.h.b16 %v2732
        %v2936 = vunpack.c.l.b16 %v2733
        %v2937 = vunpack.c.l.b16 %v2734
        %v2938 = vunpack.c.h.b16 %v2734
        %v2939 = vunpack.c.l.b16 %v2735
        %v2940 = vunpack.c.l.b16 %v2736
        %v2941 = vunpack.c.h.b16 %v2736
        %v2942 = vunpack.c.l.b16 %v2737
        %v2943 = vunpack.c.l.b16 %v2738
        %v2944 = vunpack.c.h.b16 %v2738
        %v2945 = vunpack.c.l.b16 %v2739
        %v2946 = vunpack.c.l.b16 %v2740
        %v2947 = vunpack.c.h.b16 %v2740
        %v2948 = vunpack.c.l.b16 %v2741
        %v2949 = vunpack.c.l.b16 %v2742
        %v2950 = vunpack.c.h.b16 %v2742
        %v2951 = vunpack.c.l.b16 %v2743
        %v2952 = vunpack.c.l.b16 %v2744
        %v2953 = vunpack.c.h.b16 %v2744
        %v2954 = vunpack.c.l.b16 %v2745
        %v2955 = vpack.c.b16 %v2862, %v2859
        %v2956 = vpack.c.b16 %v2863, %v2860
        %v2957 = vpack.c.b16 %v2864, %v2861
        %v2958 = vpack.c.b16 %v2868, %v2865
        %v2959 = vpack.c.b16 %v2869, %v2866
        %v2960 = vpack.c.b16 %v2870, %v2867
        %v2961 = vpack.c.b16 %v2874, %v2871
        %v2962 = vpack.c.b16 %v2875, %v2872
        %v2963 = vpack.c.b16 %v2876, %v2873
        %v2964 = vpack.c.b16 %v2880, %v2877
        %v2965 = vpack.c.b16 %v2881, %v2878
        %v2966 = vpack.c.b16 %v2882, %v2879
        %v2967 = vpack.c.b16 %v2886, %v2883
        %v2968 = vpack.c.b16 %v2887, %v2884
        %v2969 = vpack.c.b16 %v2888, %v2885
        %v2970 = vpack.c.b16 %v2892, %v2889
        %v2971 = vpack.c.b16 %v2893, %v2890
        %v2972 = vpack.c.b16 %v2894, %v2891
        %v2973 = vpack.c.b16 %v2898, %v2895
        %v2974 = vpack.c.b16 %v2899, %v2896
        %v2975 = vpack.c.b16 %v2900, %v2897
        %v2976 = vpack.c.b16 %v2904, %v2901
        %v2977 = vpack.c.b16 %v2905, %v2902
        %v2978 = vpack.c.b16 %v2906, %v2903
        %v2979 = vpack.c.b16 %v2910, %v2907
        %v2980 = vpack.c.b16 %v2911, %v2908
        %v2981 = vpack.c.b16 %v2912, %v2909
        %v2982 = vpack.c.b16 %v2916, %v2913
        %v2983 = vpack.c.b16 %v2917, %v2914
        %v2984 = vpack.c.b16 %v2918, %v2915
        %v2985 = vpack.c.b16 %v2922, %v2919
        %v2986 = vpack.c.b16 %v2923, %v2920
        %v2987 = vpack.c.b16 %v2924, %v2921
        %v2988 = vpack.c.b16 %v2928, %v2925
        %v2989 = vpack.c.b16 %v2929, %v2926
        %v2990 = vpack.c.b16 %v2930, %v2927
        %v2991 = vpack.c.b16 %v2934, %v2931
        %v2992 = vpack.c.b16 %v2935, %v2932
        %v2993 = vpack.c.b16 %v2936, %v2933
        %v2994 = vpack.c.b16 %v2940, %v2937
        %v2995 = vpack.c.b16 %v2941, %v2938
        %v2996 = vpack.c.b16 %v2942, %v2939
        %v2997 = vpack.c.b16 %v2946, %v2943
        %v2998 = vpack.c.b16 %v2947, %v2944
        %v2999 = vpack.c.b16 %v2948, %v2945
        %v3000 = vpack.c.b16 %v2952, %v2949
        %v3001 = vpack.c.b16 %v2953, %v2950
        %v3002 = vpack.c.b16 %v2954, %v2951
        %v3099 = vunpack.c.l.b16 %v2747
        %v3100 = vunpack.c.l.b16 %v2748
        %v3101 = vunpack.c.l.b16 %v2749
        %v3102 = vunpack.c.l.b16 %v2750
        %v3103 = vunpack.c.l.b16 %v2751
        %v3104 = vunpack.c.l.b16 %v2752
        %v3105 = vunpack.c.l.b16 %v2753
        %v3106 = vunpack.c.l.b16 %v2754
        %v3107 = vunpack.c.l.b16 %v2755
        %v3108 = vunpack.c.l.b16 %v2756
        %v3109 = vunpack.c.l.b16 %v2757
        %v3110 = vunpack.c.l.b16 %v2758
        %v3111 = vunpack.c.l.b16 %v2759
        %v3112 = vunpack.c.l.b16 %v2760
        %v3113 = vunpack.c.l.b16 %v2761
        %v3114 = vunpack.c.l.b16 %v2762
        %v3115 = vunpack.c.l.b16 %v2763
        %v3116 = vunpack.c.l.b16 %v2764
        %v3117 = vunpack.c.l.b16 %v2765
        %v3118 = vunpack.c.l.b16 %v2766
        %v3119 = vunpack.c.l.b16 %v2767
        %v3120 = vunpack.c.l.b16 %v2768
        %v3121 = vunpack.c.l.b16 %v2769
        %v3122 = vunpack.c.l.b16 %v2770
        %v3123 = vunpack.c.l.b16 %v2771
        %v3124 = vunpack.c.l.b16 %v2772
        %v3125 = vunpack.c.l.b16 %v2773
        %v3126 = vunpack.c.l.b16 %v2774
        %v3127 = vunpack.c.l.b16 %v2775
        %v3128 = vunpack.c.l.b16 %v2776
        %v3129 = vunpack.c.l.b16 %v2777
        %v3130 = vunpack.c.l.b16 %v2778
        %v3131 = vunpack.c.l.b16 %v2779
        %v3132 = vunpack.c.l.b16 %v2780
        %v3133 = vunpack.c.l.b16 %v2781
        %v3134 = vunpack.c.l.b16 %v2782
        %v3135 = vunpack.c.l.b16 %v2783
        %v3136 = vunpack.c.l.b16 %v2784
        %v3137 = vunpack.c.l.b16 %v2785
        %v3138 = vunpack.c.l.b16 %v2786
        %v3139 = vunpack.c.l.b16 %v2787
        %v3140 = vunpack.c.l.b16 %v2788
        %v3141 = vunpack.c.l.b16 %v2789
        %v3142 = vunpack.c.l.b16 %v2790
        %v3143 = vunpack.c.l.b16 %v2791
        %v3144 = vunpack.c.l.b16 %v2792
        %v3145 = vunpack.c.l.b16 %v2793
        %v3146 = vunpack.c.l.b16 %v2794
        %v3147 = vpack.c.b16 %v3100, %v3099
        %v3148 = vpack.c.b16 %v3102, %v3101
        %v3149 = vpack.c.b16 %v3104, %v3103
        %v3150 = vpack.c.b16 %v3106, %v3105
        %v3151 = vpack.c.b16 %v3108, %v3107
        %v3152 = vpack.c.b16 %v3110, %v3109
        %v3153 = vpack.c.b16 %v3112, %v3111
        %v3154 = vpack.c.b16 %v3114, %v3113
        %v3155 = vpack.c.b16 %v3116, %v3115
        %v3156 = vpack.c.b16 %v3118, %v3117
        %v3157 = vpack.c.b16 %v3120, %v3119
        %v3158 = vpack.c.b16 %v3122, %v3121
        %v3159 = vpack.c.b16 %v3124, %v3123
        %v3160 = vpack.c.b16 %v3126, %v3125
        %v3161 = vpack.c.b16 %v3128, %v3127
        %v3162 = vpack.c.b16 %v3130, %v3129
        %v3163 = vpack.c.b16 %v3132, %v3131
        %v3164 = vpack.c.b16 %v3134, %v3133
        %v3165 = vpack.c.b16 %v3136, %v3135
        %v3166 = vpack.c.b16 %v3138, %v3137
        %v3167 = vpack.c.b16 %v3140, %v3139
        %v3168 = vpack.c.b16 %v3142, %v3141
        %v3169 = vpack.c.b16 %v3144, %v3143
        %v3170 = vpack.c.b16 %v3146, %v3145
        %3195 = vmatpush.bf16.msra.mxu0 %v3154
        %3196 = vmatpush.bf16.msra.mxu0 %v3153
        %3197 = vmatpush.bf16.msra.mxu0 %v3152
        %3198 = vmatpush.bf16.msra.mxu0 %v3151
        %3199 = vmatpush.bf16.msra.mxu0 %v3150
        %3200 = vmatpush.bf16.msra.mxu0 %v3149
        %3201 = vmatpush.bf16.msra.mxu0 %v3148
        %3202 = vmatpush.bf16.msra.mxu0 %v3147
        %3203 = vmatmul.bf16.gmra.mxu0 %v2955
        %v3204 = vpop.f32.mrf.mxu0
        %v3205 = vadd.f32 0.0, %v3204
        %v3206 = vpop.f32.mrf.mxu0
        %v3207 = vadd.f32 0.0, %v3206
        %3208 = vmatmul.bf16.gmra.mxu0 %v2958
        %v3209 = vpop.f32.mrf.mxu0
        %v3210 = vadd.f32 0.0, %v3209
        %v3211 = vpop.f32.mrf.mxu0
        %v3212 = vadd.f32 0.0, %v3211
        %3213 = vmatmul.bf16.gmra.mxu0 %v2961
        %v3214 = vpop.f32.mrf.mxu0
        %v3215 = vadd.f32 0.0, %v3214
        %v3216 = vpop.f32.mrf.mxu0
        %v3217 = vadd.f32 0.0, %v3216
        %3218 = vmatmul.bf16.gmra.mxu0 %v2964
        %v3219 = vpop.f32.mrf.mxu0
        %v3220 = vadd.f32 0.0, %v3219
        %v3221 = vpop.f32.mrf.mxu0
        %v3222 = vadd.f32 0.0, %v3221
        %3223 = vmatmul.bf16.gmra.mxu0 %v2967
        %v3224 = vpop.f32.mrf.mxu0
        %v3225 = vadd.f32 0.0, %v3224
        %v3226 = vpop.f32.mrf.mxu0
        %v3227 = vadd.f32 0.0, %v3226
        %3228 = vmatmul.bf16.gmra.mxu0 %v2970
        %v3229 = vpop.f32.mrf.mxu0
        %v3230 = vadd.f32 0.0, %v3229
        %v3231 = vpop.f32.mrf.mxu0
        %v3232 = vadd.f32 0.0, %v3231
        %3233 = vmatmul.bf16.gmra.mxu0 %v2973
        %v3234 = vpop.f32.mrf.mxu0
        %v3235 = vadd.f32 0.0, %v3234
        %v3236 = vpop.f32.mrf.mxu0
        %v3237 = vadd.f32 0.0, %v3236
        %3238 = vmatmul.bf16.gmra.mxu0 %v2976
        %v3239 = vpop.f32.mrf.mxu0
        %v3240 = vadd.f32 0.0, %v3239
        %v3241 = vpop.f32.mrf.mxu0
        %v3242 = vadd.f32 0.0, %v3241
        %3243 = vmatmul.bf16.gmra.mxu0 %v2979
        %v3244 = vpop.f32.mrf.mxu0
        %v3245 = vadd.f32 0.0, %v3244
        %v3246 = vpop.f32.mrf.mxu0
        %v3247 = vadd.f32 0.0, %v3246
        %3248 = vmatmul.bf16.gmra.mxu0 %v2982
        %v3249 = vpop.f32.mrf.mxu0
        %v3250 = vadd.f32 0.0, %v3249
        %v3251 = vpop.f32.mrf.mxu0
        %v3252 = vadd.f32 0.0, %v3251
        %3253 = vmatmul.bf16.gmra.mxu0 %v2985
        %v3254 = vpop.f32.mrf.mxu0
        %v3255 = vadd.f32 0.0, %v3254
        %v3256 = vpop.f32.mrf.mxu0
        %v3257 = vadd.f32 0.0, %v3256
        %3258 = vmatmul.bf16.gmra.mxu0 %v2988
        %v3259 = vpop.f32.mrf.mxu0
        %v3260 = vadd.f32 0.0, %v3259
        %v3261 = vpop.f32.mrf.mxu0
        %v3262 = vadd.f32 0.0, %v3261
        %3263 = vmatmul.bf16.gmra.mxu0 %v2991
        %v3264 = vpop.f32.mrf.mxu0
        %v3265 = vadd.f32 0.0, %v3264
        %v3266 = vpop.f32.mrf.mxu0
        %v3267 = vadd.f32 0.0, %v3266
        %3268 = vmatmul.bf16.gmra.mxu0 %v2994
        %v3269 = vpop.f32.mrf.mxu0
        %v3270 = vadd.f32 0.0, %v3269
        %v3271 = vpop.f32.mrf.mxu0
        %v3272 = vadd.f32 0.0, %v3271
        %3273 = vmatmul.bf16.gmra.mxu0 %v2997
        %v3274 = vpop.f32.mrf.mxu0
        %v3275 = vadd.f32 0.0, %v3274
        %v3276 = vpop.f32.mrf.mxu0
        %v3277 = vadd.f32 0.0, %v3276
        %3278 = vmatmul.bf16.gmra.mxu0 %v3000
        %v3279 = vpop.f32.mrf.mxu0
        %v3280 = vadd.f32 0.0, %v3279
        %v3281 = vpop.f32.mrf.mxu0
        %v3282 = vadd.f32 0.0, %v3281
        %3283 = vdwg.mxu0
        %3284 = vmatpush.bf16.msra.mxu0 %v3162
        %3285 = vmatpush.bf16.msra.mxu0 %v3161
        %3286 = vmatpush.bf16.msra.mxu0 %v3160
        %3287 = vmatpush.bf16.msra.mxu0 %v3159
        %3288 = vmatpush.bf16.msra.mxu0 %v3158
        %3289 = vmatpush.bf16.msra.mxu0 %v3157
        %3290 = vmatpush.bf16.msra.mxu0 %v3156
        %3291 = vmatpush.bf16.msra.mxu0 %v3155
        %3292 = vmatmul.bf16.gmra.mxu0 %v2956
        %v3293 = vpop.f32.mrf.mxu0
        %v3294 = vadd.f32 %v3205, %v3293
        %v3295 = vpop.f32.mrf.mxu0
        %v3296 = vadd.f32 %v3207, %v3295
        %3297 = vmatmul.bf16.gmra.mxu0 %v2959
        %v3298 = vpop.f32.mrf.mxu0
        %v3299 = vadd.f32 %v3210, %v3298
        %v3300 = vpop.f32.mrf.mxu0
        %v3301 = vadd.f32 %v3212, %v3300
        %3302 = vmatmul.bf16.gmra.mxu0 %v2962
        %v3303 = vpop.f32.mrf.mxu0
        %v3304 = vadd.f32 %v3215, %v3303
        %v3305 = vpop.f32.mrf.mxu0
        %v3306 = vadd.f32 %v3217, %v3305
        %3307 = vmatmul.bf16.gmra.mxu0 %v2965
        %v3308 = vpop.f32.mrf.mxu0
        %v3309 = vadd.f32 %v3220, %v3308
        %v3310 = vpop.f32.mrf.mxu0
        %v3311 = vadd.f32 %v3222, %v3310
        %3312 = vmatmul.bf16.gmra.mxu0 %v2968
        %v3313 = vpop.f32.mrf.mxu0
        %v3314 = vadd.f32 %v3225, %v3313
        %v3315 = vpop.f32.mrf.mxu0
        %v3316 = vadd.f32 %v3227, %v3315
        %3317 = vmatmul.bf16.gmra.mxu0 %v2971
        %v3318 = vpop.f32.mrf.mxu0
        %v3319 = vadd.f32 %v3230, %v3318
        %v3320 = vpop.f32.mrf.mxu0
        %v3321 = vadd.f32 %v3232, %v3320
        %3322 = vmatmul.bf16.gmra.mxu0 %v2974
        %v3323 = vpop.f32.mrf.mxu0
        %v3324 = vadd.f32 %v3235, %v3323
        %v3325 = vpop.f32.mrf.mxu0
        %v3326 = vadd.f32 %v3237, %v3325
        %3327 = vmatmul.bf16.gmra.mxu0 %v2977
        %v3328 = vpop.f32.mrf.mxu0
        %v3329 = vadd.f32 %v3240, %v3328
        %v3330 = vpop.f32.mrf.mxu0
        %v3331 = vadd.f32 %v3242, %v3330
        %3332 = vmatmul.bf16.gmra.mxu0 %v2980
        %v3333 = vpop.f32.mrf.mxu0
        %v3334 = vadd.f32 %v3245, %v3333
        %v3335 = vpop.f32.mrf.mxu0
        %v3336 = vadd.f32 %v3247, %v3335
        %3337 = vmatmul.bf16.gmra.mxu0 %v2983
        %v3338 = vpop.f32.mrf.mxu0
        %v3339 = vadd.f32 %v3250, %v3338
        %v3340 = vpop.f32.mrf.mxu0
        %v3341 = vadd.f32 %v3252, %v3340
        %3342 = vmatmul.bf16.gmra.mxu0 %v2986
        %v3343 = vpop.f32.mrf.mxu0
        %v3344 = vadd.f32 %v3255, %v3343
        %v3345 = vpop.f32.mrf.mxu0
        %v3346 = vadd.f32 %v3257, %v3345
        %3347 = vmatmul.bf16.gmra.mxu0 %v2989
        %v3348 = vpop.f32.mrf.mxu0
        %v3349 = vadd.f32 %v3260, %v3348
        %v3350 = vpop.f32.mrf.mxu0
        %v3351 = vadd.f32 %v3262, %v3350
        %3352 = vmatmul.bf16.gmra.mxu0 %v2992
        %v3353 = vpop.f32.mrf.mxu0
        %v3354 = vadd.f32 %v3265, %v3353
        %v3355 = vpop.f32.mrf.mxu0
        %v3356 = vadd.f32 %v3267, %v3355
        %3357 = vmatmul.bf16.gmra.mxu0 %v2995
        %v3358 = vpop.f32.mrf.mxu0
        %v3359 = vadd.f32 %v3270, %v3358
        %v3360 = vpop.f32.mrf.mxu0
        %v3361 = vadd.f32 %v3272, %v3360
        %3362 = vmatmul.bf16.gmra.mxu0 %v2998
        %v3363 = vpop.f32.mrf.mxu0
        %v3364 = vadd.f32 %v3275, %v3363
        %v3365 = vpop.f32.mrf.mxu0
        %v3366 = vadd.f32 %v3277, %v3365
        %3367 = vmatmul.bf16.gmra.mxu0 %v3001
        %v3368 = vpop.f32.mrf.mxu0
        %v3369 = vadd.f32 %v3280, %v3368
        %v3370 = vpop.f32.mrf.mxu0
        %v3371 = vadd.f32 %v3282, %v3370
        %3372 = vdwg.mxu0
        %3373 = vmatpush.bf16.msra.mxu0 %v3170
        %3374 = vmatpush.bf16.msra.mxu0 %v3169
        %3375 = vmatpush.bf16.msra.mxu0 %v3168
        %3376 = vmatpush.bf16.msra.mxu0 %v3167
        %3377 = vmatpush.bf16.msra.mxu0 %v3166
        %3378 = vmatpush.bf16.msra.mxu0 %v3165
        %3379 = vmatpush.bf16.msra.mxu0 %v3164
        %3380 = vmatpush.bf16.msra.mxu0 %v3163
        %3381 = vmatmul.bf16.gmra.mxu0 %v2957
        %v3382 = vpop.f32.mrf.mxu0
        %v3383 = vadd.f32 %v3294, %v3382
        %v3384 = vpop.f32.mrf.mxu0
        %v3385 = vadd.f32 %v3296, %v3384
        %3386 = vmatmul.bf16.gmra.mxu0 %v2960
        %v3387 = vpop.f32.mrf.mxu0
        %v3388 = vadd.f32 %v3299, %v3387
        %v3389 = vpop.f32.mrf.mxu0
        %v3390 = vadd.f32 %v3301, %v3389
        %3391 = vmatmul.bf16.gmra.mxu0 %v2963
        %v3392 = vpop.f32.mrf.mxu0
        %v3393 = vadd.f32 %v3304, %v3392
        %v3394 = vpop.f32.mrf.mxu0
        %v3395 = vadd.f32 %v3306, %v3394
        %3396 = vmatmul.bf16.gmra.mxu0 %v2966
        %v3397 = vpop.f32.mrf.mxu0
        %v3398 = vadd.f32 %v3309, %v3397
        %v3399 = vpop.f32.mrf.mxu0
        %v3400 = vadd.f32 %v3311, %v3399
        %3401 = vmatmul.bf16.gmra.mxu0 %v2969
        %v3402 = vpop.f32.mrf.mxu0
        %v3403 = vadd.f32 %v3314, %v3402
        %v3404 = vpop.f32.mrf.mxu0
        %v3405 = vadd.f32 %v3316, %v3404
        %3406 = vmatmul.bf16.gmra.mxu0 %v2972
        %v3407 = vpop.f32.mrf.mxu0
        %v3408 = vadd.f32 %v3319, %v3407
        %v3409 = vpop.f32.mrf.mxu0
        %v3410 = vadd.f32 %v3321, %v3409
        %3411 = vmatmul.bf16.gmra.mxu0 %v2975
        %v3412 = vpop.f32.mrf.mxu0
        %v3413 = vadd.f32 %v3324, %v3412
        %v3414 = vpop.f32.mrf.mxu0
        %v3415 = vadd.f32 %v3326, %v3414
        %3416 = vmatmul.bf16.gmra.mxu0 %v2978
        %v3417 = vpop.f32.mrf.mxu0
        %v3418 = vadd.f32 %v3329, %v3417
        %v3419 = vpop.f32.mrf.mxu0
        %v3420 = vadd.f32 %v3331, %v3419
        %3421 = vmatmul.bf16.gmra.mxu0 %v2981
        %v3422 = vpop.f32.mrf.mxu0
        %v3423 = vadd.f32 %v3334, %v3422
        %v3424 = vpop.f32.mrf.mxu0
        %v3425 = vadd.f32 %v3336, %v3424
        %3426 = vmatmul.bf16.gmra.mxu0 %v2984
        %v3427 = vpop.f32.mrf.mxu0
        %v3428 = vadd.f32 %v3339, %v3427
        %v3429 = vpop.f32.mrf.mxu0
        %v3430 = vadd.f32 %v3341, %v3429
        %3431 = vmatmul.bf16.gmra.mxu0 %v2987
        %v3432 = vpop.f32.mrf.mxu0
        %v3433 = vadd.f32 %v3344, %v3432
        %v3434 = vpop.f32.mrf.mxu0
        %v3435 = vadd.f32 %v3346, %v3434
        %3436 = vmatmul.bf16.gmra.mxu0 %v2990
        %v3437 = vpop.f32.mrf.mxu0
        %v3438 = vadd.f32 %v3349, %v3437
        %v3439 = vpop.f32.mrf.mxu0
        %v3440 = vadd.f32 %v3351, %v3439
        %3441 = vmatmul.bf16.gmra.mxu0 %v2993
        %v3442 = vpop.f32.mrf.mxu0
        %v3443 = vadd.f32 %v3354, %v3442
        %v3444 = vpop.f32.mrf.mxu0
        %v3445 = vadd.f32 %v3356, %v3444
        %3446 = vmatmul.bf16.gmra.mxu0 %v2996
        %v3447 = vpop.f32.mrf.mxu0
        %v3448 = vadd.f32 %v3359, %v3447
        %v3449 = vpop.f32.mrf.mxu0
        %v3450 = vadd.f32 %v3361, %v3449
        %3451 = vmatmul.bf16.gmra.mxu0 %v2999
        %v3452 = vpop.f32.mrf.mxu0
        %v3453 = vadd.f32 %v3364, %v3452
        %v3454 = vpop.f32.mrf.mxu0
        %v3455 = vadd.f32 %v3366, %v3454
        %3456 = vmatmul.bf16.gmra.mxu0 %v3002
        %v3457 = vpop.f32.mrf.mxu0
        %v3458 = vadd.f32 %v3369, %v3457
        %v3459 = vpop.f32.mrf.mxu0
        %v3460 = vadd.f32 %v3371, %v3459
        %3461 = vdwg.mxu0
        %v3462 = vadd.f32 %v2602, %v3383
        %v3463 = vadd.f32 %v2604, %v3385
        %v3464 = vadd.f32 %v2607, %v3388
        %v3465 = vadd.f32 %v2609, %v3390
        %v3466 = vadd.f32 %v2612, %v3393
        %v3467 = vadd.f32 %v2614, %v3395
        %v3468 = vadd.f32 %v2617, %v3398
        %v3469 = vadd.f32 %v2619, %v3400
        %v3470 = vadd.f32 %v2622, %v3403
        %v3471 = vadd.f32 %v2624, %v3405
        %v3472 = vadd.f32 %v2627, %v3408
        %v3473 = vadd.f32 %v2629, %v3410
        %v3474 = vadd.f32 %v2632, %v3413
        %v3475 = vadd.f32 %v2634, %v3415
        %v3476 = vadd.f32 %v2637, %v3418
        %v3477 = vadd.f32 %v2639, %v3420
        %v3478 = vadd.f32 %v2642, %v3423
        %v3479 = vadd.f32 %v2644, %v3425
        %v3480 = vadd.f32 %v2647, %v3428
        %v3481 = vadd.f32 %v2649, %v3430
        %v3482 = vadd.f32 %v2652, %v3433
        %v3483 = vadd.f32 %v2654, %v3435
        %v3484 = vadd.f32 %v2657, %v3438
        %v3485 = vadd.f32 %v2659, %v3440
        %v3486 = vadd.f32 %v2662, %v3443
        %v3487 = vadd.f32 %v2664, %v3445
        %v3488 = vadd.f32 %v2667, %v3448
        %v3489 = vadd.f32 %v2669, %v3450
        %v3490 = vadd.f32 %v2672, %v3453
        %v3491 = vadd.f32 %v2674, %v3455
        %v3492 = vadd.f32 %v2677, %v3458
        %v3493 = vadd.f32 %v2679, %v3460
        %v3494 = vld [vmem:[%s2] sm:$0x1]
        %v3496 = vperm.slane %v3494, 0
        %v3498 = vmul.f32 %v3462, %v3496
        %v3499 = vmul.f32 %v3463, %v3496
        %v3500 = vmul.f32 %v3464, %v3496
        %v3501 = vmul.f32 %v3465, %v3496
        %v3502 = vmul.f32 %v3466, %v3496
        %v3503 = vmul.f32 %v3467, %v3496
        %v3504 = vmul.f32 %v3468, %v3496
        %v3505 = vmul.f32 %v3469, %v3496
        %v3506 = vmul.f32 %v3470, %v3496
        %v3507 = vmul.f32 %v3471, %v3496
        %v3508 = vmul.f32 %v3472, %v3496
        %v3509 = vmul.f32 %v3473, %v3496
        %v3510 = vmul.f32 %v3474, %v3496
        %v3511 = vmul.f32 %v3475, %v3496
        %v3512 = vmul.f32 %v3476, %v3496
        %v3513 = vmul.f32 %v3477, %v3496
        %v3514 = vmul.f32 %v3478, %v3496
        %v3515 = vmul.f32 %v3479, %v3496
        %v3516 = vmul.f32 %v3480, %v3496
        %v3517 = vmul.f32 %v3481, %v3496
        %v3518 = vmul.f32 %v3482, %v3496
        %v3519 = vmul.f32 %v3483, %v3496
        %v3520 = vmul.f32 %v3484, %v3496
        %v3521 = vmul.f32 %v3485, %v3496
        %v3522 = vmul.f32 %v3486, %v3496
        %v3523 = vmul.f32 %v3487, %v3496
        %v3524 = vmul.f32 %v3488, %v3496
        %v3525 = vmul.f32 %v3489, %v3496
        %v3526 = vmul.f32 %v3490, %v3496
        %v3527 = vmul.f32 %v3491, %v3496
        %v3528 = vmul.f32 %v3492, %v3496
        %v3529 = vmul.f32 %v3493, %v3496
        %v3530 = vld [vmem:[%s3] sm:$0x1]
        %v3532 = vperm.slane %v3530, 0
        %v3534 = vadd.f32 %v3498, %v3532
        %v3535 = vadd.f32 %v3499, %v3532
        %v3536 = vadd.f32 %v3500, %v3532
        %v3537 = vadd.f32 %v3501, %v3532
        %v3538 = vadd.f32 %v3502, %v3532
        %v3539 = vadd.f32 %v3503, %v3532
        %v3540 = vadd.f32 %v3504, %v3532
        %v3541 = vadd.f32 %v3505, %v3532
        %v3542 = vadd.f32 %v3506, %v3532
        %v3543 = vadd.f32 %v3507, %v3532
        %v3544 = vadd.f32 %v3508, %v3532
        %v3545 = vadd.f32 %v3509, %v3532
        %v3546 = vadd.f32 %v3510, %v3532
        %v3547 = vadd.f32 %v3511, %v3532
        %v3548 = vadd.f32 %v3512, %v3532
        %v3549 = vadd.f32 %v3513, %v3532
        %v3550 = vadd.f32 %v3514, %v3532
        %v3551 = vadd.f32 %v3515, %v3532
        %v3552 = vadd.f32 %v3516, %v3532
        %v3553 = vadd.f32 %v3517, %v3532
        %v3554 = vadd.f32 %v3518, %v3532
        %v3555 = vadd.f32 %v3519, %v3532
        %v3556 = vadd.f32 %v3520, %v3532
        %v3557 = vadd.f32 %v3521, %v3532
        %v3558 = vadd.f32 %v3522, %v3532
        %v3559 = vadd.f32 %v3523, %v3532
        %v3560 = vadd.f32 %v3524, %v3532
        %v3561 = vadd.f32 %v3525, %v3532
        %v3562 = vadd.f32 %v3526, %v3532
        %v3563 = vadd.f32 %v3527, %v3532
        %v3564 = vadd.f32 %v3528, %v3532
        %v3565 = vadd.f32 %v3529, %v3532
        %v3566 = vmax.f32 %v3534, 0.0
        %v3567 = vmax.f32 %v3535, 0.0
        %v3568 = vmax.f32 %v3536, 0.0
        %v3569 = vmax.f32 %v3537, 0.0
        %v3570 = vmax.f32 %v3538, 0.0
        %v3571 = vmax.f32 %v3539, 0.0
        %v3572 = vmax.f32 %v3540, 0.0
        %v3573 = vmax.f32 %v3541, 0.0
        %v3574 = vmax.f32 %v3542, 0.0
        %v3575 = vmax.f32 %v3543, 0.0
        %v3576 = vmax.f32 %v3544, 0.0
        %v3577 = vmax.f32 %v3545, 0.0
        %v3578 = vmax.f32 %v3546, 0.0
        %v3579 = vmax.f32 %v3547, 0.0
        %v3580 = vmax.f32 %v3548, 0.0
        %v3581 = vmax.f32 %v3549, 0.0
        %v3582 = vmax.f32 %v3550, 0.0
        %v3583 = vmax.f32 %v3551, 0.0
        %v3584 = vmax.f32 %v3552, 0.0
        %v3585 = vmax.f32 %v3553, 0.0
        %v3586 = vmax.f32 %v3554, 0.0
        %v3587 = vmax.f32 %v3555, 0.0
        %v3588 = vmax.f32 %v3556, 0.0
        %v3589 = vmax.f32 %v3557, 0.0
        %v3590 = vmax.f32 %v3558, 0.0
        %v3591 = vmax.f32 %v3559, 0.0
        %v3592 = vmax.f32 %v3560, 0.0
        %v3593 = vmax.f32 %v3561, 0.0
        %v3594 = vmax.f32 %v3562, 0.0
        %v3595 = vmax.f32 %v3563, 0.0
        %v3596 = vmax.f32 %v3564, 0.0
        %v3597 = vmax.f32 %v3565, 0.0
        %v3598 = vpack.c.bf16 %v3566, %v3566
        %v3599 = vpack.c.bf16 %v3567, %v3567
        %v3600 = vpack.c.bf16 %v3568, %v3568
        %v3601 = vpack.c.bf16 %v3569, %v3569
        %v3602 = vpack.c.bf16 %v3570, %v3570
        %v3603 = vpack.c.bf16 %v3571, %v3571
        %v3604 = vpack.c.bf16 %v3572, %v3572
        %v3605 = vpack.c.bf16 %v3573, %v3573
        %v3606 = vpack.c.bf16 %v3574, %v3574
        %v3607 = vpack.c.bf16 %v3575, %v3575
        %v3608 = vpack.c.bf16 %v3576, %v3576
        %v3609 = vpack.c.bf16 %v3577, %v3577
        %v3610 = vpack.c.bf16 %v3578, %v3578
        %v3611 = vpack.c.bf16 %v3579, %v3579
        %v3612 = vpack.c.bf16 %v3580, %v3580
        %v3613 = vpack.c.bf16 %v3581, %v3581
        %v3614 = vpack.c.bf16 %v3582, %v3582
        %v3615 = vpack.c.bf16 %v3583, %v3583
        %v3616 = vpack.c.bf16 %v3584, %v3584
        %v3617 = vpack.c.bf16 %v3585, %v3585
        %v3618 = vpack.c.bf16 %v3586, %v3586
        %v3619 = vpack.c.bf16 %v3587, %v3587
        %v3620 = vpack.c.bf16 %v3588, %v3588
        %v3621 = vpack.c.bf16 %v3589, %v3589
        %v3622 = vpack.c.bf16 %v3590, %v3590
        %v3623 = vpack.c.bf16 %v3591, %v3591
        %v3624 = vpack.c.bf16 %v3592, %v3592
        %v3625 = vpack.c.bf16 %v3593, %v3593
        %v3626 = vpack.c.bf16 %v3594, %v3594
        %v3627 = vpack.c.bf16 %v3595, %v3595
        %v3628 = vpack.c.bf16 %v3596, %v3596
        %v3629 = vpack.c.bf16 %v3597, %v3597
        %v3631 = vshrl.u32 %v3598, 16
        %v3633 = vrot.slane %v3631, 7
        %v3634 = vshll.u32 %v3598, 16
        %v3636 = vor.u32 %v3633, %v3634
        %v3637 = vrot.slane %v3633, 4
        %v3639 = vshrl.u32 %v3599, 16
        %v3641 = vrot.slane %v3639, 7
        %v3642 = vshll.u32 %v3599, 16
        %v3644 = vor.u32 %v3641, %v3642
        %v3645 = vsel %vm489, %v3637, %v3644
        %v3647 = vshrl.u32 %v3600, 16
        %v3649 = vrot.slane %v3647, 7
        %v3650 = vshll.u32 %v3600, 16
        %v3652 = vor.u32 %v3649, %v3650
        %v3653 = vrot.slane %v3649, 4
        %v3655 = vshrl.u32 %v3601, 16
        %v3657 = vrot.slane %v3655, 7
        %v3658 = vshll.u32 %v3601, 16
        %v3660 = vor.u32 %v3657, %v3658
        %v3661 = vsel %vm489, %v3653, %v3660
        %v3663 = vshrl.u32 %v3602, 16
        %v3665 = vrot.slane %v3663, 7
        %v3666 = vshll.u32 %v3602, 16
        %v3668 = vor.u32 %v3665, %v3666
        %v3669 = vrot.slane %v3665, 4
        %v3671 = vshrl.u32 %v3603, 16
        %v3673 = vrot.slane %v3671, 7
        %v3674 = vshll.u32 %v3603, 16
        %v3676 = vor.u32 %v3673, %v3674
        %v3677 = vsel %vm489, %v3669, %v3676
        %v3679 = vshrl.u32 %v3604, 16
        %v3681 = vrot.slane %v3679, 7
        %v3682 = vshll.u32 %v3604, 16
        %v3684 = vor.u32 %v3681, %v3682
        %v3685 = vrot.slane %v3681, 4
        %v3687 = vshrl.u32 %v3605, 16
        %v3689 = vrot.slane %v3687, 7
        %v3690 = vshll.u32 %v3605, 16
        %v3692 = vor.u32 %v3689, %v3690
        %v3693 = vsel %vm489, %v3685, %v3692
        %v3695 = vshrl.u32 %v3606, 16
        %v3697 = vrot.slane %v3695, 7
        %v3698 = vshll.u32 %v3606, 16
        %v3700 = vor.u32 %v3697, %v3698
        %v3701 = vrot.slane %v3697, 4
        %v3703 = vshrl.u32 %v3607, 16
        %v3705 = vrot.slane %v3703, 7
        %v3706 = vshll.u32 %v3607, 16
        %v3708 = vor.u32 %v3705, %v3706
        %v3709 = vsel %vm489, %v3701, %v3708
        %v3711 = vshrl.u32 %v3608, 16
        %v3713 = vrot.slane %v3711, 7
        %v3714 = vshll.u32 %v3608, 16
        %v3716 = vor.u32 %v3713, %v3714
        %v3717 = vrot.slane %v3713, 4
        %v3719 = vshrl.u32 %v3609, 16
        %v3721 = vrot.slane %v3719, 7
        %v3722 = vshll.u32 %v3609, 16
        %v3724 = vor.u32 %v3721, %v3722
        %v3725 = vsel %vm489, %v3717, %v3724
        %v3727 = vshrl.u32 %v3610, 16
        %v3729 = vrot.slane %v3727, 7
        %v3730 = vshll.u32 %v3610, 16
        %v3732 = vor.u32 %v3729, %v3730
        %v3733 = vrot.slane %v3729, 4
        %v3735 = vshrl.u32 %v3611, 16
        %v3737 = vrot.slane %v3735, 7
        %v3738 = vshll.u32 %v3611, 16
        %v3740 = vor.u32 %v3737, %v3738
        %v3741 = vsel %vm489, %v3733, %v3740
        %v3743 = vshrl.u32 %v3612, 16
        %v3745 = vrot.slane %v3743, 7
        %v3746 = vshll.u32 %v3612, 16
        %v3748 = vor.u32 %v3745, %v3746
        %v3749 = vrot.slane %v3745, 4
        %v3751 = vshrl.u32 %v3613, 16
        %v3753 = vrot.slane %v3751, 7
        %v3754 = vshll.u32 %v3613, 16
        %v3756 = vor.u32 %v3753, %v3754
        %v3757 = vsel %vm489, %v3749, %v3756
        %v3759 = vshrl.u32 %v3614, 16
        %v3761 = vrot.slane %v3759, 7
        %v3762 = vshll.u32 %v3614, 16
        %v3764 = vor.u32 %v3761, %v3762
        %v3765 = vrot.slane %v3761, 4
        %v3767 = vshrl.u32 %v3615, 16
        %v3769 = vrot.slane %v3767, 7
        %v3770 = vshll.u32 %v3615, 16
        %v3772 = vor.u32 %v3769, %v3770
        %v3773 = vsel %vm489, %v3765, %v3772
        %v3775 = vshrl.u32 %v3616, 16
        %v3777 = vrot.slane %v3775, 7
        %v3778 = vshll.u32 %v3616, 16
        %v3780 = vor.u32 %v3777, %v3778
        %v3781 = vrot.slane %v3777, 4
        %v3783 = vshrl.u32 %v3617, 16
        %v3785 = vrot.slane %v3783, 7
        %v3786 = vshll.u32 %v3617, 16
        %v3788 = vor.u32 %v3785, %v3786
        %v3789 = vsel %vm489, %v3781, %v3788
        %v3791 = vshrl.u32 %v3618, 16
        %v3793 = vrot.slane %v3791, 7
        %v3794 = vshll.u32 %v3618, 16
        %v3796 = vor.u32 %v3793, %v3794
        %v3797 = vrot.slane %v3793, 4
        %v3799 = vshrl.u32 %v3619, 16
        %v3801 = vrot.slane %v3799, 7
        %v3802 = vshll.u32 %v3619, 16
        %v3804 = vor.u32 %v3801, %v3802
        %v3805 = vsel %vm489, %v3797, %v3804
        %v3807 = vshrl.u32 %v3620, 16
        %v3809 = vrot.slane %v3807, 7
        %v3810 = vshll.u32 %v3620, 16
        %v3812 = vor.u32 %v3809, %v3810
        %v3813 = vrot.slane %v3809, 4
        %v3815 = vshrl.u32 %v3621, 16
        %v3817 = vrot.slane %v3815, 7
        %v3818 = vshll.u32 %v3621, 16
        %v3820 = vor.u32 %v3817, %v3818
        %v3821 = vsel %vm489, %v3813, %v3820
        %v3823 = vshrl.u32 %v3622, 16
        %v3825 = vrot.slane %v3823, 7
        %v3826 = vshll.u32 %v3622, 16
        %v3828 = vor.u32 %v3825, %v3826
        %v3829 = vrot.slane %v3825, 4
        %v3831 = vshrl.u32 %v3623, 16
        %v3833 = vrot.slane %v3831, 7
        %v3834 = vshll.u32 %v3623, 16
        %v3836 = vor.u32 %v3833, %v3834
        %v3837 = vsel %vm489, %v3829, %v3836
        %v3839 = vshrl.u32 %v3624, 16
        %v3841 = vrot.slane %v3839, 7
        %v3842 = vshll.u32 %v3624, 16
        %v3844 = vor.u32 %v3841, %v3842
        %v3845 = vrot.slane %v3841, 4
        %v3847 = vshrl.u32 %v3625, 16
        %v3849 = vrot.slane %v3847, 7
        %v3850 = vshll.u32 %v3625, 16
        %v3852 = vor.u32 %v3849, %v3850
        %v3853 = vsel %vm489, %v3845, %v3852
        %v3855 = vshrl.u32 %v3626, 16
        %v3857 = vrot.slane %v3855, 7
        %v3858 = vshll.u32 %v3626, 16
        %v3860 = vor.u32 %v3857, %v3858
        %v3861 = vrot.slane %v3857, 4
        %v3863 = vshrl.u32 %v3627, 16
        %v3865 = vrot.slane %v3863, 7
        %v3866 = vshll.u32 %v3627, 16
        %v3868 = vor.u32 %v3865, %v3866
        %v3869 = vsel %vm489, %v3861, %v3868
        %v3871 = vshrl.u32 %v3628, 16
        %v3873 = vrot.slane %v3871, 7
        %v3874 = vshll.u32 %v3628, 16
        %v3876 = vor.u32 %v3873, %v3874
        %v3877 = vrot.slane %v3873, 4
        %v3879 = vshrl.u32 %v3629, 16
        %v3881 = vrot.slane %v3879, 7
        %v3882 = vshll.u32 %v3629, 16
        %v3884 = vor.u32 %v3881, %v3882
        %v3885 = vsel %vm489, %v3877, %v3884
        %v3918 = vld [vmem:[%s778] sm:$0xf]
        %v3919 = vsel %vm781, %v3636, %v3918
        %3920 = vst [vmem:[%s778] sm:$0xf] %v3919
        %3921 = vst [vmem:[%s778 + $0xc] sm:$0xf] %v3645
        %v3922 = vld [vmem:[%s778 + $0x18] sm:$0xf]
        %v3923 = vsel %vm781, %v3652, %v3922
        %3924 = vst [vmem:[%s778 + $0x18] sm:$0xf] %v3923
        %3925 = vst [vmem:[%s778 + $0x24] sm:$0xf] %v3661
        %v3926 = vld [vmem:[%s778 + $0x30] sm:$0xf]
        %v3927 = vsel %vm781, %v3668, %v3926
        %3928 = vst [vmem:[%s778 + $0x30] sm:$0xf] %v3927
        %3929 = vst [vmem:[%s778 + $0x3c] sm:$0xf] %v3677
        %v3930 = vld [vmem:[%s778 + $0x48] sm:$0xf]
        %v3931 = vsel %vm781, %v3684, %v3930
        %3932 = vst [vmem:[%s778 + $0x48] sm:$0xf] %v3931
        %3933 = vst [vmem:[%s778 + $0x54] sm:$0xf] %v3693
        %v3934 = vld [vmem:[%s778 + $0x60] sm:$0xf]
        %v3935 = vsel %vm781, %v3700, %v3934
        %3936 = vst [vmem:[%s778 + $0x60] sm:$0xf] %v3935
        %3937 = vst [vmem:[%s778 + $0x6c] sm:$0xf] %v3709
        %v3938 = vld [vmem:[%s778 + $0x78] sm:$0xf]
        %v3939 = vsel %vm781, %v3716, %v3938
        %3940 = vst [vmem:[%s778 + $0x78] sm:$0xf] %v3939
        %3941 = vst [vmem:[%s778 + $0x84] sm:$0xf] %v3725
        %v3942 = vld [vmem:[%s778 + $0x90] sm:$0xf]
        %v3943 = vsel %vm781, %v3732, %v3942
        %3944 = vst [vmem:[%s778 + $0x90] sm:$0xf] %v3943
        %3945 = vst [vmem:[%s778 + $0x9c] sm:$0xf] %v3741
        %v3946 = vld [vmem:[%s778 + $0xa8] sm:$0xf]
        %v3947 = vsel %vm781, %v3748, %v3946
        %3948 = vst [vmem:[%s778 + $0xa8] sm:$0xf] %v3947
        %3949 = vst [vmem:[%s778 + $0xb4] sm:$0xf] %v3757
        %v3950 = vld [vmem:[%s778 + $0xc0] sm:$0xf]
        %v3951 = vsel %vm781, %v3764, %v3950
        %3952 = vst [vmem:[%s778 + $0xc0] sm:$0xf] %v3951
        %3953 = vst [vmem:[%s778 + $0xcc] sm:$0xf] %v3773
        %v3954 = vld [vmem:[%s778 + $0xd8] sm:$0xf]
        %v3955 = vsel %vm781, %v3780, %v3954
        %3956 = vst [vmem:[%s778 + $0xd8] sm:$0xf] %v3955
        %3957 = vst [vmem:[%s778 + $0xe4] sm:$0xf] %v3789
        %v3958 = vld [vmem:[%s778 + $0xf0] sm:$0xf]
        %v3959 = vsel %vm781, %v3796, %v3958
        %3960 = vst [vmem:[%s778 + $0xf0] sm:$0xf] %v3959
        %3961 = vst [vmem:[%s778 + $0xfc] sm:$0xf] %v3805
        %v3962 = vld [vmem:[%s778 + $0x108] sm:$0xf]
        %v3963 = vsel %vm781, %v3812, %v3962
        %3964 = vst [vmem:[%s778 + $0x108] sm:$0xf] %v3963
        %3965 = vst [vmem:[%s778 + $0x114] sm:$0xf] %v3821
        %v3966 = vld [vmem:[%s778 + $0x120] sm:$0xf]
        %v3967 = vsel %vm781, %v3828, %v3966
        %3968 = vst [vmem:[%s778 + $0x120] sm:$0xf] %v3967
        %3969 = vst [vmem:[%s778 + $0x12c] sm:$0xf] %v3837
        %v3970 = vld [vmem:[%s778 + $0x138] sm:$0xf]
        %v3971 = vsel %vm781, %v3844, %v3970
        %3972 = vst [vmem:[%s778 + $0x138] sm:$0xf] %v3971
        %3973 = vst [vmem:[%s778 + $0x144] sm:$0xf] %v3853
        %v3974 = vld [vmem:[%s778 + $0x150] sm:$0xf]
        %v3975 = vsel %vm781, %v3860, %v3974
        %3976 = vst [vmem:[%s778 + $0x150] sm:$0xf] %v3975
        %3977 = vst [vmem:[%s778 + $0x15c] sm:$0xf] %v3869
        %v3978 = vld [vmem:[%s778 + $0x168] sm:$0xf]
        %v3979 = vsel %vm781, %v3876, %v3978
        %3980 = vst [vmem:[%s778 + $0x168] sm:$0xf] %v3979
        %3981 = vst [vmem:[%s778 + $0x174] sm:$0xf] %v3885
        %3982 = vst [vmem:[%s778 + $0x4] sm:$0xf] %v3598
        %3983 = vst [vmem:[%s778 + $0x10] sm:$0xf] %v3599
        %3984 = vst [vmem:[%s778 + $0x1c] sm:$0xf] %v3600
        %3985 = vst [vmem:[%s778 + $0x28] sm:$0xf] %v3601
        %3986 = vst [vmem:[%s778 + $0x34] sm:$0xf] %v3602
        %3987 = vst [vmem:[%s778 + $0x40] sm:$0xf] %v3603
        %3988 = vst [vmem:[%s778 + $0x4c] sm:$0xf] %v3604
        %3989 = vst [vmem:[%s778 + $0x58] sm:$0xf] %v3605
        %3990 = vst [vmem:[%s778 + $0x64] sm:$0xf] %v3606
        %3991 = vst [vmem:[%s778 + $0x70] sm:$0xf] %v3607
        %3992 = vst [vmem:[%s778 + $0x7c] sm:$0xf] %v3608
        %3993 = vst [vmem:[%s778 + $0x88] sm:$0xf] %v3609
        %3994 = vst [vmem:[%s778 + $0x94] sm:$0xf] %v3610
        %3995 = vst [vmem:[%s778 + $0xa0] sm:$0xf] %v3611
        %3996 = vst [vmem:[%s778 + $0xac] sm:$0xf] %v3612
        %3997 = vst [vmem:[%s778 + $0xb8] sm:$0xf] %v3613
        %3998 = vst [vmem:[%s778 + $0xc4] sm:$0xf] %v3614
        %3999 = vst [vmem:[%s778 + $0xd0] sm:$0xf] %v3615
        %4000 = vst [vmem:[%s778 + $0xdc] sm:$0xf] %v3616
        %4001 = vst [vmem:[%s778 + $0xe8] sm:$0xf] %v3617
        %4002 = vst [vmem:[%s778 + $0xf4] sm:$0xf] %v3618
        %4003 = vst [vmem:[%s778 + $0x100] sm:$0xf] %v3619
        %4004 = vst [vmem:[%s778 + $0x10c] sm:$0xf] %v3620
        %4005 = vst [vmem:[%s778 + $0x118] sm:$0xf] %v3621
        %4006 = vst [vmem:[%s778 + $0x124] sm:$0xf] %v3622
        %4007 = vst [vmem:[%s778 + $0x130] sm:$0xf] %v3623
        %4008 = vst [vmem:[%s778 + $0x13c] sm:$0xf] %v3624
        %4009 = vst [vmem:[%s778 + $0x148] sm:$0xf] %v3625
        %4010 = vst [vmem:[%s778 + $0x154] sm:$0xf] %v3626
        %4011 = vst [vmem:[%s778 + $0x160] sm:$0xf] %v3627
        %4012 = vst [vmem:[%s778 + $0x16c] sm:$0xf] %v3628
        %4013 = vst [vmem:[%s778 + $0x178] sm:$0xf] %v3629
        %v4014 = vrot.slane %v3631, 4
        %v4015 = vrot.slane %v3634, 5
        %v4016 = vor.u32 %v4014, %v4015
        %v4017 = vrot.slane %v4016, 4
        %v4018 = vrot.slane %v3642, 5
        %v4019 = vsel %vm880, %v4017, %v4018
        %v4020 = vrot.slane %v3639, 4
        %v4021 = vor.u32 %v4020, %v4018
        %v4022 = vrot.slane %v4021, 4
        %v4023 = vrot.slane %v3647, 4
        %v4024 = vrot.slane %v3650, 5
        %v4025 = vor.u32 %v4023, %v4024
        %v4026 = vrot.slane %v4025, 4
        %v4027 = vrot.slane %v3658, 5
        %v4028 = vsel %vm880, %v4026, %v4027
        %v4029 = vrot.slane %v3655, 4
        %v4030 = vor.u32 %v4029, %v4027
        %v4031 = vrot.slane %v4030, 4
        %v4032 = vrot.slane %v3663, 4
        %v4033 = vrot.slane %v3666, 5
        %v4034 = vor.u32 %v4032, %v4033
        %v4035 = vrot.slane %v4034, 4
        %v4036 = vrot.slane %v3674, 5
        %v4037 = vsel %vm880, %v4035, %v4036
        %v4038 = vrot.slane %v3671, 4
        %v4039 = vor.u32 %v4038, %v4036
        %v4040 = vrot.slane %v4039, 4
        %v4041 = vrot.slane %v3679, 4
        %v4042 = vrot.slane %v3682, 5
        %v4043 = vor.u32 %v4041, %v4042
        %v4044 = vrot.slane %v4043, 4
        %v4045 = vrot.slane %v3690, 5
        %v4046 = vsel %vm880, %v4044, %v4045
        %v4047 = vrot.slane %v3687, 4
        %v4048 = vor.u32 %v4047, %v4045
        %v4049 = vrot.slane %v4048, 4
        %v4050 = vrot.slane %v3695, 4
        %v4051 = vrot.slane %v3698, 5
        %v4052 = vor.u32 %v4050, %v4051
        %v4053 = vrot.slane %v4052, 4
        %v4054 = vrot.slane %v3706, 5
        %v4055 = vsel %vm880, %v4053, %v4054
        %v4056 = vrot.slane %v3703, 4
        %v4057 = vor.u32 %v4056, %v4054
        %v4058 = vrot.slane %v4057, 4
        %v4059 = vrot.slane %v3711, 4
        %v4060 = vrot.slane %v3714, 5
        %v4061 = vor.u32 %v4059, %v4060
        %v4062 = vrot.slane %v4061, 4
        %v4063 = vrot.slane %v3722, 5
        %v4064 = vsel %vm880, %v4062, %v4063
        %v4065 = vrot.slane %v3719, 4
        %v4066 = vor.u32 %v4065, %v4063
        %v4067 = vrot.slane %v4066, 4
        %v4068 = vrot.slane %v3727, 4
        %v4069 = vrot.slane %v3730, 5
        %v4070 = vor.u32 %v4068, %v4069
        %v4071 = vrot.slane %v4070, 4
        %v4072 = vrot.slane %v3738, 5
        %v4073 = vsel %vm880, %v4071, %v4072
        %v4074 = vrot.slane %v3735, 4
        %v4075 = vor.u32 %v4074, %v4072
        %v4076 = vrot.slane %v4075, 4
        %v4077 = vrot.slane %v3743, 4
        %v4078 = vrot.slane %v3746, 5
        %v4079 = vor.u32 %v4077, %v4078
        %v4080 = vrot.slane %v4079, 4
        %v4081 = vrot.slane %v3754, 5
        %v4082 = vsel %vm880, %v4080, %v4081
        %v4083 = vrot.slane %v3751, 4
        %v4084 = vor.u32 %v4083, %v4081
        %v4085 = vrot.slane %v4084, 4
        %v4086 = vrot.slane %v3759, 4
        %v4087 = vrot.slane %v3762, 5
        %v4088 = vor.u32 %v4086, %v4087
        %v4089 = vrot.slane %v4088, 4
        %v4090 = vrot.slane %v3770, 5
        %v4091 = vsel %vm880, %v4089, %v4090
        %v4092 = vrot.slane %v3767, 4
        %v4093 = vor.u32 %v4092, %v4090
        %v4094 = vrot.slane %v4093, 4
        %v4095 = vrot.slane %v3775, 4
        %v4096 = vrot.slane %v3778, 5
        %v4097 = vor.u32 %v4095, %v4096
        %v4098 = vrot.slane %v4097, 4
        %v4099 = vrot.slane %v3786, 5
        %v4100 = vsel %vm880, %v4098, %v4099
        %v4101 = vrot.slane %v3783, 4
        %v4102 = vor.u32 %v4101, %v4099
        %v4103 = vrot.slane %v4102, 4
        %v4104 = vrot.slane %v3791, 4
        %v4105 = vrot.slane %v3794, 5
        %v4106 = vor.u32 %v4104, %v4105
        %v4107 = vrot.slane %v4106, 4
        %v4108 = vrot.slane %v3802, 5
        %v4109 = vsel %vm880, %v4107, %v4108
        %v4110 = vrot.slane %v3799, 4
        %v4111 = vor.u32 %v4110, %v4108
        %v4112 = vrot.slane %v4111, 4
        %v4113 = vrot.slane %v3807, 4
        %v4114 = vrot.slane %v3810, 5
        %v4115 = vor.u32 %v4113, %v4114
        %v4116 = vrot.slane %v4115, 4
        %v4117 = vrot.slane %v3818, 5
        %v4118 = vsel %vm880, %v4116, %v4117
        %v4119 = vrot.slane %v3815, 4
        %v4120 = vor.u32 %v4119, %v4117
        %v4121 = vrot.slane %v4120, 4
        %v4122 = vrot.slane %v3823, 4
        %v4123 = vrot.slane %v3826, 5
        %v4124 = vor.u32 %v4122, %v4123
        %v4125 = vrot.slane %v4124, 4
        %v4126 = vrot.slane %v3834, 5
        %v4127 = vsel %vm880, %v4125, %v4126
        %v4128 = vrot.slane %v3831, 4
        %v4129 = vor.u32 %v4128, %v4126
        %v4130 = vrot.slane %v4129, 4
        %v4131 = vrot.slane %v3839, 4
        %v4132 = vrot.slane %v3842, 5
        %v4133 = vor.u32 %v4131, %v4132
        %v4134 = vrot.slane %v4133, 4
        %v4135 = vrot.slane %v3850, 5
        %v4136 = vsel %vm880, %v4134, %v4135
        %v4137 = vrot.slane %v3847, 4
        %v4138 = vor.u32 %v4137, %v4135
        %v4139 = vrot.slane %v4138, 4
        %v4140 = vrot.slane %v3855, 4
        %v4141 = vrot.slane %v3858, 5
        %v4142 = vor.u32 %v4140, %v4141
        %v4143 = vrot.slane %v4142, 4
        %v4144 = vrot.slane %v3866, 5
        %v4145 = vsel %vm880, %v4143, %v4144
        %v4146 = vrot.slane %v3863, 4
        %v4147 = vor.u32 %v4146, %v4144
        %v4148 = vrot.slane %v4147, 4
        %v4149 = vrot.slane %v3871, 4
        %v4150 = vrot.slane %v3874, 5
        %v4151 = vor.u32 %v4149, %v4150
        %v4152 = vrot.slane %v4151, 4
        %v4153 = vrot.slane %v3882, 5
        %v4154 = vsel %vm880, %v4152, %v4153
        %v4155 = vrot.slane %v3879, 4
        %v4156 = vor.u32 %v4155, %v4153
        %v4157 = vrot.slane %v4156, 4
        %4190 = vst [vmem:[%s778 + $0x8] sm:$0xf] %v4019
        %v4191 = vld [vmem:[%s778 + $0x14] sm:$0xf]
        %v4192 = vsel %vm1058, %v4022, %v4191
        %4193 = vst [vmem:[%s778 + $0x14] sm:$0xf] %v4192
        %4194 = vst [vmem:[%s778 + $0x20] sm:$0xf] %v4028
        %v4195 = vld [vmem:[%s778 + $0x2c] sm:$0xf]
        %v4196 = vsel %vm1058, %v4031, %v4195
        %4197 = vst [vmem:[%s778 + $0x2c] sm:$0xf] %v4196
        %4198 = vst [vmem:[%s778 + $0x38] sm:$0xf] %v4037
        %v4199 = vld [vmem:[%s778 + $0x44] sm:$0xf]
        %v4200 = vsel %vm1058, %v4040, %v4199
        %4201 = vst [vmem:[%s778 + $0x44] sm:$0xf] %v4200
        %4202 = vst [vmem:[%s778 + $0x50] sm:$0xf] %v4046
        %v4203 = vld [vmem:[%s778 + $0x5c] sm:$0xf]
        %v4204 = vsel %vm1058, %v4049, %v4203
        %4205 = vst [vmem:[%s778 + $0x5c] sm:$0xf] %v4204
        %4206 = vst [vmem:[%s778 + $0x68] sm:$0xf] %v4055
        %v4207 = vld [vmem:[%s778 + $0x74] sm:$0xf]
        %v4208 = vsel %vm1058, %v4058, %v4207
        %4209 = vst [vmem:[%s778 + $0x74] sm:$0xf] %v4208
        %4210 = vst [vmem:[%s778 + $0x80] sm:$0xf] %v4064
        %v4211 = vld [vmem:[%s778 + $0x8c] sm:$0xf]
        %v4212 = vsel %vm1058, %v4067, %v4211
        %4213 = vst [vmem:[%s778 + $0x8c] sm:$0xf] %v4212
        %4214 = vst [vmem:[%s778 + $0x98] sm:$0xf] %v4073
        %v4215 = vld [vmem:[%s778 + $0xa4] sm:$0xf]
        %v4216 = vsel %vm1058, %v4076, %v4215
        %4217 = vst [vmem:[%s778 + $0xa4] sm:$0xf] %v4216
        %4218 = vst [vmem:[%s778 + $0xb0] sm:$0xf] %v4082
        %v4219 = vld [vmem:[%s778 + $0xbc] sm:$0xf]
        %v4220 = vsel %vm1058, %v4085, %v4219
        %4221 = vst [vmem:[%s778 + $0xbc] sm:$0xf] %v4220
        %4222 = vst [vmem:[%s778 + $0xc8] sm:$0xf] %v4091
        %v4223 = vld [vmem:[%s778 + $0xd4] sm:$0xf]
        %v4224 = vsel %vm1058, %v4094, %v4223
        %4225 = vst [vmem:[%s778 + $0xd4] sm:$0xf] %v4224
        %4226 = vst [vmem:[%s778 + $0xe0] sm:$0xf] %v4100
        %v4227 = vld [vmem:[%s778 + $0xec] sm:$0xf]
        %v4228 = vsel %vm1058, %v4103, %v4227
        %4229 = vst [vmem:[%s778 + $0xec] sm:$0xf] %v4228
        %4230 = vst [vmem:[%s778 + $0xf8] sm:$0xf] %v4109
        %v4231 = vld [vmem:[%s778 + $0x104] sm:$0xf]
        %v4232 = vsel %vm1058, %v4112, %v4231
        %4233 = vst [vmem:[%s778 + $0x104] sm:$0xf] %v4232
        %4234 = vst [vmem:[%s778 + $0x110] sm:$0xf] %v4118
        %v4235 = vld [vmem:[%s778 + $0x11c] sm:$0xf]
        %v4236 = vsel %vm1058, %v4121, %v4235
        %4237 = vst [vmem:[%s778 + $0x11c] sm:$0xf] %v4236
        %4238 = vst [vmem:[%s778 + $0x128] sm:$0xf] %v4127
        %v4239 = vld [vmem:[%s778 + $0x134] sm:$0xf]
        %v4240 = vsel %vm1058, %v4130, %v4239
        %4241 = vst [vmem:[%s778 + $0x134] sm:$0xf] %v4240
        %4242 = vst [vmem:[%s778 + $0x140] sm:$0xf] %v4136
        %v4243 = vld [vmem:[%s778 + $0x14c] sm:$0xf]
        %v4244 = vsel %vm1058, %v4139, %v4243
        %4245 = vst [vmem:[%s778 + $0x14c] sm:$0xf] %v4244
        %4246 = vst [vmem:[%s778 + $0x158] sm:$0xf] %v4145
        %v4247 = vld [vmem:[%s778 + $0x164] sm:$0xf]
        %v4248 = vsel %vm1058, %v4148, %v4247
        %4249 = vst [vmem:[%s778 + $0x164] sm:$0xf] %v4248
        %4250 = vst [vmem:[%s778 + $0x170] sm:$0xf] %v4154
        %v4251 = vld [vmem:[%s778 + $0x17c] sm:$0xf]
        %v4252 = vsel %vm1058, %v4157, %v4251
        %4253 = vst [vmem:[%s778 + $0x17c] sm:$0xf] %v4252
        %v4254 = vld [vmem:[#allocation2] sm:$0xff]
        %v4255 = vld [vmem:[#allocation2 + $0x8] sm:$0xf]
        %v4256 = vld [vmem:[#allocation2 + $0xc] sm:$0xff]
        %v4257 = vld [vmem:[#allocation2 + $0x14] sm:$0xf]
        %v4258 = vld [vmem:[#allocation2 + $0x18] sm:$0xff]
        %v4259 = vld [vmem:[#allocation2 + $0x20] sm:$0xf]
        %v4260 = vld [vmem:[#allocation2 + $0x24] sm:$0xff]
        %v4261 = vld [vmem:[#allocation2 + $0x2c] sm:$0xf]
        %v4262 = vld [vmem:[#allocation2 + $0x30] sm:$0xff]
        %v4263 = vld [vmem:[#allocation2 + $0x38] sm:$0xf]
        %v4264 = vld [vmem:[#allocation2 + $0x3c] sm:$0xff]
        %v4265 = vld [vmem:[#allocation2 + $0x44] sm:$0xf]
        %v4266 = vld [vmem:[#allocation2 + $0x48] sm:$0xff]
        %v4267 = vld [vmem:[#allocation2 + $0x50] sm:$0xf]
        %v4268 = vld [vmem:[#allocation2 + $0x54] sm:$0xff]
        %v4269 = vld [vmem:[#allocation2 + $0x5c] sm:$0xf]
        %v4270 = vld [vmem:[#allocation2 + $0x60] sm:$0xff]
        %v4271 = vld [vmem:[#allocation2 + $0x68] sm:$0xf]
        %v4272 = vld [vmem:[#allocation2 + $0x6c] sm:$0xff]
        %v4273 = vld [vmem:[#allocation2 + $0x74] sm:$0xf]
        %v4274 = vld [vmem:[#allocation2 + $0x78] sm:$0xff]
        %v4275 = vld [vmem:[#allocation2 + $0x80] sm:$0xf]
        %v4276 = vld [vmem:[#allocation2 + $0x84] sm:$0xff]
        %v4277 = vld [vmem:[#allocation2 + $0x8c] sm:$0xf]
        %v4278 = vld [vmem:[#allocation2 + $0x90] sm:$0xff]
        %v4279 = vld [vmem:[#allocation2 + $0x98] sm:$0xf]
        %v4280 = vld [vmem:[#allocation2 + $0x9c] sm:$0xff]
        %v4281 = vld [vmem:[#allocation2 + $0xa4] sm:$0xf]
        %v4282 = vld [vmem:[#allocation2 + $0xa8] sm:$0xff]
        %v4283 = vld [vmem:[#allocation2 + $0xb0] sm:$0xf]
        %v4284 = vld [vmem:[#allocation2 + $0xb4] sm:$0xff]
        %v4285 = vld [vmem:[#allocation2 + $0xbc] sm:$0xf]
        %v4286 = vld [vmem:[#allocation2 + $0xc0] sm:$0xff]
        %v4287 = vld [vmem:[#allocation2 + $0xc8] sm:$0xf]
        %v4288 = vld [vmem:[#allocation2 + $0xcc] sm:$0xff]
        %v4289 = vld [vmem:[#allocation2 + $0xd4] sm:$0xf]
        %v4290 = vld [vmem:[#allocation2 + $0xd8] sm:$0xff]
        %v4291 = vld [vmem:[#allocation2 + $0xe0] sm:$0xf]
        %v4292 = vld [vmem:[#allocation2 + $0xe4] sm:$0xff]
        %v4293 = vld [vmem:[#allocation2 + $0xec] sm:$0xf]
        %v4294 = vld [vmem:[#allocation2 + $0xf0] sm:$0xff]
        %v4295 = vld [vmem:[#allocation2 + $0xf8] sm:$0xf]
        %v4296 = vld [vmem:[#allocation2 + $0xfc] sm:$0xff]
        %v4297 = vld [vmem:[#allocation2 + $0x104] sm:$0xf]
        %v4298 = vld [vmem:[#allocation2 + $0x108] sm:$0xff]
        %v4299 = vld [vmem:[#allocation2 + $0x110] sm:$0xf]
        %v4300 = vld [vmem:[#allocation2 + $0x114] sm:$0xff]
        %v4301 = vld [vmem:[#allocation2 + $0x11c] sm:$0xf]
        %v4302 = vld [vmem:[#allocation2 + $0x120] sm:$0xff]
        %v4303 = vld [vmem:[#allocation2 + $0x128] sm:$0xf]
        %v4304 = vld [vmem:[#allocation2 + $0x12c] sm:$0xff]
        %v4305 = vld [vmem:[#allocation2 + $0x134] sm:$0xf]
        %v4306 = vld [vmem:[#allocation2 + $0x138] sm:$0xff]
        %v4307 = vld [vmem:[#allocation2 + $0x140] sm:$0xf]
        %v4308 = vld [vmem:[#allocation2 + $0x144] sm:$0xff]
        %v4309 = vld [vmem:[#allocation2 + $0x14c] sm:$0xf]
        %v4310 = vld [vmem:[#allocation2 + $0x150] sm:$0xff]
        %v4311 = vld [vmem:[#allocation2 + $0x158] sm:$0xf]
        %v4312 = vld [vmem:[#allocation2 + $0x15c] sm:$0xff]
        %v4313 = vld [vmem:[#allocation2 + $0x164] sm:$0xf]
        %v4314 = vld [vmem:[#allocation2 + $0x168] sm:$0xff]
        %v4315 = vld [vmem:[#allocation2 + $0x170] sm:$0xf]
        %v4316 = vld [vmem:[#allocation2 + $0x174] sm:$0xff]
        %v4317 = vld [vmem:[#allocation2 + $0x17c] sm:$0xf]
        %v4318 = vld [vmem:[#allocation8] sm:$0xf]
        %v4319 = vld [vmem:[#allocation8 + $0x4] sm:$0xf]
        %v4320 = vld [vmem:[#allocation8 + $0x8] sm:$0xf]
        %v4321 = vld [vmem:[#allocation8 + $0xc] sm:$0xf]
        %v4322 = vld [vmem:[#allocation8 + $0x10] sm:$0xf]
        %v4323 = vld [vmem:[#allocation8 + $0x14] sm:$0xf]
        %v4324 = vld [vmem:[#allocation8 + $0x18] sm:$0xf]
        %v4325 = vld [vmem:[#allocation8 + $0x1c] sm:$0xf]
        %v4326 = vld [vmem:[#allocation8 + $0x20] sm:$0xf]
        %v4327 = vld [vmem:[#allocation8 + $0x24] sm:$0xf]
        %v4328 = vld [vmem:[#allocation8 + $0x28] sm:$0xf]
        %v4329 = vld [vmem:[#allocation8 + $0x2c] sm:$0xf]
        %v4330 = vld [vmem:[#allocation8 + $0x30] sm:$0xf]
        %v4331 = vld [vmem:[#allocation8 + $0x34] sm:$0xf]
        %v4332 = vld [vmem:[#allocation8 + $0x38] sm:$0xf]
        %v4333 = vld [vmem:[#allocation8 + $0x3c] sm:$0xf]
        %v4334 = vld [vmem:[#allocation8 + $0x40] sm:$0xf]
        %v4335 = vld [vmem:[#allocation8 + $0x44] sm:$0xf]
        %v4336 = vld [vmem:[#allocation8 + $0x48] sm:$0xf]
        %v4337 = vld [vmem:[#allocation8 + $0x4c] sm:$0xf]
        %v4338 = vld [vmem:[#allocation8 + $0x50] sm:$0xf]
        %v4339 = vld [vmem:[#allocation8 + $0x54] sm:$0xf]
        %v4340 = vld [vmem:[#allocation8 + $0x58] sm:$0xf]
        %v4341 = vld [vmem:[#allocation8 + $0x5c] sm:$0xf]
        %v4342 = vld [vmem:[#allocation8 + $0x60] sm:$0xf]
        %v4343 = vld [vmem:[#allocation8 + $0x64] sm:$0xf]
        %v4344 = vld [vmem:[#allocation8 + $0x68] sm:$0xf]
        %v4345 = vld [vmem:[#allocation8 + $0x6c] sm:$0xf]
        %v4346 = vld [vmem:[#allocation8 + $0x70] sm:$0xf]
        %v4347 = vld [vmem:[#allocation8 + $0x74] sm:$0xf]
        %v4348 = vld [vmem:[#allocation8 + $0x78] sm:$0xf]
        %v4349 = vld [vmem:[#allocation8 + $0x7c] sm:$0xf]
        %v4350 = vld [vmem:[#allocation8 + $0x80] sm:$0xf]
        %v4351 = vld [vmem:[#allocation8 + $0x84] sm:$0xf]
        %v4352 = vld [vmem:[#allocation8 + $0x88] sm:$0xf]
        %v4353 = vld [vmem:[#allocation8 + $0x8c] sm:$0xf]
        %v4354 = vld [vmem:[#allocation8 + $0x90] sm:$0xf]
        %v4355 = vld [vmem:[#allocation8 + $0x94] sm:$0xf]
        %v4356 = vld [vmem:[#allocation8 + $0x98] sm:$0xf]
        %v4357 = vld [vmem:[#allocation8 + $0x9c] sm:$0xf]
        %v4358 = vld [vmem:[#allocation8 + $0xa0] sm:$0xf]
        %v4359 = vld [vmem:[#allocation8 + $0xa4] sm:$0xf]
        %v4360 = vld [vmem:[#allocation8 + $0xa8] sm:$0xf]
        %v4361 = vld [vmem:[#allocation8 + $0xac] sm:$0xf]
        %v4362 = vld [vmem:[#allocation8 + $0xb0] sm:$0xf]
        %v4363 = vld [vmem:[#allocation8 + $0xb4] sm:$0xf]
        %v4364 = vld [vmem:[#allocation8 + $0xb8] sm:$0xf]
        %v4365 = vld [vmem:[#allocation8 + $0xbc] sm:$0xf]
        %v4366 = vld [vmem:[%s778] sm:$0xff]
        %v4367 = vld [vmem:[%s778 + $0x8] sm:$0xf]
        %v4368 = vld [vmem:[%s778 + $0xc] sm:$0xff]
        %v4369 = vld [vmem:[%s778 + $0x14] sm:$0xf]
        %v4370 = vld [vmem:[%s778 + $0x18] sm:$0xff]
        %v4371 = vld [vmem:[%s778 + $0x20] sm:$0xf]
        %v4372 = vld [vmem:[%s778 + $0x24] sm:$0xff]
        %v4373 = vld [vmem:[%s778 + $0x2c] sm:$0xf]
        %v4374 = vld [vmem:[%s778 + $0x30] sm:$0xff]
        %v4375 = vld [vmem:[%s778 + $0x38] sm:$0xf]
        %v4376 = vld [vmem:[%s778 + $0x3c] sm:$0xff]
        %v4377 = vld [vmem:[%s778 + $0x44] sm:$0xf]
        %v4378 = vld [vmem:[%s778 + $0x48] sm:$0xff]
        %v4379 = vld [vmem:[%s778 + $0x50] sm:$0xf]
        %v4380 = vld [vmem:[%s778 + $0x54] sm:$0xff]
        %v4381 = vld [vmem:[%s778 + $0x5c] sm:$0xf]
        %v4382 = vld [vmem:[%s778 + $0x60] sm:$0xff]
        %v4383 = vld [vmem:[%s778 + $0x68] sm:$0xf]
        %v4384 = vld [vmem:[%s778 + $0x6c] sm:$0xff]
        %v4385 = vld [vmem:[%s778 + $0x74] sm:$0xf]
        %v4386 = vld [vmem:[%s778 + $0x78] sm:$0xff]
        %v4387 = vld [vmem:[%s778 + $0x80] sm:$0xf]
        %v4388 = vld [vmem:[%s778 + $0x84] sm:$0xff]
        %v4389 = vld [vmem:[%s778 + $0x8c] sm:$0xf]
        %v4390 = vld [vmem:[%s778 + $0x90] sm:$0xff]
        %v4391 = vld [vmem:[%s778 + $0x98] sm:$0xf]
        %v4392 = vld [vmem:[%s778 + $0x9c] sm:$0xff]
        %v4393 = vld [vmem:[%s778 + $0xa4] sm:$0xf]
        %v4394 = vld [vmem:[%s778 + $0xa8] sm:$0xff]
        %v4395 = vld [vmem:[%s778 + $0xb0] sm:$0xf]
        %v4396 = vld [vmem:[%s778 + $0xb4] sm:$0xff]
        %v4397 = vld [vmem:[%s778 + $0xbc] sm:$0xf]
        %v4398 = vld [vmem:[%s778 + $0xc0] sm:$0xff]
        %v4399 = vld [vmem:[%s778 + $0xc8] sm:$0xf]
        %v4400 = vld [vmem:[%s778 + $0xcc] sm:$0xff]
        %v4401 = vld [vmem:[%s778 + $0xd4] sm:$0xf]
        %v4402 = vld [vmem:[%s778 + $0xd8] sm:$0xff]
        %v4403 = vld [vmem:[%s778 + $0xe0] sm:$0xf]
        %v4404 = vld [vmem:[%s778 + $0xe4] sm:$0xff]
        %v4405 = vld [vmem:[%s778 + $0xec] sm:$0xf]
        %v4406 = vld [vmem:[%s778 + $0xf0] sm:$0xff]
        %v4407 = vld [vmem:[%s778 + $0xf8] sm:$0xf]
        %v4408 = vld [vmem:[%s778 + $0xfc] sm:$0xff]
        %v4409 = vld [vmem:[%s778 + $0x104] sm:$0xf]
        %v4410 = vld [vmem:[%s778 + $0x108] sm:$0xff]
        %v4411 = vld [vmem:[%s778 + $0x110] sm:$0xf]
        %v4412 = vld [vmem:[%s778 + $0x114] sm:$0xff]
        %v4413 = vld [vmem:[%s778 + $0x11c] sm:$0xf]
        %v4414 = vld [vmem:[%s778 + $0x120] sm:$0xff]
        %v4415 = vld [vmem:[%s778 + $0x128] sm:$0xf]
        %v4416 = vld [vmem:[%s778 + $0x12c] sm:$0xff]
        %v4417 = vld [vmem:[%s778 + $0x134] sm:$0xf]
        %v4418 = vld [vmem:[%s778 + $0x138] sm:$0xff]
        %v4419 = vld [vmem:[%s778 + $0x140] sm:$0xf]
        %v4420 = vld [vmem:[%s778 + $0x144] sm:$0xff]
        %v4421 = vld [vmem:[%s778 + $0x14c] sm:$0xf]
        %v4422 = vld [vmem:[%s778 + $0x150] sm:$0xff]
        %v4423 = vld [vmem:[%s778 + $0x158] sm:$0xf]
        %v4424 = vld [vmem:[%s778 + $0x15c] sm:$0xff]
        %v4425 = vld [vmem:[%s778 + $0x164] sm:$0xf]
        %v4426 = vld [vmem:[%s778 + $0x168] sm:$0xff]
        %v4427 = vld [vmem:[%s778 + $0x170] sm:$0xf]
        %v4428 = vld [vmem:[%s778 + $0x174] sm:$0xff]
        %v4429 = vld [vmem:[%s778 + $0x17c] sm:$0xf]
        %s4430 = scalar_lea.vmem [#allocation8], 192
        %v4431 = vld [vmem:[%s4430] sm:$0xf]
        %v4432 = vld [vmem:[%s4430 + $0x4] sm:$0xf]
        %v4433 = vld [vmem:[%s4430 + $0x8] sm:$0xf]
        %v4434 = vld [vmem:[%s4430 + $0xc] sm:$0xf]
        %v4435 = vld [vmem:[%s4430 + $0x10] sm:$0xf]
        %v4436 = vld [vmem:[%s4430 + $0x14] sm:$0xf]
        %v4437 = vld [vmem:[%s4430 + $0x18] sm:$0xf]
        %v4438 = vld [vmem:[%s4430 + $0x1c] sm:$0xf]
        %v4439 = vld [vmem:[%s4430 + $0x20] sm:$0xf]
        %v4440 = vld [vmem:[%s4430 + $0x24] sm:$0xf]
        %v4441 = vld [vmem:[%s4430 + $0x28] sm:$0xf]
        %v4442 = vld [vmem:[%s4430 + $0x2c] sm:$0xf]
        %v4443 = vld [vmem:[%s4430 + $0x30] sm:$0xf]
        %v4444 = vld [vmem:[%s4430 + $0x34] sm:$0xf]
        %v4445 = vld [vmem:[%s4430 + $0x38] sm:$0xf]
        %v4446 = vld [vmem:[%s4430 + $0x3c] sm:$0xf]
        %v4447 = vld [vmem:[%s4430 + $0x40] sm:$0xf]
        %v4448 = vld [vmem:[%s4430 + $0x44] sm:$0xf]
        %v4449 = vld [vmem:[%s4430 + $0x48] sm:$0xf]
        %v4450 = vld [vmem:[%s4430 + $0x4c] sm:$0xf]
        %v4451 = vld [vmem:[%s4430 + $0x50] sm:$0xf]
        %v4452 = vld [vmem:[%s4430 + $0x54] sm:$0xf]
        %v4453 = vld [vmem:[%s4430 + $0x58] sm:$0xf]
        %v4454 = vld [vmem:[%s4430 + $0x5c] sm:$0xf]
        %v4455 = vld [vmem:[%s4430 + $0x60] sm:$0xf]
        %v4456 = vld [vmem:[%s4430 + $0x64] sm:$0xf]
        %v4457 = vld [vmem:[%s4430 + $0x68] sm:$0xf]
        %v4458 = vld [vmem:[%s4430 + $0x6c] sm:$0xf]
        %v4459 = vld [vmem:[%s4430 + $0x70] sm:$0xf]
        %v4460 = vld [vmem:[%s4430 + $0x74] sm:$0xf]
        %v4461 = vld [vmem:[%s4430 + $0x78] sm:$0xf]
        %v4462 = vld [vmem:[%s4430 + $0x7c] sm:$0xf]
        %v4463 = vld [vmem:[%s4430 + $0x80] sm:$0xf]
        %v4464 = vld [vmem:[%s4430 + $0x84] sm:$0xf]
        %v4465 = vld [vmem:[%s4430 + $0x88] sm:$0xf]
        %v4466 = vld [vmem:[%s4430 + $0x8c] sm:$0xf]
        %v4467 = vld [vmem:[%s4430 + $0x90] sm:$0xf]
        %v4468 = vld [vmem:[%s4430 + $0x94] sm:$0xf]
        %v4469 = vld [vmem:[%s4430 + $0x98] sm:$0xf]
        %v4470 = vld [vmem:[%s4430 + $0x9c] sm:$0xf]
        %v4471 = vld [vmem:[%s4430 + $0xa0] sm:$0xf]
        %v4472 = vld [vmem:[%s4430 + $0xa4] sm:$0xf]
        %v4473 = vld [vmem:[%s4430 + $0xa8] sm:$0xf]
        %v4474 = vld [vmem:[%s4430 + $0xac] sm:$0xf]
        %v4475 = vld [vmem:[%s4430 + $0xb0] sm:$0xf]
        %v4476 = vld [vmem:[%s4430 + $0xb4] sm:$0xf]
        %v4477 = vld [vmem:[%s4430 + $0xb8] sm:$0xf]
        %v4478 = vld [vmem:[%s4430 + $0xbc] sm:$0xf]
        %v4543 = vunpack.c.l.b16 %v4366
        %v4544 = vunpack.c.h.b16 %v4366
        %v4545 = vunpack.c.l.b16 %v4367
        %v4546 = vunpack.c.l.b16 %v4368
        %v4547 = vunpack.c.h.b16 %v4368
        %v4548 = vunpack.c.l.b16 %v4369
        %v4549 = vunpack.c.l.b16 %v4370
        %v4550 = vunpack.c.h.b16 %v4370
        %v4551 = vunpack.c.l.b16 %v4371
        %v4552 = vunpack.c.l.b16 %v4372
        %v4553 = vunpack.c.h.b16 %v4372
        %v4554 = vunpack.c.l.b16 %v4373
        %v4555 = vunpack.c.l.b16 %v4374
        %v4556 = vunpack.c.h.b16 %v4374
        %v4557 = vunpack.c.l.b16 %v4375
        %v4558 = vunpack.c.l.b16 %v4376
        %v4559 = vunpack.c.h.b16 %v4376
        %v4560 = vunpack.c.l.b16 %v4377
        %v4561 = vunpack.c.l.b16 %v4378
        %v4562 = vunpack.c.h.b16 %v4378
        %v4563 = vunpack.c.l.b16 %v4379
        %v4564 = vunpack.c.l.b16 %v4380
        %v4565 = vunpack.c.h.b16 %v4380
        %v4566 = vunpack.c.l.b16 %v4381
        %v4567 = vunpack.c.l.b16 %v4382
        %v4568 = vunpack.c.h.b16 %v4382
        %v4569 = vunpack.c.l.b16 %v4383
        %v4570 = vunpack.c.l.b16 %v4384
        %v4571 = vunpack.c.h.b16 %v4384
        %v4572 = vunpack.c.l.b16 %v4385
        %v4573 = vunpack.c.l.b16 %v4386
        %v4574 = vunpack.c.h.b16 %v4386
        %v4575 = vunpack.c.l.b16 %v4387
        %v4576 = vunpack.c.l.b16 %v4388
        %v4577 = vunpack.c.h.b16 %v4388
        %v4578 = vunpack.c.l.b16 %v4389
        %v4579 = vunpack.c.l.b16 %v4390
        %v4580 = vunpack.c.h.b16 %v4390
        %v4581 = vunpack.c.l.b16 %v4391
        %v4582 = vunpack.c.l.b16 %v4392
        %v4583 = vunpack.c.h.b16 %v4392
        %v4584 = vunpack.c.l.b16 %v4393
        %v4585 = vunpack.c.l.b16 %v4394
        %v4586 = vunpack.c.h.b16 %v4394
        %v4587 = vunpack.c.l.b16 %v4395
        %v4588 = vunpack.c.l.b16 %v4396
        %v4589 = vunpack.c.h.b16 %v4396
        %v4590 = vunpack.c.l.b16 %v4397
        %v4591 = vunpack.c.l.b16 %v4398
        %v4592 = vunpack.c.h.b16 %v4398
        %v4593 = vunpack.c.l.b16 %v4399
        %v4594 = vunpack.c.l.b16 %v4400
        %v4595 = vunpack.c.h.b16 %v4400
        %v4596 = vunpack.c.l.b16 %v4401
        %v4597 = vunpack.c.l.b16 %v4402
        %v4598 = vunpack.c.h.b16 %v4402
        %v4599 = vunpack.c.l.b16 %v4403
        %v4600 = vunpack.c.l.b16 %v4404
        %v4601 = vunpack.c.h.b16 %v4404
        %v4602 = vunpack.c.l.b16 %v4405
        %v4603 = vunpack.c.l.b16 %v4406
        %v4604 = vunpack.c.h.b16 %v4406
        %v4605 = vunpack.c.l.b16 %v4407
        %v4606 = vunpack.c.l.b16 %v4408
        %v4607 = vunpack.c.h.b16 %v4408
        %v4608 = vunpack.c.l.b16 %v4409
        %v4609 = vunpack.c.l.b16 %v4410
        %v4610 = vunpack.c.h.b16 %v4410
        %v4611 = vunpack.c.l.b16 %v4411
        %v4612 = vunpack.c.l.b16 %v4412
        %v4613 = vunpack.c.h.b16 %v4412
        %v4614 = vunpack.c.l.b16 %v4413
        %v4615 = vunpack.c.l.b16 %v4414
        %v4616 = vunpack.c.h.b16 %v4414
        %v4617 = vunpack.c.l.b16 %v4415
        %v4618 = vunpack.c.l.b16 %v4416
        %v4619 = vunpack.c.h.b16 %v4416
        %v4620 = vunpack.c.l.b16 %v4417
        %v4621 = vunpack.c.l.b16 %v4418
        %v4622 = vunpack.c.h.b16 %v4418
        %v4623 = vunpack.c.l.b16 %v4419
        %v4624 = vunpack.c.l.b16 %v4420
        %v4625 = vunpack.c.h.b16 %v4420
        %v4626 = vunpack.c.l.b16 %v4421
        %v4627 = vunpack.c.l.b16 %v4422
        %v4628 = vunpack.c.h.b16 %v4422
        %v4629 = vunpack.c.l.b16 %v4423
        %v4630 = vunpack.c.l.b16 %v4424
        %v4631 = vunpack.c.h.b16 %v4424
        %v4632 = vunpack.c.l.b16 %v4425
        %v4633 = vunpack.c.l.b16 %v4426
        %v4634 = vunpack.c.h.b16 %v4426
        %v4635 = vunpack.c.l.b16 %v4427
        %v4636 = vunpack.c.l.b16 %v4428
        %v4637 = vunpack.c.h.b16 %v4428
        %v4638 = vunpack.c.l.b16 %v4429
        %v4639 = vpack.c.b16 %v4546, %v4543
        %v4640 = vpack.c.b16 %v4547, %v4544
        %v4641 = vpack.c.b16 %v4548, %v4545
        %v4642 = vpack.c.b16 %v4552, %v4549
        %v4643 = vpack.c.b16 %v4553, %v4550
        %v4644 = vpack.c.b16 %v4554, %v4551
        %v4645 = vpack.c.b16 %v4558, %v4555
        %v4646 = vpack.c.b16 %v4559, %v4556
        %v4647 = vpack.c.b16 %v4560, %v4557
        %v4648 = vpack.c.b16 %v4564, %v4561
        %v4649 = vpack.c.b16 %v4565, %v4562
        %v4650 = vpack.c.b16 %v4566, %v4563
        %v4651 = vpack.c.b16 %v4570, %v4567
        %v4652 = vpack.c.b16 %v4571, %v4568
        %v4653 = vpack.c.b16 %v4572, %v4569
        %v4654 = vpack.c.b16 %v4576, %v4573
        %v4655 = vpack.c.b16 %v4577, %v4574
        %v4656 = vpack.c.b16 %v4578, %v4575
        %v4657 = vpack.c.b16 %v4582, %v4579
        %v4658 = vpack.c.b16 %v4583, %v4580
        %v4659 = vpack.c.b16 %v4584, %v4581
        %v4660 = vpack.c.b16 %v4588, %v4585
        %v4661 = vpack.c.b16 %v4589, %v4586
        %v4662 = vpack.c.b16 %v4590, %v4587
        %v4663 = vpack.c.b16 %v4594, %v4591
        %v4664 = vpack.c.b16 %v4595, %v4592
        %v4665 = vpack.c.b16 %v4596, %v4593
        %v4666 = vpack.c.b16 %v4600, %v4597
        %v4667 = vpack.c.b16 %v4601, %v4598
        %v4668 = vpack.c.b16 %v4602, %v4599
        %v4669 = vpack.c.b16 %v4606, %v4603
        %v4670 = vpack.c.b16 %v4607, %v4604
        %v4671 = vpack.c.b16 %v4608, %v4605
        %v4672 = vpack.c.b16 %v4612, %v4609
        %v4673 = vpack.c.b16 %v4613, %v4610
        %v4674 = vpack.c.b16 %v4614, %v4611
        %v4675 = vpack.c.b16 %v4618, %v4615
        %v4676 = vpack.c.b16 %v4619, %v4616
        %v4677 = vpack.c.b16 %v4620, %v4617
        %v4678 = vpack.c.b16 %v4624, %v4621
        %v4679 = vpack.c.b16 %v4625, %v4622
        %v4680 = vpack.c.b16 %v4626, %v4623
        %v4681 = vpack.c.b16 %v4630, %v4627
        %v4682 = vpack.c.b16 %v4631, %v4628
        %v4683 = vpack.c.b16 %v4632, %v4629
        %v4684 = vpack.c.b16 %v4636, %v4633
        %v4685 = vpack.c.b16 %v4637, %v4634
        %v4686 = vpack.c.b16 %v4638, %v4635
        %v4783 = vunpack.c.l.b16 %v4431
        %v4784 = vunpack.c.l.b16 %v4432
        %v4785 = vunpack.c.l.b16 %v4433
        %v4786 = vunpack.c.l.b16 %v4434
        %v4787 = vunpack.c.l.b16 %v4435
        %v4788 = vunpack.c.l.b16 %v4436
        %v4789 = vunpack.c.l.b16 %v4437
        %v4790 = vunpack.c.l.b16 %v4438
        %v4791 = vunpack.c.l.b16 %v4439
        %v4792 = vunpack.c.l.b16 %v4440
        %v4793 = vunpack.c.l.b16 %v4441
        %v4794 = vunpack.c.l.b16 %v4442
        %v4795 = vunpack.c.l.b16 %v4443
        %v4796 = vunpack.c.l.b16 %v4444
        %v4797 = vunpack.c.l.b16 %v4445
        %v4798 = vunpack.c.l.b16 %v4446
        %v4799 = vunpack.c.l.b16 %v4447
        %v4800 = vunpack.c.l.b16 %v4448
        %v4801 = vunpack.c.l.b16 %v4449
        %v4802 = vunpack.c.l.b16 %v4450
        %v4803 = vunpack.c.l.b16 %v4451
        %v4804 = vunpack.c.l.b16 %v4452
        %v4805 = vunpack.c.l.b16 %v4453
        %v4806 = vunpack.c.l.b16 %v4454
        %v4807 = vunpack.c.l.b16 %v4455
        %v4808 = vunpack.c.l.b16 %v4456
        %v4809 = vunpack.c.l.b16 %v4457
        %v4810 = vunpack.c.l.b16 %v4458
        %v4811 = vunpack.c.l.b16 %v4459
        %v4812 = vunpack.c.l.b16 %v4460
        %v4813 = vunpack.c.l.b16 %v4461
        %v4814 = vunpack.c.l.b16 %v4462
        %v4815 = vunpack.c.l.b16 %v4463
        %v4816 = vunpack.c.l.b16 %v4464
        %v4817 = vunpack.c.l.b16 %v4465
        %v4818 = vunpack.c.l.b16 %v4466
        %v4819 = vunpack.c.l.b16 %v4467
        %v4820 = vunpack.c.l.b16 %v4468
        %v4821 = vunpack.c.l.b16 %v4469
        %v4822 = vunpack.c.l.b16 %v4470
        %v4823 = vunpack.c.l.b16 %v4471
        %v4824 = vunpack.c.l.b16 %v4472
        %v4825 = vunpack.c.l.b16 %v4473
        %v4826 = vunpack.c.l.b16 %v4474
        %v4827 = vunpack.c.l.b16 %v4475
        %v4828 = vunpack.c.l.b16 %v4476
        %v4829 = vunpack.c.l.b16 %v4477
        %v4830 = vunpack.c.l.b16 %v4478
        %v4831 = vpack.c.b16 %v4784, %v4783
        %v4832 = vpack.c.b16 %v4786, %v4785
        %v4833 = vpack.c.b16 %v4788, %v4787
        %v4834 = vpack.c.b16 %v4790, %v4789
        %v4835 = vpack.c.b16 %v4792, %v4791
        %v4836 = vpack.c.b16 %v4794, %v4793
        %v4837 = vpack.c.b16 %v4796, %v4795
        %v4838 = vpack.c.b16 %v4798, %v4797
        %v4839 = vpack.c.b16 %v4800, %v4799
        %v4840 = vpack.c.b16 %v4802, %v4801
        %v4841 = vpack.c.b16 %v4804, %v4803
        %v4842 = vpack.c.b16 %v4806, %v4805
        %v4843 = vpack.c.b16 %v4808, %v4807
        %v4844 = vpack.c.b16 %v4810, %v4809
        %v4845 = vpack.c.b16 %v4812, %v4811
        %v4846 = vpack.c.b16 %v4814, %v4813
        %v4847 = vpack.c.b16 %v4816, %v4815
        %v4848 = vpack.c.b16 %v4818, %v4817
        %v4849 = vpack.c.b16 %v4820, %v4819
        %v4850 = vpack.c.b16 %v4822, %v4821
        %v4851 = vpack.c.b16 %v4824, %v4823
        %v4852 = vpack.c.b16 %v4826, %v4825
        %v4853 = vpack.c.b16 %v4828, %v4827
        %v4854 = vpack.c.b16 %v4830, %v4829
        %4879 = vmatpush.bf16.msra.mxu0 %v4838
        %4880 = vmatpush.bf16.msra.mxu0 %v4837
        %4881 = vmatpush.bf16.msra.mxu0 %v4836
        %4882 = vmatpush.bf16.msra.mxu0 %v4835
        %4883 = vmatpush.bf16.msra.mxu0 %v4834
        %4884 = vmatpush.bf16.msra.mxu0 %v4833
        %4885 = vmatpush.bf16.msra.mxu0 %v4832
        %4886 = vmatpush.bf16.msra.mxu0 %v4831
        %4887 = vmatmul.bf16.gmra.mxu0 %v4639
        %v4888 = vpop.f32.mrf.mxu0
        %v4889 = vadd.f32 0.0, %v4888
        %v4890 = vpop.f32.mrf.mxu0
        %v4891 = vadd.f32 0.0, %v4890
        %4892 = vmatmul.bf16.gmra.mxu0 %v4642
        %v4893 = vpop.f32.mrf.mxu0
        %v4894 = vadd.f32 0.0, %v4893
        %v4895 = vpop.f32.mrf.mxu0
        %v4896 = vadd.f32 0.0, %v4895
        %4897 = vmatmul.bf16.gmra.mxu0 %v4645
        %v4898 = vpop.f32.mrf.mxu0
        %v4899 = vadd.f32 0.0, %v4898
        %v4900 = vpop.f32.mrf.mxu0
        %v4901 = vadd.f32 0.0, %v4900
        %4902 = vmatmul.bf16.gmra.mxu0 %v4648
        %v4903 = vpop.f32.mrf.mxu0
        %v4904 = vadd.f32 0.0, %v4903
        %v4905 = vpop.f32.mrf.mxu0
        %v4906 = vadd.f32 0.0, %v4905
        %4907 = vmatmul.bf16.gmra.mxu0 %v4651
        %v4908 = vpop.f32.mrf.mxu0
        %v4909 = vadd.f32 0.0, %v4908
        %v4910 = vpop.f32.mrf.mxu0
        %v4911 = vadd.f32 0.0, %v4910
        %4912 = vmatmul.bf16.gmra.mxu0 %v4654
        %v4913 = vpop.f32.mrf.mxu0
        %v4914 = vadd.f32 0.0, %v4913
        %v4915 = vpop.f32.mrf.mxu0
        %v4916 = vadd.f32 0.0, %v4915
        %4917 = vmatmul.bf16.gmra.mxu0 %v4657
        %v4918 = vpop.f32.mrf.mxu0
        %v4919 = vadd.f32 0.0, %v4918
        %v4920 = vpop.f32.mrf.mxu0
        %v4921 = vadd.f32 0.0, %v4920
        %4922 = vmatmul.bf16.gmra.mxu0 %v4660
        %v4923 = vpop.f32.mrf.mxu0
        %v4924 = vadd.f32 0.0, %v4923
        %v4925 = vpop.f32.mrf.mxu0
        %v4926 = vadd.f32 0.0, %v4925
        %4927 = vmatmul.bf16.gmra.mxu0 %v4663
        %v4928 = vpop.f32.mrf.mxu0
        %v4929 = vadd.f32 0.0, %v4928
        %v4930 = vpop.f32.mrf.mxu0
        %v4931 = vadd.f32 0.0, %v4930
        %4932 = vmatmul.bf16.gmra.mxu0 %v4666
        %v4933 = vpop.f32.mrf.mxu0
        %v4934 = vadd.f32 0.0, %v4933
        %v4935 = vpop.f32.mrf.mxu0
        %v4936 = vadd.f32 0.0, %v4935
        %4937 = vmatmul.bf16.gmra.mxu0 %v4669
        %v4938 = vpop.f32.mrf.mxu0
        %v4939 = vadd.f32 0.0, %v4938
        %v4940 = vpop.f32.mrf.mxu0
        %v4941 = vadd.f32 0.0, %v4940
        %4942 = vmatmul.bf16.gmra.mxu0 %v4672
        %v4943 = vpop.f32.mrf.mxu0
        %v4944 = vadd.f32 0.0, %v4943
        %v4945 = vpop.f32.mrf.mxu0
        %v4946 = vadd.f32 0.0, %v4945
        %4947 = vmatmul.bf16.gmra.mxu0 %v4675
        %v4948 = vpop.f32.mrf.mxu0
        %v4949 = vadd.f32 0.0, %v4948
        %v4950 = vpop.f32.mrf.mxu0
        %v4951 = vadd.f32 0.0, %v4950
        %4952 = vmatmul.bf16.gmra.mxu0 %v4678
        %v4953 = vpop.f32.mrf.mxu0
        %v4954 = vadd.f32 0.0, %v4953
        %v4955 = vpop.f32.mrf.mxu0
        %v4956 = vadd.f32 0.0, %v4955
        %4957 = vmatmul.bf16.gmra.mxu0 %v4681
        %v4958 = vpop.f32.mrf.mxu0
        %v4959 = vadd.f32 0.0, %v4958
        %v4960 = vpop.f32.mrf.mxu0
        %v4961 = vadd.f32 0.0, %v4960
        %4962 = vmatmul.bf16.gmra.mxu0 %v4684
        %v4963 = vpop.f32.mrf.mxu0
        %v4964 = vadd.f32 0.0, %v4963
        %v4965 = vpop.f32.mrf.mxu0
        %v4966 = vadd.f32 0.0, %v4965
        %4967 = vdwg.mxu0
        %4968 = vmatpush.bf16.msra.mxu0 %v4846
        %4969 = vmatpush.bf16.msra.mxu0 %v4845
        %4970 = vmatpush.bf16.msra.mxu0 %v4844
        %4971 = vmatpush.bf16.msra.mxu0 %v4843
        %4972 = vmatpush.bf16.msra.mxu0 %v4842
        %4973 = vmatpush.bf16.msra.mxu0 %v4841
        %4974 = vmatpush.bf16.msra.mxu0 %v4840
        %4975 = vmatpush.bf16.msra.mxu0 %v4839
        %4976 = vmatmul.bf16.gmra.mxu0 %v4640
        %v4977 = vpop.f32.mrf.mxu0
        %v4978 = vadd.f32 %v4889, %v4977
        %v4979 = vpop.f32.mrf.mxu0
        %v4980 = vadd.f32 %v4891, %v4979
        %4981 = vmatmul.bf16.gmra.mxu0 %v4643
        %v4982 = vpop.f32.mrf.mxu0
        %v4983 = vadd.f32 %v4894, %v4982
        %v4984 = vpop.f32.mrf.mxu0
        %v4985 = vadd.f32 %v4896, %v4984
        %4986 = vmatmul.bf16.gmra.mxu0 %v4646
        %v4987 = vpop.f32.mrf.mxu0
        %v4988 = vadd.f32 %v4899, %v4987
        %v4989 = vpop.f32.mrf.mxu0
        %v4990 = vadd.f32 %v4901, %v4989
        %4991 = vmatmul.bf16.gmra.mxu0 %v4649
        %v4992 = vpop.f32.mrf.mxu0
        %v4993 = vadd.f32 %v4904, %v4992
        %v4994 = vpop.f32.mrf.mxu0
        %v4995 = vadd.f32 %v4906, %v4994
        %4996 = vmatmul.bf16.gmra.mxu0 %v4652
        %v4997 = vpop.f32.mrf.mxu0
        %v4998 = vadd.f32 %v4909, %v4997
        %v4999 = vpop.f32.mrf.mxu0
        %v5000 = vadd.f32 %v4911, %v4999
        %5001 = vmatmul.bf16.gmra.mxu0 %v4655
        %v5002 = vpop.f32.mrf.mxu0
        %v5003 = vadd.f32 %v4914, %v5002
        %v5004 = vpop.f32.mrf.mxu0
        %v5005 = vadd.f32 %v4916, %v5004
        %5006 = vmatmul.bf16.gmra.mxu0 %v4658
        %v5007 = vpop.f32.mrf.mxu0
        %v5008 = vadd.f32 %v4919, %v5007
        %v5009 = vpop.f32.mrf.mxu0
        %v5010 = vadd.f32 %v4921, %v5009
        %5011 = vmatmul.bf16.gmra.mxu0 %v4661
        %v5012 = vpop.f32.mrf.mxu0
        %v5013 = vadd.f32 %v4924, %v5012
        %v5014 = vpop.f32.mrf.mxu0
        %v5015 = vadd.f32 %v4926, %v5014
        %5016 = vmatmul.bf16.gmra.mxu0 %v4664
        %v5017 = vpop.f32.mrf.mxu0
        %v5018 = vadd.f32 %v4929, %v5017
        %v5019 = vpop.f32.mrf.mxu0
        %v5020 = vadd.f32 %v4931, %v5019
        %5021 = vmatmul.bf16.gmra.mxu0 %v4667
        %v5022 = vpop.f32.mrf.mxu0
        %v5023 = vadd.f32 %v4934, %v5022
        %v5024 = vpop.f32.mrf.mxu0
        %v5025 = vadd.f32 %v4936, %v5024
        %5026 = vmatmul.bf16.gmra.mxu0 %v4670
        %v5027 = vpop.f32.mrf.mxu0
        %v5028 = vadd.f32 %v4939, %v5027
        %v5029 = vpop.f32.mrf.mxu0
        %v5030 = vadd.f32 %v4941, %v5029
        %5031 = vmatmul.bf16.gmra.mxu0 %v4673
        %v5032 = vpop.f32.mrf.mxu0
        %v5033 = vadd.f32 %v4944, %v5032
        %v5034 = vpop.f32.mrf.mxu0
        %v5035 = vadd.f32 %v4946, %v5034
        %5036 = vmatmul.bf16.gmra.mxu0 %v4676
        %v5037 = vpop.f32.mrf.mxu0
        %v5038 = vadd.f32 %v4949, %v5037
        %v5039 = vpop.f32.mrf.mxu0
        %v5040 = vadd.f32 %v4951, %v5039
        %5041 = vmatmul.bf16.gmra.mxu0 %v4679
        %v5042 = vpop.f32.mrf.mxu0
        %v5043 = vadd.f32 %v4954, %v5042
        %v5044 = vpop.f32.mrf.mxu0
        %v5045 = vadd.f32 %v4956, %v5044
        %5046 = vmatmul.bf16.gmra.mxu0 %v4682
        %v5047 = vpop.f32.mrf.mxu0
        %v5048 = vadd.f32 %v4959, %v5047
        %v5049 = vpop.f32.mrf.mxu0
        %v5050 = vadd.f32 %v4961, %v5049
        %5051 = vmatmul.bf16.gmra.mxu0 %v4685
        %v5052 = vpop.f32.mrf.mxu0
        %v5053 = vadd.f32 %v4964, %v5052
        %v5054 = vpop.f32.mrf.mxu0
        %v5055 = vadd.f32 %v4966, %v5054
        %5056 = vdwg.mxu0
        %5057 = vmatpush.bf16.msra.mxu0 %v4854
        %5058 = vmatpush.bf16.msra.mxu0 %v4853
        %5059 = vmatpush.bf16.msra.mxu0 %v4852
        %5060 = vmatpush.bf16.msra.mxu0 %v4851
        %5061 = vmatpush.bf16.msra.mxu0 %v4850
        %5062 = vmatpush.bf16.msra.mxu0 %v4849
        %5063 = vmatpush.bf16.msra.mxu0 %v4848
        %5064 = vmatpush.bf16.msra.mxu0 %v4847
        %5065 = vmatmul.bf16.gmra.mxu0 %v4641
        %v5066 = vpop.f32.mrf.mxu0
        %v5067 = vadd.f32 %v4978, %v5066
        %v5068 = vpop.f32.mrf.mxu0
        %v5069 = vadd.f32 %v4980, %v5068
        %5070 = vmatmul.bf16.gmra.mxu0 %v4644
        %v5071 = vpop.f32.mrf.mxu0
        %v5072 = vadd.f32 %v4983, %v5071
        %v5073 = vpop.f32.mrf.mxu0
        %v5074 = vadd.f32 %v4985, %v5073
        %5075 = vmatmul.bf16.gmra.mxu0 %v4647
        %v5076 = vpop.f32.mrf.mxu0
        %v5077 = vadd.f32 %v4988, %v5076
        %v5078 = vpop.f32.mrf.mxu0
        %v5079 = vadd.f32 %v4990, %v5078
        %5080 = vmatmul.bf16.gmra.mxu0 %v4650
        %v5081 = vpop.f32.mrf.mxu0
        %v5082 = vadd.f32 %v4993, %v5081
        %v5083 = vpop.f32.mrf.mxu0
        %v5084 = vadd.f32 %v4995, %v5083
        %5085 = vmatmul.bf16.gmra.mxu0 %v4653
        %v5086 = vpop.f32.mrf.mxu0
        %v5087 = vadd.f32 %v4998, %v5086
        %v5088 = vpop.f32.mrf.mxu0
        %v5089 = vadd.f32 %v5000, %v5088
        %5090 = vmatmul.bf16.gmra.mxu0 %v4656
        %v5091 = vpop.f32.mrf.mxu0
        %v5092 = vadd.f32 %v5003, %v5091
        %v5093 = vpop.f32.mrf.mxu0
        %v5094 = vadd.f32 %v5005, %v5093
        %5095 = vmatmul.bf16.gmra.mxu0 %v4659
        %v5096 = vpop.f32.mrf.mxu0
        %v5097 = vadd.f32 %v5008, %v5096
        %v5098 = vpop.f32.mrf.mxu0
        %v5099 = vadd.f32 %v5010, %v5098
        %5100 = vmatmul.bf16.gmra.mxu0 %v4662
        %v5101 = vpop.f32.mrf.mxu0
        %v5102 = vadd.f32 %v5013, %v5101
        %v5103 = vpop.f32.mrf.mxu0
        %v5104 = vadd.f32 %v5015, %v5103
        %5105 = vmatmul.bf16.gmra.mxu0 %v4665
        %v5106 = vpop.f32.mrf.mxu0
        %v5107 = vadd.f32 %v5018, %v5106
        %v5108 = vpop.f32.mrf.mxu0
        %v5109 = vadd.f32 %v5020, %v5108
        %5110 = vmatmul.bf16.gmra.mxu0 %v4668
        %v5111 = vpop.f32.mrf.mxu0
        %v5112 = vadd.f32 %v5023, %v5111
        %v5113 = vpop.f32.mrf.mxu0
        %v5114 = vadd.f32 %v5025, %v5113
        %5115 = vmatmul.bf16.gmra.mxu0 %v4671
        %v5116 = vpop.f32.mrf.mxu0
        %v5117 = vadd.f32 %v5028, %v5116
        %v5118 = vpop.f32.mrf.mxu0
        %v5119 = vadd.f32 %v5030, %v5118
        %5120 = vmatmul.bf16.gmra.mxu0 %v4674
        %v5121 = vpop.f32.mrf.mxu0
        %v5122 = vadd.f32 %v5033, %v5121
        %v5123 = vpop.f32.mrf.mxu0
        %v5124 = vadd.f32 %v5035, %v5123
        %5125 = vmatmul.bf16.gmra.mxu0 %v4677
        %v5126 = vpop.f32.mrf.mxu0
        %v5127 = vadd.f32 %v5038, %v5126
        %v5128 = vpop.f32.mrf.mxu0
        %v5129 = vadd.f32 %v5040, %v5128
        %5130 = vmatmul.bf16.gmra.mxu0 %v4680
        %v5131 = vpop.f32.mrf.mxu0
        %v5132 = vadd.f32 %v5043, %v5131
        %v5133 = vpop.f32.mrf.mxu0
        %v5134 = vadd.f32 %v5045, %v5133
        %5135 = vmatmul.bf16.gmra.mxu0 %v4683
        %v5136 = vpop.f32.mrf.mxu0
        %v5137 = vadd.f32 %v5048, %v5136
        %v5138 = vpop.f32.mrf.mxu0
        %v5139 = vadd.f32 %v5050, %v5138
        %5140 = vmatmul.bf16.gmra.mxu0 %v4686
        %v5141 = vpop.f32.mrf.mxu0
        %v5142 = vadd.f32 %v5053, %v5141
        %v5143 = vpop.f32.mrf.mxu0
        %v5144 = vadd.f32 %v5055, %v5143
        %5145 = vdwg.mxu0
        %v5210 = vunpack.c.l.b16 %v4254
        %v5211 = vunpack.c.h.b16 %v4254
        %v5212 = vunpack.c.l.b16 %v4255
        %v5213 = vunpack.c.l.b16 %v4256
        %v5214 = vunpack.c.h.b16 %v4256
        %v5215 = vunpack.c.l.b16 %v4257
        %v5216 = vunpack.c.l.b16 %v4258
        %v5217 = vunpack.c.h.b16 %v4258
        %v5218 = vunpack.c.l.b16 %v4259
        %v5219 = vunpack.c.l.b16 %v4260
        %v5220 = vunpack.c.h.b16 %v4260
        %v5221 = vunpack.c.l.b16 %v4261
        %v5222 = vunpack.c.l.b16 %v4262
        %v5223 = vunpack.c.h.b16 %v4262
        %v5224 = vunpack.c.l.b16 %v4263
        %v5225 = vunpack.c.l.b16 %v4264
        %v5226 = vunpack.c.h.b16 %v4264
        %v5227 = vunpack.c.l.b16 %v4265
        %v5228 = vunpack.c.l.b16 %v4266
        %v5229 = vunpack.c.h.b16 %v4266
        %v5230 = vunpack.c.l.b16 %v4267
        %v5231 = vunpack.c.l.b16 %v4268
        %v5232 = vunpack.c.h.b16 %v4268
        %v5233 = vunpack.c.l.b16 %v4269
        %v5234 = vunpack.c.l.b16 %v4270
        %v5235 = vunpack.c.h.b16 %v4270
        %v5236 = vunpack.c.l.b16 %v4271
        %v5237 = vunpack.c.l.b16 %v4272
        %v5238 = vunpack.c.h.b16 %v4272
        %v5239 = vunpack.c.l.b16 %v4273
        %v5240 = vunpack.c.l.b16 %v4274
        %v5241 = vunpack.c.h.b16 %v4274
        %v5242 = vunpack.c.l.b16 %v4275
        %v5243 = vunpack.c.l.b16 %v4276
        %v5244 = vunpack.c.h.b16 %v4276
        %v5245 = vunpack.c.l.b16 %v4277
        %v5246 = vunpack.c.l.b16 %v4278
        %v5247 = vunpack.c.h.b16 %v4278
        %v5248 = vunpack.c.l.b16 %v4279
        %v5249 = vunpack.c.l.b16 %v4280
        %v5250 = vunpack.c.h.b16 %v4280
        %v5251 = vunpack.c.l.b16 %v4281
        %v5252 = vunpack.c.l.b16 %v4282
        %v5253 = vunpack.c.h.b16 %v4282
        %v5254 = vunpack.c.l.b16 %v4283
        %v5255 = vunpack.c.l.b16 %v4284
        %v5256 = vunpack.c.h.b16 %v4284
        %v5257 = vunpack.c.l.b16 %v4285
        %v5258 = vunpack.c.l.b16 %v4286
        %v5259 = vunpack.c.h.b16 %v4286
        %v5260 = vunpack.c.l.b16 %v4287
        %v5261 = vunpack.c.l.b16 %v4288
        %v5262 = vunpack.c.h.b16 %v4288
        %v5263 = vunpack.c.l.b16 %v4289
        %v5264 = vunpack.c.l.b16 %v4290
        %v5265 = vunpack.c.h.b16 %v4290
        %v5266 = vunpack.c.l.b16 %v4291
        %v5267 = vunpack.c.l.b16 %v4292
        %v5268 = vunpack.c.h.b16 %v4292
        %v5269 = vunpack.c.l.b16 %v4293
        %v5270 = vunpack.c.l.b16 %v4294
        %v5271 = vunpack.c.h.b16 %v4294
        %v5272 = vunpack.c.l.b16 %v4295
        %v5273 = vunpack.c.l.b16 %v4296
        %v5274 = vunpack.c.h.b16 %v4296
        %v5275 = vunpack.c.l.b16 %v4297
        %v5276 = vunpack.c.l.b16 %v4298
        %v5277 = vunpack.c.h.b16 %v4298
        %v5278 = vunpack.c.l.b16 %v4299
        %v5279 = vunpack.c.l.b16 %v4300
        %v5280 = vunpack.c.h.b16 %v4300
        %v5281 = vunpack.c.l.b16 %v4301
        %v5282 = vunpack.c.l.b16 %v4302
        %v5283 = vunpack.c.h.b16 %v4302
        %v5284 = vunpack.c.l.b16 %v4303
        %v5285 = vunpack.c.l.b16 %v4304
        %v5286 = vunpack.c.h.b16 %v4304
        %v5287 = vunpack.c.l.b16 %v4305
        %v5288 = vunpack.c.l.b16 %v4306
        %v5289 = vunpack.c.h.b16 %v4306
        %v5290 = vunpack.c.l.b16 %v4307
        %v5291 = vunpack.c.l.b16 %v4308
        %v5292 = vunpack.c.h.b16 %v4308
        %v5293 = vunpack.c.l.b16 %v4309
        %v5294 = vunpack.c.l.b16 %v4310
        %v5295 = vunpack.c.h.b16 %v4310
        %v5296 = vunpack.c.l.b16 %v4311
        %v5297 = vunpack.c.l.b16 %v4312
        %v5298 = vunpack.c.h.b16 %v4312
        %v5299 = vunpack.c.l.b16 %v4313
        %v5300 = vunpack.c.l.b16 %v4314
        %v5301 = vunpack.c.h.b16 %v4314
        %v5302 = vunpack.c.l.b16 %v4315
        %v5303 = vunpack.c.l.b16 %v4316
        %v5304 = vunpack.c.h.b16 %v4316
        %v5305 = vunpack.c.l.b16 %v4317
        %v5306 = vpack.c.b16 %v5213, %v5210
        %v5307 = vpack.c.b16 %v5214, %v5211
        %v5308 = vpack.c.b16 %v5215, %v5212
        %v5309 = vpack.c.b16 %v5219, %v5216
        %v5310 = vpack.c.b16 %v5220, %v5217
        %v5311 = vpack.c.b16 %v5221, %v5218
        %v5312 = vpack.c.b16 %v5225, %v5222
        %v5313 = vpack.c.b16 %v5226, %v5223
        %v5314 = vpack.c.b16 %v5227, %v5224
        %v5315 = vpack.c.b16 %v5231, %v5228
        %v5316 = vpack.c.b16 %v5232, %v5229
        %v5317 = vpack.c.b16 %v5233, %v5230
        %v5318 = vpack.c.b16 %v5237, %v5234
        %v5319 = vpack.c.b16 %v5238, %v5235
        %v5320 = vpack.c.b16 %v5239, %v5236
        %v5321 = vpack.c.b16 %v5243, %v5240
        %v5322 = vpack.c.b16 %v5244, %v5241
        %v5323 = vpack.c.b16 %v5245, %v5242
        %v5324 = vpack.c.b16 %v5249, %v5246
        %v5325 = vpack.c.b16 %v5250, %v5247
        %v5326 = vpack.c.b16 %v5251, %v5248
        %v5327 = vpack.c.b16 %v5255, %v5252
        %v5328 = vpack.c.b16 %v5256, %v5253
        %v5329 = vpack.c.b16 %v5257, %v5254
        %v5330 = vpack.c.b16 %v5261, %v5258
        %v5331 = vpack.c.b16 %v5262, %v5259
        %v5332 = vpack.c.b16 %v5263, %v5260
        %v5333 = vpack.c.b16 %v5267, %v5264
        %v5334 = vpack.c.b16 %v5268, %v5265
        %v5335 = vpack.c.b16 %v5269, %v5266
        %v5336 = vpack.c.b16 %v5273, %v5270
        %v5337 = vpack.c.b16 %v5274, %v5271
        %v5338 = vpack.c.b16 %v5275, %v5272
        %v5339 = vpack.c.b16 %v5279, %v5276
        %v5340 = vpack.c.b16 %v5280, %v5277
        %v5341 = vpack.c.b16 %v5281, %v5278
        %v5342 = vpack.c.b16 %v5285, %v5282
        %v5343 = vpack.c.b16 %v5286, %v5283
        %v5344 = vpack.c.b16 %v5287, %v5284
        %v5345 = vpack.c.b16 %v5291, %v5288
        %v5346 = vpack.c.b16 %v5292, %v5289
        %v5347 = vpack.c.b16 %v5293, %v5290
        %v5348 = vpack.c.b16 %v5297, %v5294
        %v5349 = vpack.c.b16 %v5298, %v5295
        %v5350 = vpack.c.b16 %v5299, %v5296
        %v5351 = vpack.c.b16 %v5303, %v5300
        %v5352 = vpack.c.b16 %v5304, %v5301
        %v5353 = vpack.c.b16 %v5305, %v5302
        %v5450 = vunpack.c.l.b16 %v4318
        %v5451 = vunpack.c.l.b16 %v4319
        %v5452 = vunpack.c.l.b16 %v4320
        %v5453 = vunpack.c.l.b16 %v4321
        %v5454 = vunpack.c.l.b16 %v4322
        %v5455 = vunpack.c.l.b16 %v4323
        %v5456 = vunpack.c.l.b16 %v4324
        %v5457 = vunpack.c.l.b16 %v4325
        %v5458 = vunpack.c.l.b16 %v4326
        %v5459 = vunpack.c.l.b16 %v4327
        %v5460 = vunpack.c.l.b16 %v4328
        %v5461 = vunpack.c.l.b16 %v4329
        %v5462 = vunpack.c.l.b16 %v4330
        %v5463 = vunpack.c.l.b16 %v4331
        %v5464 = vunpack.c.l.b16 %v4332
        %v5465 = vunpack.c.l.b16 %v4333
        %v5466 = vunpack.c.l.b16 %v4334
        %v5467 = vunpack.c.l.b16 %v4335
        %v5468 = vunpack.c.l.b16 %v4336
        %v5469 = vunpack.c.l.b16 %v4337
        %v5470 = vunpack.c.l.b16 %v4338
        %v5471 = vunpack.c.l.b16 %v4339
        %v5472 = vunpack.c.l.b16 %v4340
        %v5473 = vunpack.c.l.b16 %v4341
        %v5474 = vunpack.c.l.b16 %v4342
        %v5475 = vunpack.c.l.b16 %v4343
        %v5476 = vunpack.c.l.b16 %v4344
        %v5477 = vunpack.c.l.b16 %v4345
        %v5478 = vunpack.c.l.b16 %v4346
        %v5479 = vunpack.c.l.b16 %v4347
        %v5480 = vunpack.c.l.b16 %v4348
        %v5481 = vunpack.c.l.b16 %v4349
        %v5482 = vunpack.c.l.b16 %v4350
        %v5483 = vunpack.c.l.b16 %v4351
        %v5484 = vunpack.c.l.b16 %v4352
        %v5485 = vunpack.c.l.b16 %v4353
        %v5486 = vunpack.c.l.b16 %v4354
        %v5487 = vunpack.c.l.b16 %v4355
        %v5488 = vunpack.c.l.b16 %v4356
        %v5489 = vunpack.c.l.b16 %v4357
        %v5490 = vunpack.c.l.b16 %v4358
        %v5491 = vunpack.c.l.b16 %v4359
        %v5492 = vunpack.c.l.b16 %v4360
        %v5493 = vunpack.c.l.b16 %v4361
        %v5494 = vunpack.c.l.b16 %v4362
        %v5495 = vunpack.c.l.b16 %v4363
        %v5496 = vunpack.c.l.b16 %v4364
        %v5497 = vunpack.c.l.b16 %v4365
        %v5498 = vpack.c.b16 %v5451, %v5450
        %v5499 = vpack.c.b16 %v5453, %v5452
        %v5500 = vpack.c.b16 %v5455, %v5454
        %v5501 = vpack.c.b16 %v5457, %v5456
        %v5502 = vpack.c.b16 %v5459, %v5458
        %v5503 = vpack.c.b16 %v5461, %v5460
        %v5504 = vpack.c.b16 %v5463, %v5462
        %v5505 = vpack.c.b16 %v5465, %v5464
        %v5506 = vpack.c.b16 %v5467, %v5466
        %v5507 = vpack.c.b16 %v5469, %v5468
        %v5508 = vpack.c.b16 %v5471, %v5470
        %v5509 = vpack.c.b16 %v5473, %v5472
        %v5510 = vpack.c.b16 %v5475, %v5474
        %v5511 = vpack.c.b16 %v5477, %v5476
        %v5512 = vpack.c.b16 %v5479, %v5478
        %v5513 = vpack.c.b16 %v5481, %v5480
        %v5514 = vpack.c.b16 %v5483, %v5482
        %v5515 = vpack.c.b16 %v5485, %v5484
        %v5516 = vpack.c.b16 %v5487, %v5486
        %v5517 = vpack.c.b16 %v5489, %v5488
        %v5518 = vpack.c.b16 %v5491, %v5490
        %v5519 = vpack.c.b16 %v5493, %v5492
        %v5520 = vpack.c.b16 %v5495, %v5494
        %v5521 = vpack.c.b16 %v5497, %v5496
        %5546 = vmatpush.bf16.msra.mxu0 %v5505
        %5547 = vmatpush.bf16.msra.mxu0 %v5504
        %5548 = vmatpush.bf16.msra.mxu0 %v5503
        %5549 = vmatpush.bf16.msra.mxu0 %v5502
        %5550 = vmatpush.bf16.msra.mxu0 %v5501
        %5551 = vmatpush.bf16.msra.mxu0 %v5500
        %5552 = vmatpush.bf16.msra.mxu0 %v5499
        %5553 = vmatpush.bf16.msra.mxu0 %v5498
        %5554 = vmatmul.bf16.gmra.mxu0 %v5306
        %v5555 = vpop.f32.mrf.mxu0
        %v5556 = vadd.f32 %v5067, %v5555
        %v5557 = vpop.f32.mrf.mxu0
        %v5558 = vadd.f32 %v5069, %v5557
        %5559 = vmatmul.bf16.gmra.mxu0 %v5309
        %v5560 = vpop.f32.mrf.mxu0
        %v5561 = vadd.f32 %v5072, %v5560
        %v5562 = vpop.f32.mrf.mxu0
        %v5563 = vadd.f32 %v5074, %v5562
        %5564 = vmatmul.bf16.gmra.mxu0 %v5312
        %v5565 = vpop.f32.mrf.mxu0
        %v5566 = vadd.f32 %v5077, %v5565
        %v5567 = vpop.f32.mrf.mxu0
        %v5568 = vadd.f32 %v5079, %v5567
        %5569 = vmatmul.bf16.gmra.mxu0 %v5315
        %v5570 = vpop.f32.mrf.mxu0
        %v5571 = vadd.f32 %v5082, %v5570
        %v5572 = vpop.f32.mrf.mxu0
        %v5573 = vadd.f32 %v5084, %v5572
        %5574 = vmatmul.bf16.gmra.mxu0 %v5318
        %v5575 = vpop.f32.mrf.mxu0
        %v5576 = vadd.f32 %v5087, %v5575
        %v5577 = vpop.f32.mrf.mxu0
        %v5578 = vadd.f32 %v5089, %v5577
        %5579 = vmatmul.bf16.gmra.mxu0 %v5321
        %v5580 = vpop.f32.mrf.mxu0
        %v5581 = vadd.f32 %v5092, %v5580
        %v5582 = vpop.f32.mrf.mxu0
        %v5583 = vadd.f32 %v5094, %v5582
        %5584 = vmatmul.bf16.gmra.mxu0 %v5324
        %v5585 = vpop.f32.mrf.mxu0
        %v5586 = vadd.f32 %v5097, %v5585
        %v5587 = vpop.f32.mrf.mxu0
        %v5588 = vadd.f32 %v5099, %v5587
        %5589 = vmatmul.bf16.gmra.mxu0 %v5327
        %v5590 = vpop.f32.mrf.mxu0
        %v5591 = vadd.f32 %v5102, %v5590
        %v5592 = vpop.f32.mrf.mxu0
        %v5593 = vadd.f32 %v5104, %v5592
        %5594 = vmatmul.bf16.gmra.mxu0 %v5330
        %v5595 = vpop.f32.mrf.mxu0
        %v5596 = vadd.f32 %v5107, %v5595
        %v5597 = vpop.f32.mrf.mxu0
        %v5598 = vadd.f32 %v5109, %v5597
        %5599 = vmatmul.bf16.gmra.mxu0 %v5333
        %v5600 = vpop.f32.mrf.mxu0
        %v5601 = vadd.f32 %v5112, %v5600
        %v5602 = vpop.f32.mrf.mxu0
        %v5603 = vadd.f32 %v5114, %v5602
        %5604 = vmatmul.bf16.gmra.mxu0 %v5336
        %v5605 = vpop.f32.mrf.mxu0
        %v5606 = vadd.f32 %v5117, %v5605
        %v5607 = vpop.f32.mrf.mxu0
        %v5608 = vadd.f32 %v5119, %v5607
        %5609 = vmatmul.bf16.gmra.mxu0 %v5339
        %v5610 = vpop.f32.mrf.mxu0
        %v5611 = vadd.f32 %v5122, %v5610
        %v5612 = vpop.f32.mrf.mxu0
        %v5613 = vadd.f32 %v5124, %v5612
        %5614 = vmatmul.bf16.gmra.mxu0 %v5342
        %v5615 = vpop.f32.mrf.mxu0
        %v5616 = vadd.f32 %v5127, %v5615
        %v5617 = vpop.f32.mrf.mxu0
        %v5618 = vadd.f32 %v5129, %v5617
        %5619 = vmatmul.bf16.gmra.mxu0 %v5345
        %v5620 = vpop.f32.mrf.mxu0
        %v5621 = vadd.f32 %v5132, %v5620
        %v5622 = vpop.f32.mrf.mxu0
        %v5623 = vadd.f32 %v5134, %v5622
        %5624 = vmatmul.bf16.gmra.mxu0 %v5348
        %v5625 = vpop.f32.mrf.mxu0
        %v5626 = vadd.f32 %v5137, %v5625
        %v5627 = vpop.f32.mrf.mxu0
        %v5628 = vadd.f32 %v5139, %v5627
        %5629 = vmatmul.bf16.gmra.mxu0 %v5351
        %v5630 = vpop.f32.mrf.mxu0
        %v5631 = vadd.f32 %v5142, %v5630
        %v5632 = vpop.f32.mrf.mxu0
        %v5633 = vadd.f32 %v5144, %v5632
        %5634 = vdwg.mxu0
        %5635 = vmatpush.bf16.msra.mxu0 %v5513
        %5636 = vmatpush.bf16.msra.mxu0 %v5512
        %5637 = vmatpush.bf16.msra.mxu0 %v5511
        %5638 = vmatpush.bf16.msra.mxu0 %v5510
        %5639 = vmatpush.bf16.msra.mxu0 %v5509
        %5640 = vmatpush.bf16.msra.mxu0 %v5508
        %5641 = vmatpush.bf16.msra.mxu0 %v5507
        %5642 = vmatpush.bf16.msra.mxu0 %v5506
        %5643 = vmatmul.bf16.gmra.mxu0 %v5307
        %v5644 = vpop.f32.mrf.mxu0
        %v5645 = vadd.f32 %v5556, %v5644
        %v5646 = vpop.f32.mrf.mxu0
        %v5647 = vadd.f32 %v5558, %v5646
        %5648 = vmatmul.bf16.gmra.mxu0 %v5310
        %v5649 = vpop.f32.mrf.mxu0
        %v5650 = vadd.f32 %v5561, %v5649
        %v5651 = vpop.f32.mrf.mxu0
        %v5652 = vadd.f32 %v5563, %v5651
        %5653 = vmatmul.bf16.gmra.mxu0 %v5313
        %v5654 = vpop.f32.mrf.mxu0
        %v5655 = vadd.f32 %v5566, %v5654
        %v5656 = vpop.f32.mrf.mxu0
        %v5657 = vadd.f32 %v5568, %v5656
        %5658 = vmatmul.bf16.gmra.mxu0 %v5316
        %v5659 = vpop.f32.mrf.mxu0
        %v5660 = vadd.f32 %v5571, %v5659
        %v5661 = vpop.f32.mrf.mxu0
        %v5662 = vadd.f32 %v5573, %v5661
        %5663 = vmatmul.bf16.gmra.mxu0 %v5319
        %v5664 = vpop.f32.mrf.mxu0
        %v5665 = vadd.f32 %v5576, %v5664
        %v5666 = vpop.f32.mrf.mxu0
        %v5667 = vadd.f32 %v5578, %v5666
        %5668 = vmatmul.bf16.gmra.mxu0 %v5322
        %v5669 = vpop.f32.mrf.mxu0
        %v5670 = vadd.f32 %v5581, %v5669
        %v5671 = vpop.f32.mrf.mxu0
        %v5672 = vadd.f32 %v5583, %v5671
        %5673 = vmatmul.bf16.gmra.mxu0 %v5325
        %v5674 = vpop.f32.mrf.mxu0
        %v5675 = vadd.f32 %v5586, %v5674
        %v5676 = vpop.f32.mrf.mxu0
        %v5677 = vadd.f32 %v5588, %v5676
        %5678 = vmatmul.bf16.gmra.mxu0 %v5328
        %v5679 = vpop.f32.mrf.mxu0
        %v5680 = vadd.f32 %v5591, %v5679
        %v5681 = vpop.f32.mrf.mxu0
        %v5682 = vadd.f32 %v5593, %v5681
        %5683 = vmatmul.bf16.gmra.mxu0 %v5331
        %v5684 = vpop.f32.mrf.mxu0
        %v5685 = vadd.f32 %v5596, %v5684
        %v5686 = vpop.f32.mrf.mxu0
        %v5687 = vadd.f32 %v5598, %v5686
        %5688 = vmatmul.bf16.gmra.mxu0 %v5334
        %v5689 = vpop.f32.mrf.mxu0
        %v5690 = vadd.f32 %v5601, %v5689
        %v5691 = vpop.f32.mrf.mxu0
        %v5692 = vadd.f32 %v5603, %v5691
        %5693 = vmatmul.bf16.gmra.mxu0 %v5337
        %v5694 = vpop.f32.mrf.mxu0
        %v5695 = vadd.f32 %v5606, %v5694
        %v5696 = vpop.f32.mrf.mxu0
        %v5697 = vadd.f32 %v5608, %v5696
        %5698 = vmatmul.bf16.gmra.mxu0 %v5340
        %v5699 = vpop.f32.mrf.mxu0
        %v5700 = vadd.f32 %v5611, %v5699
        %v5701 = vpop.f32.mrf.mxu0
        %v5702 = vadd.f32 %v5613, %v5701
        %5703 = vmatmul.bf16.gmra.mxu0 %v5343
        %v5704 = vpop.f32.mrf.mxu0
        %v5705 = vadd.f32 %v5616, %v5704
        %v5706 = vpop.f32.mrf.mxu0
        %v5707 = vadd.f32 %v5618, %v5706
        %5708 = vmatmul.bf16.gmra.mxu0 %v5346
        %v5709 = vpop.f32.mrf.mxu0
        %v5710 = vadd.f32 %v5621, %v5709
        %v5711 = vpop.f32.mrf.mxu0
        %v5712 = vadd.f32 %v5623, %v5711
        %5713 = vmatmul.bf16.gmra.mxu0 %v5349
        %v5714 = vpop.f32.mrf.mxu0
        %v5715 = vadd.f32 %v5626, %v5714
        %v5716 = vpop.f32.mrf.mxu0
        %v5717 = vadd.f32 %v5628, %v5716
        %5718 = vmatmul.bf16.gmra.mxu0 %v5352
        %v5719 = vpop.f32.mrf.mxu0
        %v5720 = vadd.f32 %v5631, %v5719
        %v5721 = vpop.f32.mrf.mxu0
        %v5722 = vadd.f32 %v5633, %v5721
        %5723 = vdwg.mxu0
        %5724 = vmatpush.bf16.msra.mxu0 %v5521
        %5725 = vmatpush.bf16.msra.mxu0 %v5520
        %5726 = vmatpush.bf16.msra.mxu0 %v5519
        %5727 = vmatpush.bf16.msra.mxu0 %v5518
        %5728 = vmatpush.bf16.msra.mxu0 %v5517
        %5729 = vmatpush.bf16.msra.mxu0 %v5516
        %5730 = vmatpush.bf16.msra.mxu0 %v5515
        %5731 = vmatpush.bf16.msra.mxu0 %v5514
        %5732 = vmatmul.bf16.gmra.mxu0 %v5308
        %v5733 = vpop.f32.mrf.mxu0
        %v5734 = vadd.f32 %v5645, %v5733
        %v5735 = vpop.f32.mrf.mxu0
        %v5736 = vadd.f32 %v5647, %v5735
        %5737 = vmatmul.bf16.gmra.mxu0 %v5311
        %v5738 = vpop.f32.mrf.mxu0
        %v5739 = vadd.f32 %v5650, %v5738
        %v5740 = vpop.f32.mrf.mxu0
        %v5741 = vadd.f32 %v5652, %v5740
        %5742 = vmatmul.bf16.gmra.mxu0 %v5314
        %v5743 = vpop.f32.mrf.mxu0
        %v5744 = vadd.f32 %v5655, %v5743
        %v5745 = vpop.f32.mrf.mxu0
        %v5746 = vadd.f32 %v5657, %v5745
        %5747 = vmatmul.bf16.gmra.mxu0 %v5317
        %v5748 = vpop.f32.mrf.mxu0
        %v5749 = vadd.f32 %v5660, %v5748
        %v5750 = vpop.f32.mrf.mxu0
        %v5751 = vadd.f32 %v5662, %v5750
        %5752 = vmatmul.bf16.gmra.mxu0 %v5320
        %v5753 = vpop.f32.mrf.mxu0
        %v5754 = vadd.f32 %v5665, %v5753
        %v5755 = vpop.f32.mrf.mxu0
        %v5756 = vadd.f32 %v5667, %v5755
        %5757 = vmatmul.bf16.gmra.mxu0 %v5323
        %v5758 = vpop.f32.mrf.mxu0
        %v5759 = vadd.f32 %v5670, %v5758
        %v5760 = vpop.f32.mrf.mxu0
        %v5761 = vadd.f32 %v5672, %v5760
        %5762 = vmatmul.bf16.gmra.mxu0 %v5326
        %v5763 = vpop.f32.mrf.mxu0
        %v5764 = vadd.f32 %v5675, %v5763
        %v5765 = vpop.f32.mrf.mxu0
        %v5766 = vadd.f32 %v5677, %v5765
        %5767 = vmatmul.bf16.gmra.mxu0 %v5329
        %v5768 = vpop.f32.mrf.mxu0
        %v5769 = vadd.f32 %v5680, %v5768
        %v5770 = vpop.f32.mrf.mxu0
        %v5771 = vadd.f32 %v5682, %v5770
        %5772 = vmatmul.bf16.gmra.mxu0 %v5332
        %v5773 = vpop.f32.mrf.mxu0
        %v5774 = vadd.f32 %v5685, %v5773
        %v5775 = vpop.f32.mrf.mxu0
        %v5776 = vadd.f32 %v5687, %v5775
        %5777 = vmatmul.bf16.gmra.mxu0 %v5335
        %v5778 = vpop.f32.mrf.mxu0
        %v5779 = vadd.f32 %v5690, %v5778
        %v5780 = vpop.f32.mrf.mxu0
        %v5781 = vadd.f32 %v5692, %v5780
        %5782 = vmatmul.bf16.gmra.mxu0 %v5338
        %v5783 = vpop.f32.mrf.mxu0
        %v5784 = vadd.f32 %v5695, %v5783
        %v5785 = vpop.f32.mrf.mxu0
        %v5786 = vadd.f32 %v5697, %v5785
        %5787 = vmatmul.bf16.gmra.mxu0 %v5341
        %v5788 = vpop.f32.mrf.mxu0
        %v5789 = vadd.f32 %v5700, %v5788
        %v5790 = vpop.f32.mrf.mxu0
        %v5791 = vadd.f32 %v5702, %v5790
        %5792 = vmatmul.bf16.gmra.mxu0 %v5344
        %v5793 = vpop.f32.mrf.mxu0
        %v5794 = vadd.f32 %v5705, %v5793
        %v5795 = vpop.f32.mrf.mxu0
        %v5796 = vadd.f32 %v5707, %v5795
        %5797 = vmatmul.bf16.gmra.mxu0 %v5347
        %v5798 = vpop.f32.mrf.mxu0
        %v5799 = vadd.f32 %v5710, %v5798
        %v5800 = vpop.f32.mrf.mxu0
        %v5801 = vadd.f32 %v5712, %v5800
        %5802 = vmatmul.bf16.gmra.mxu0 %v5350
        %v5803 = vpop.f32.mrf.mxu0
        %v5804 = vadd.f32 %v5715, %v5803
        %v5805 = vpop.f32.mrf.mxu0
        %v5806 = vadd.f32 %v5717, %v5805
        %5807 = vmatmul.bf16.gmra.mxu0 %v5353
        %v5808 = vpop.f32.mrf.mxu0
        %v5809 = vadd.f32 %v5720, %v5808
        %v5810 = vpop.f32.mrf.mxu0
        %v5811 = vadd.f32 %v5722, %v5810
        %5812 = vdwg.mxu0
        %v5813 = vld [vmem:[%s2681] sm:$0xff]
        %v5814 = vld [vmem:[%s2681 + $0x8] sm:$0xf]
        %v5815 = vld [vmem:[%s2681 + $0xc] sm:$0xff]
        %v5816 = vld [vmem:[%s2681 + $0x14] sm:$0xf]
        %v5817 = vld [vmem:[%s2681 + $0x18] sm:$0xff]
        %v5818 = vld [vmem:[%s2681 + $0x20] sm:$0xf]
        %v5819 = vld [vmem:[%s2681 + $0x24] sm:$0xff]
        %v5820 = vld [vmem:[%s2681 + $0x2c] sm:$0xf]
        %v5821 = vld [vmem:[%s2681 + $0x30] sm:$0xff]
        %v5822 = vld [vmem:[%s2681 + $0x38] sm:$0xf]
        %v5823 = vld [vmem:[%s2681 + $0x3c] sm:$0xff]
        %v5824 = vld [vmem:[%s2681 + $0x44] sm:$0xf]
        %v5825 = vld [vmem:[%s2681 + $0x48] sm:$0xff]
        %v5826 = vld [vmem:[%s2681 + $0x50] sm:$0xf]
        %v5827 = vld [vmem:[%s2681 + $0x54] sm:$0xff]
        %v5828 = vld [vmem:[%s2681 + $0x5c] sm:$0xf]
        %v5829 = vld [vmem:[%s2681 + $0x60] sm:$0xff]
        %v5830 = vld [vmem:[%s2681 + $0x68] sm:$0xf]
        %v5831 = vld [vmem:[%s2681 + $0x6c] sm:$0xff]
        %v5832 = vld [vmem:[%s2681 + $0x74] sm:$0xf]
        %v5833 = vld [vmem:[%s2681 + $0x78] sm:$0xff]
        %v5834 = vld [vmem:[%s2681 + $0x80] sm:$0xf]
        %v5835 = vld [vmem:[%s2681 + $0x84] sm:$0xff]
        %v5836 = vld [vmem:[%s2681 + $0x8c] sm:$0xf]
        %v5837 = vld [vmem:[%s2681 + $0x90] sm:$0xff]
        %v5838 = vld [vmem:[%s2681 + $0x98] sm:$0xf]
        %v5839 = vld [vmem:[%s2681 + $0x9c] sm:$0xff]
        %v5840 = vld [vmem:[%s2681 + $0xa4] sm:$0xf]
        %v5841 = vld [vmem:[%s2681 + $0xa8] sm:$0xff]
        %v5842 = vld [vmem:[%s2681 + $0xb0] sm:$0xf]
        %v5843 = vld [vmem:[%s2681 + $0xb4] sm:$0xff]
        %v5844 = vld [vmem:[%s2681 + $0xbc] sm:$0xf]
        %v5845 = vld [vmem:[%s2681 + $0xc0] sm:$0xff]
        %v5846 = vld [vmem:[%s2681 + $0xc8] sm:$0xf]
        %v5847 = vld [vmem:[%s2681 + $0xcc] sm:$0xff]
        %v5848 = vld [vmem:[%s2681 + $0xd4] sm:$0xf]
        %v5849 = vld [vmem:[%s2681 + $0xd8] sm:$0xff]
        %v5850 = vld [vmem:[%s2681 + $0xe0] sm:$0xf]
        %v5851 = vld [vmem:[%s2681 + $0xe4] sm:$0xff]
        %v5852 = vld [vmem:[%s2681 + $0xec] sm:$0xf]
        %v5853 = vld [vmem:[%s2681 + $0xf0] sm:$0xff]
        %v5854 = vld [vmem:[%s2681 + $0xf8] sm:$0xf]
        %v5855 = vld [vmem:[%s2681 + $0xfc] sm:$0xff]
        %v5856 = vld [vmem:[%s2681 + $0x104] sm:$0xf]
        %v5857 = vld [vmem:[%s2681 + $0x108] sm:$0xff]
        %v5858 = vld [vmem:[%s2681 + $0x110] sm:$0xf]
        %v5859 = vld [vmem:[%s2681 + $0x114] sm:$0xff]
        %v5860 = vld [vmem:[%s2681 + $0x11c] sm:$0xf]
        %v5861 = vld [vmem:[%s2681 + $0x120] sm:$0xff]
        %v5862 = vld [vmem:[%s2681 + $0x128] sm:$0xf]
        %v5863 = vld [vmem:[%s2681 + $0x12c] sm:$0xff]
        %v5864 = vld [vmem:[%s2681 + $0x134] sm:$0xf]
        %v5865 = vld [vmem:[%s2681 + $0x138] sm:$0xff]
        %v5866 = vld [vmem:[%s2681 + $0x140] sm:$0xf]
        %v5867 = vld [vmem:[%s2681 + $0x144] sm:$0xff]
        %v5868 = vld [vmem:[%s2681 + $0x14c] sm:$0xf]
        %v5869 = vld [vmem:[%s2681 + $0x150] sm:$0xff]
        %v5870 = vld [vmem:[%s2681 + $0x158] sm:$0xf]
        %v5871 = vld [vmem:[%s2681 + $0x15c] sm:$0xff]
        %v5872 = vld [vmem:[%s2681 + $0x164] sm:$0xf]
        %v5873 = vld [vmem:[%s2681 + $0x168] sm:$0xff]
        %v5874 = vld [vmem:[%s2681 + $0x170] sm:$0xf]
        %v5875 = vld [vmem:[%s2681 + $0x174] sm:$0xff]
        %v5876 = vld [vmem:[%s2681 + $0x17c] sm:$0xf]
        %s5877 = scalar_lea.vmem [#allocation8], 384
        %v5878 = vld [vmem:[%s5877] sm:$0xf]
        %v5879 = vld [vmem:[%s5877 + $0x4] sm:$0xf]
        %v5880 = vld [vmem:[%s5877 + $0x8] sm:$0xf]
        %v5881 = vld [vmem:[%s5877 + $0xc] sm:$0xf]
        %v5882 = vld [vmem:[%s5877 + $0x10] sm:$0xf]
        %v5883 = vld [vmem:[%s5877 + $0x14] sm:$0xf]
        %v5884 = vld [vmem:[%s5877 + $0x18] sm:$0xf]
        %v5885 = vld [vmem:[%s5877 + $0x1c] sm:$0xf]
        %v5886 = vld [vmem:[%s5877 + $0x20] sm:$0xf]
        %v5887 = vld [vmem:[%s5877 + $0x24] sm:$0xf]
        %v5888 = vld [vmem:[%s5877 + $0x28] sm:$0xf]
        %v5889 = vld [vmem:[%s5877 + $0x2c] sm:$0xf]
        %v5890 = vld [vmem:[%s5877 + $0x30] sm:$0xf]
        %v5891 = vld [vmem:[%s5877 + $0x34] sm:$0xf]
        %v5892 = vld [vmem:[%s5877 + $0x38] sm:$0xf]
        %v5893 = vld [vmem:[%s5877 + $0x3c] sm:$0xf]
        %v5894 = vld [vmem:[%s5877 + $0x40] sm:$0xf]
        %v5895 = vld [vmem:[%s5877 + $0x44] sm:$0xf]
        %v5896 = vld [vmem:[%s5877 + $0x48] sm:$0xf]
        %v5897 = vld [vmem:[%s5877 + $0x4c] sm:$0xf]
        %v5898 = vld [vmem:[%s5877 + $0x50] sm:$0xf]
        %v5899 = vld [vmem:[%s5877 + $0x54] sm:$0xf]
        %v5900 = vld [vmem:[%s5877 + $0x58] sm:$0xf]
        %v5901 = vld [vmem:[%s5877 + $0x5c] sm:$0xf]
        %v5902 = vld [vmem:[%s5877 + $0x60] sm:$0xf]
        %v5903 = vld [vmem:[%s5877 + $0x64] sm:$0xf]
        %v5904 = vld [vmem:[%s5877 + $0x68] sm:$0xf]
        %v5905 = vld [vmem:[%s5877 + $0x6c] sm:$0xf]
        %v5906 = vld [vmem:[%s5877 + $0x70] sm:$0xf]
        %v5907 = vld [vmem:[%s5877 + $0x74] sm:$0xf]
        %v5908 = vld [vmem:[%s5877 + $0x78] sm:$0xf]
        %v5909 = vld [vmem:[%s5877 + $0x7c] sm:$0xf]
        %v5910 = vld [vmem:[%s5877 + $0x80] sm:$0xf]
        %v5911 = vld [vmem:[%s5877 + $0x84] sm:$0xf]
        %v5912 = vld [vmem:[%s5877 + $0x88] sm:$0xf]
        %v5913 = vld [vmem:[%s5877 + $0x8c] sm:$0xf]
        %v5914 = vld [vmem:[%s5877 + $0x90] sm:$0xf]
        %v5915 = vld [vmem:[%s5877 + $0x94] sm:$0xf]
        %v5916 = vld [vmem:[%s5877 + $0x98] sm:$0xf]
        %v5917 = vld [vmem:[%s5877 + $0x9c] sm:$0xf]
        %v5918 = vld [vmem:[%s5877 + $0xa0] sm:$0xf]
        %v5919 = vld [vmem:[%s5877 + $0xa4] sm:$0xf]
        %v5920 = vld [vmem:[%s5877 + $0xa8] sm:$0xf]
        %v5921 = vld [vmem:[%s5877 + $0xac] sm:$0xf]
        %v5922 = vld [vmem:[%s5877 + $0xb0] sm:$0xf]
        %v5923 = vld [vmem:[%s5877 + $0xb4] sm:$0xf]
        %v5924 = vld [vmem:[%s5877 + $0xb8] sm:$0xf]
        %v5925 = vld [vmem:[%s5877 + $0xbc] sm:$0xf]
        %v5990 = vunpack.c.l.b16 %v5813
        %v5991 = vunpack.c.h.b16 %v5813
        %v5992 = vunpack.c.l.b16 %v5814
        %v5993 = vunpack.c.l.b16 %v5815
        %v5994 = vunpack.c.h.b16 %v5815
        %v5995 = vunpack.c.l.b16 %v5816
        %v5996 = vunpack.c.l.b16 %v5817
        %v5997 = vunpack.c.h.b16 %v5817
        %v5998 = vunpack.c.l.b16 %v5818
        %v5999 = vunpack.c.l.b16 %v5819
        %v6000 = vunpack.c.h.b16 %v5819
        %v6001 = vunpack.c.l.b16 %v5820
        %v6002 = vunpack.c.l.b16 %v5821
        %v6003 = vunpack.c.h.b16 %v5821
        %v6004 = vunpack.c.l.b16 %v5822
        %v6005 = vunpack.c.l.b16 %v5823
        %v6006 = vunpack.c.h.b16 %v5823
        %v6007 = vunpack.c.l.b16 %v5824
        %v6008 = vunpack.c.l.b16 %v5825
        %v6009 = vunpack.c.h.b16 %v5825
        %v6010 = vunpack.c.l.b16 %v5826
        %v6011 = vunpack.c.l.b16 %v5827
        %v6012 = vunpack.c.h.b16 %v5827
        %v6013 = vunpack.c.l.b16 %v5828
        %v6014 = vunpack.c.l.b16 %v5829
        %v6015 = vunpack.c.h.b16 %v5829
        %v6016 = vunpack.c.l.b16 %v5830
        %v6017 = vunpack.c.l.b16 %v5831
        %v6018 = vunpack.c.h.b16 %v5831
        %v6019 = vunpack.c.l.b16 %v5832
        %v6020 = vunpack.c.l.b16 %v5833
        %v6021 = vunpack.c.h.b16 %v5833
        %v6022 = vunpack.c.l.b16 %v5834
        %v6023 = vunpack.c.l.b16 %v5835
        %v6024 = vunpack.c.h.b16 %v5835
        %v6025 = vunpack.c.l.b16 %v5836
        %v6026 = vunpack.c.l.b16 %v5837
        %v6027 = vunpack.c.h.b16 %v5837
        %v6028 = vunpack.c.l.b16 %v5838
        %v6029 = vunpack.c.l.b16 %v5839
        %v6030 = vunpack.c.h.b16 %v5839
        %v6031 = vunpack.c.l.b16 %v5840
        %v6032 = vunpack.c.l.b16 %v5841
        %v6033 = vunpack.c.h.b16 %v5841
        %v6034 = vunpack.c.l.b16 %v5842
        %v6035 = vunpack.c.l.b16 %v5843
        %v6036 = vunpack.c.h.b16 %v5843
        %v6037 = vunpack.c.l.b16 %v5844
        %v6038 = vunpack.c.l.b16 %v5845
        %v6039 = vunpack.c.h.b16 %v5845
        %v6040 = vunpack.c.l.b16 %v5846
        %v6041 = vunpack.c.l.b16 %v5847
        %v6042 = vunpack.c.h.b16 %v5847
        %v6043 = vunpack.c.l.b16 %v5848
        %v6044 = vunpack.c.l.b16 %v5849
        %v6045 = vunpack.c.h.b16 %v5849
        %v6046 = vunpack.c.l.b16 %v5850
        %v6047 = vunpack.c.l.b16 %v5851
        %v6048 = vunpack.c.h.b16 %v5851
        %v6049 = vunpack.c.l.b16 %v5852
        %v6050 = vunpack.c.l.b16 %v5853
        %v6051 = vunpack.c.h.b16 %v5853
        %v6052 = vunpack.c.l.b16 %v5854
        %v6053 = vunpack.c.l.b16 %v5855
        %v6054 = vunpack.c.h.b16 %v5855
        %v6055 = vunpack.c.l.b16 %v5856
        %v6056 = vunpack.c.l.b16 %v5857
        %v6057 = vunpack.c.h.b16 %v5857
        %v6058 = vunpack.c.l.b16 %v5858
        %v6059 = vunpack.c.l.b16 %v5859
        %v6060 = vunpack.c.h.b16 %v5859
        %v6061 = vunpack.c.l.b16 %v5860
        %v6062 = vunpack.c.l.b16 %v5861
        %v6063 = vunpack.c.h.b16 %v5861
        %v6064 = vunpack.c.l.b16 %v5862
        %v6065 = vunpack.c.l.b16 %v5863
        %v6066 = vunpack.c.h.b16 %v5863
        %v6067 = vunpack.c.l.b16 %v5864
        %v6068 = vunpack.c.l.b16 %v5865
        %v6069 = vunpack.c.h.b16 %v5865
        %v6070 = vunpack.c.l.b16 %v5866
        %v6071 = vunpack.c.l.b16 %v5867
        %v6072 = vunpack.c.h.b16 %v5867
        %v6073 = vunpack.c.l.b16 %v5868
        %v6074 = vunpack.c.l.b16 %v5869
        %v6075 = vunpack.c.h.b16 %v5869
        %v6076 = vunpack.c.l.b16 %v5870
        %v6077 = vunpack.c.l.b16 %v5871
        %v6078 = vunpack.c.h.b16 %v5871
        %v6079 = vunpack.c.l.b16 %v5872
        %v6080 = vunpack.c.l.b16 %v5873
        %v6081 = vunpack.c.h.b16 %v5873
        %v6082 = vunpack.c.l.b16 %v5874
        %v6083 = vunpack.c.l.b16 %v5875
        %v6084 = vunpack.c.h.b16 %v5875
        %v6085 = vunpack.c.l.b16 %v5876
        %v6086 = vpack.c.b16 %v5993, %v5990
        %v6087 = vpack.c.b16 %v5994, %v5991
        %v6088 = vpack.c.b16 %v5995, %v5992
        %v6089 = vpack.c.b16 %v5999, %v5996
        %v6090 = vpack.c.b16 %v6000, %v5997
        %v6091 = vpack.c.b16 %v6001, %v5998
        %v6092 = vpack.c.b16 %v6005, %v6002
        %v6093 = vpack.c.b16 %v6006, %v6003
        %v6094 = vpack.c.b16 %v6007, %v6004
        %v6095 = vpack.c.b16 %v6011, %v6008
        %v6096 = vpack.c.b16 %v6012, %v6009
        %v6097 = vpack.c.b16 %v6013, %v6010
        %v6098 = vpack.c.b16 %v6017, %v6014
        %v6099 = vpack.c.b16 %v6018, %v6015
        %v6100 = vpack.c.b16 %v6019, %v6016
        %v6101 = vpack.c.b16 %v6023, %v6020
        %v6102 = vpack.c.b16 %v6024, %v6021
        %v6103 = vpack.c.b16 %v6025, %v6022
        %v6104 = vpack.c.b16 %v6029, %v6026
        %v6105 = vpack.c.b16 %v6030, %v6027
        %v6106 = vpack.c.b16 %v6031, %v6028
        %v6107 = vpack.c.b16 %v6035, %v6032
        %v6108 = vpack.c.b16 %v6036, %v6033
        %v6109 = vpack.c.b16 %v6037, %v6034
        %v6110 = vpack.c.b16 %v6041, %v6038
        %v6111 = vpack.c.b16 %v6042, %v6039
        %v6112 = vpack.c.b16 %v6043, %v6040
        %v6113 = vpack.c.b16 %v6047, %v6044
        %v6114 = vpack.c.b16 %v6048, %v6045
        %v6115 = vpack.c.b16 %v6049, %v6046
        %v6116 = vpack.c.b16 %v6053, %v6050
        %v6117 = vpack.c.b16 %v6054, %v6051
        %v6118 = vpack.c.b16 %v6055, %v6052
        %v6119 = vpack.c.b16 %v6059, %v6056
        %v6120 = vpack.c.b16 %v6060, %v6057
        %v6121 = vpack.c.b16 %v6061, %v6058
        %v6122 = vpack.c.b16 %v6065, %v6062
        %v6123 = vpack.c.b16 %v6066, %v6063
        %v6124 = vpack.c.b16 %v6067, %v6064
        %v6125 = vpack.c.b16 %v6071, %v6068
        %v6126 = vpack.c.b16 %v6072, %v6069
        %v6127 = vpack.c.b16 %v6073, %v6070
        %v6128 = vpack.c.b16 %v6077, %v6074
        %v6129 = vpack.c.b16 %v6078, %v6075
        %v6130 = vpack.c.b16 %v6079, %v6076
        %v6131 = vpack.c.b16 %v6083, %v6080
        %v6132 = vpack.c.b16 %v6084, %v6081
        %v6133 = vpack.c.b16 %v6085, %v6082
        %v6230 = vunpack.c.l.b16 %v5878
        %v6231 = vunpack.c.l.b16 %v5879
        %v6232 = vunpack.c.l.b16 %v5880
        %v6233 = vunpack.c.l.b16 %v5881
        %v6234 = vunpack.c.l.b16 %v5882
        %v6235 = vunpack.c.l.b16 %v5883
        %v6236 = vunpack.c.l.b16 %v5884
        %v6237 = vunpack.c.l.b16 %v5885
        %v6238 = vunpack.c.l.b16 %v5886
        %v6239 = vunpack.c.l.b16 %v5887
        %v6240 = vunpack.c.l.b16 %v5888
        %v6241 = vunpack.c.l.b16 %v5889
        %v6242 = vunpack.c.l.b16 %v5890
        %v6243 = vunpack.c.l.b16 %v5891
        %v6244 = vunpack.c.l.b16 %v5892
        %v6245 = vunpack.c.l.b16 %v5893
        %v6246 = vunpack.c.l.b16 %v5894
        %v6247 = vunpack.c.l.b16 %v5895
        %v6248 = vunpack.c.l.b16 %v5896
        %v6249 = vunpack.c.l.b16 %v5897
        %v6250 = vunpack.c.l.b16 %v5898
        %v6251 = vunpack.c.l.b16 %v5899
        %v6252 = vunpack.c.l.b16 %v5900
        %v6253 = vunpack.c.l.b16 %v5901
        %v6254 = vunpack.c.l.b16 %v5902
        %v6255 = vunpack.c.l.b16 %v5903
        %v6256 = vunpack.c.l.b16 %v5904
        %v6257 = vunpack.c.l.b16 %v5905
        %v6258 = vunpack.c.l.b16 %v5906
        %v6259 = vunpack.c.l.b16 %v5907
        %v6260 = vunpack.c.l.b16 %v5908
        %v6261 = vunpack.c.l.b16 %v5909
        %v6262 = vunpack.c.l.b16 %v5910
        %v6263 = vunpack.c.l.b16 %v5911
        %v6264 = vunpack.c.l.b16 %v5912
        %v6265 = vunpack.c.l.b16 %v5913
        %v6266 = vunpack.c.l.b16 %v5914
        %v6267 = vunpack.c.l.b16 %v5915
        %v6268 = vunpack.c.l.b16 %v5916
        %v6269 = vunpack.c.l.b16 %v5917
        %v6270 = vunpack.c.l.b16 %v5918
        %v6271 = vunpack.c.l.b16 %v5919
        %v6272 = vunpack.c.l.b16 %v5920
        %v6273 = vunpack.c.l.b16 %v5921
        %v6274 = vunpack.c.l.b16 %v5922
        %v6275 = vunpack.c.l.b16 %v5923
        %v6276 = vunpack.c.l.b16 %v5924
        %v6277 = vunpack.c.l.b16 %v5925
        %v6278 = vpack.c.b16 %v6231, %v6230
        %v6279 = vpack.c.b16 %v6233, %v6232
        %v6280 = vpack.c.b16 %v6235, %v6234
        %v6281 = vpack.c.b16 %v6237, %v6236
        %v6282 = vpack.c.b16 %v6239, %v6238
        %v6283 = vpack.c.b16 %v6241, %v6240
        %v6284 = vpack.c.b16 %v6243, %v6242
        %v6285 = vpack.c.b16 %v6245, %v6244
        %v6286 = vpack.c.b16 %v6247, %v6246
        %v6287 = vpack.c.b16 %v6249, %v6248
        %v6288 = vpack.c.b16 %v6251, %v6250
        %v6289 = vpack.c.b16 %v6253, %v6252
        %v6290 = vpack.c.b16 %v6255, %v6254
        %v6291 = vpack.c.b16 %v6257, %v6256
        %v6292 = vpack.c.b16 %v6259, %v6258
        %v6293 = vpack.c.b16 %v6261, %v6260
        %v6294 = vpack.c.b16 %v6263, %v6262
        %v6295 = vpack.c.b16 %v6265, %v6264
        %v6296 = vpack.c.b16 %v6267, %v6266
        %v6297 = vpack.c.b16 %v6269, %v6268
        %v6298 = vpack.c.b16 %v6271, %v6270
        %v6299 = vpack.c.b16 %v6273, %v6272
        %v6300 = vpack.c.b16 %v6275, %v6274
        %v6301 = vpack.c.b16 %v6277, %v6276
        %6326 = vmatpush.bf16.msra.mxu0 %v6285
        %6327 = vmatpush.bf16.msra.mxu0 %v6284
        %6328 = vmatpush.bf16.msra.mxu0 %v6283
        %6329 = vmatpush.bf16.msra.mxu0 %v6282
        %6330 = vmatpush.bf16.msra.mxu0 %v6281
        %6331 = vmatpush.bf16.msra.mxu0 %v6280
        %6332 = vmatpush.bf16.msra.mxu0 %v6279
        %6333 = vmatpush.bf16.msra.mxu0 %v6278
        %6334 = vmatmul.bf16.gmra.mxu0 %v6086
        %v6335 = vpop.f32.mrf.mxu0
        %v6336 = vadd.f32 0.0, %v6335
        %v6337 = vpop.f32.mrf.mxu0
        %v6338 = vadd.f32 0.0, %v6337
        %6339 = vmatmul.bf16.gmra.mxu0 %v6089
        %v6340 = vpop.f32.mrf.mxu0
        %v6341 = vadd.f32 0.0, %v6340
        %v6342 = vpop.f32.mrf.mxu0
        %v6343 = vadd.f32 0.0, %v6342
        %6344 = vmatmul.bf16.gmra.mxu0 %v6092
        %v6345 = vpop.f32.mrf.mxu0
        %v6346 = vadd.f32 0.0, %v6345
        %v6347 = vpop.f32.mrf.mxu0
        %v6348 = vadd.f32 0.0, %v6347
        %6349 = vmatmul.bf16.gmra.mxu0 %v6095
        %v6350 = vpop.f32.mrf.mxu0
        %v6351 = vadd.f32 0.0, %v6350
        %v6352 = vpop.f32.mrf.mxu0
        %v6353 = vadd.f32 0.0, %v6352
        %6354 = vmatmul.bf16.gmra.mxu0 %v6098
        %v6355 = vpop.f32.mrf.mxu0
        %v6356 = vadd.f32 0.0, %v6355
        %v6357 = vpop.f32.mrf.mxu0
        %v6358 = vadd.f32 0.0, %v6357
        %6359 = vmatmul.bf16.gmra.mxu0 %v6101
        %v6360 = vpop.f32.mrf.mxu0
        %v6361 = vadd.f32 0.0, %v6360
        %v6362 = vpop.f32.mrf.mxu0
        %v6363 = vadd.f32 0.0, %v6362
        %6364 = vmatmul.bf16.gmra.mxu0 %v6104
        %v6365 = vpop.f32.mrf.mxu0
        %v6366 = vadd.f32 0.0, %v6365
        %v6367 = vpop.f32.mrf.mxu0
        %v6368 = vadd.f32 0.0, %v6367
        %6369 = vmatmul.bf16.gmra.mxu0 %v6107
        %v6370 = vpop.f32.mrf.mxu0
        %v6371 = vadd.f32 0.0, %v6370
        %v6372 = vpop.f32.mrf.mxu0
        %v6373 = vadd.f32 0.0, %v6372
        %6374 = vmatmul.bf16.gmra.mxu0 %v6110
        %v6375 = vpop.f32.mrf.mxu0
        %v6376 = vadd.f32 0.0, %v6375
        %v6377 = vpop.f32.mrf.mxu0
        %v6378 = vadd.f32 0.0, %v6377
        %6379 = vmatmul.bf16.gmra.mxu0 %v6113
        %v6380 = vpop.f32.mrf.mxu0
        %v6381 = vadd.f32 0.0, %v6380
        %v6382 = vpop.f32.mrf.mxu0
        %v6383 = vadd.f32 0.0, %v6382
        %6384 = vmatmul.bf16.gmra.mxu0 %v6116
        %v6385 = vpop.f32.mrf.mxu0
        %v6386 = vadd.f32 0.0, %v6385
        %v6387 = vpop.f32.mrf.mxu0
        %v6388 = vadd.f32 0.0, %v6387
        %6389 = vmatmul.bf16.gmra.mxu0 %v6119
        %v6390 = vpop.f32.mrf.mxu0
        %v6391 = vadd.f32 0.0, %v6390
        %v6392 = vpop.f32.mrf.mxu0
        %v6393 = vadd.f32 0.0, %v6392
        %6394 = vmatmul.bf16.gmra.mxu0 %v6122
        %v6395 = vpop.f32.mrf.mxu0
        %v6396 = vadd.f32 0.0, %v6395
        %v6397 = vpop.f32.mrf.mxu0
        %v6398 = vadd.f32 0.0, %v6397
        %6399 = vmatmul.bf16.gmra.mxu0 %v6125
        %v6400 = vpop.f32.mrf.mxu0
        %v6401 = vadd.f32 0.0, %v6400
        %v6402 = vpop.f32.mrf.mxu0
        %v6403 = vadd.f32 0.0, %v6402
        %6404 = vmatmul.bf16.gmra.mxu0 %v6128
        %v6405 = vpop.f32.mrf.mxu0
        %v6406 = vadd.f32 0.0, %v6405
        %v6407 = vpop.f32.mrf.mxu0
        %v6408 = vadd.f32 0.0, %v6407
        %6409 = vmatmul.bf16.gmra.mxu0 %v6131
        %v6410 = vpop.f32.mrf.mxu0
        %v6411 = vadd.f32 0.0, %v6410
        %v6412 = vpop.f32.mrf.mxu0
        %v6413 = vadd.f32 0.0, %v6412
        %6414 = vdwg.mxu0
        %6415 = vmatpush.bf16.msra.mxu0 %v6293
        %6416 = vmatpush.bf16.msra.mxu0 %v6292
        %6417 = vmatpush.bf16.msra.mxu0 %v6291
        %6418 = vmatpush.bf16.msra.mxu0 %v6290
        %6419 = vmatpush.bf16.msra.mxu0 %v6289
        %6420 = vmatpush.bf16.msra.mxu0 %v6288
        %6421 = vmatpush.bf16.msra.mxu0 %v6287
        %6422 = vmatpush.bf16.msra.mxu0 %v6286
        %6423 = vmatmul.bf16.gmra.mxu0 %v6087
        %v6424 = vpop.f32.mrf.mxu0
        %v6425 = vadd.f32 %v6336, %v6424
        %v6426 = vpop.f32.mrf.mxu0
        %v6427 = vadd.f32 %v6338, %v6426
        %6428 = vmatmul.bf16.gmra.mxu0 %v6090
        %v6429 = vpop.f32.mrf.mxu0
        %v6430 = vadd.f32 %v6341, %v6429
        %v6431 = vpop.f32.mrf.mxu0
        %v6432 = vadd.f32 %v6343, %v6431
        %6433 = vmatmul.bf16.gmra.mxu0 %v6093
        %v6434 = vpop.f32.mrf.mxu0
        %v6435 = vadd.f32 %v6346, %v6434
        %v6436 = vpop.f32.mrf.mxu0
        %v6437 = vadd.f32 %v6348, %v6436
        %6438 = vmatmul.bf16.gmra.mxu0 %v6096
        %v6439 = vpop.f32.mrf.mxu0
        %v6440 = vadd.f32 %v6351, %v6439
        %v6441 = vpop.f32.mrf.mxu0
        %v6442 = vadd.f32 %v6353, %v6441
        %6443 = vmatmul.bf16.gmra.mxu0 %v6099
        %v6444 = vpop.f32.mrf.mxu0
        %v6445 = vadd.f32 %v6356, %v6444
        %v6446 = vpop.f32.mrf.mxu0
        %v6447 = vadd.f32 %v6358, %v6446
        %6448 = vmatmul.bf16.gmra.mxu0 %v6102
        %v6449 = vpop.f32.mrf.mxu0
        %v6450 = vadd.f32 %v6361, %v6449
        %v6451 = vpop.f32.mrf.mxu0
        %v6452 = vadd.f32 %v6363, %v6451
        %6453 = vmatmul.bf16.gmra.mxu0 %v6105
        %v6454 = vpop.f32.mrf.mxu0
        %v6455 = vadd.f32 %v6366, %v6454
        %v6456 = vpop.f32.mrf.mxu0
        %v6457 = vadd.f32 %v6368, %v6456
        %6458 = vmatmul.bf16.gmra.mxu0 %v6108
        %v6459 = vpop.f32.mrf.mxu0
        %v6460 = vadd.f32 %v6371, %v6459
        %v6461 = vpop.f32.mrf.mxu0
        %v6462 = vadd.f32 %v6373, %v6461
        %6463 = vmatmul.bf16.gmra.mxu0 %v6111
        %v6464 = vpop.f32.mrf.mxu0
        %v6465 = vadd.f32 %v6376, %v6464
        %v6466 = vpop.f32.mrf.mxu0
        %v6467 = vadd.f32 %v6378, %v6466
        %6468 = vmatmul.bf16.gmra.mxu0 %v6114
        %v6469 = vpop.f32.mrf.mxu0
        %v6470 = vadd.f32 %v6381, %v6469
        %v6471 = vpop.f32.mrf.mxu0
        %v6472 = vadd.f32 %v6383, %v6471
        %6473 = vmatmul.bf16.gmra.mxu0 %v6117
        %v6474 = vpop.f32.mrf.mxu0
        %v6475 = vadd.f32 %v6386, %v6474
        %v6476 = vpop.f32.mrf.mxu0
        %v6477 = vadd.f32 %v6388, %v6476
        %6478 = vmatmul.bf16.gmra.mxu0 %v6120
        %v6479 = vpop.f32.mrf.mxu0
        %v6480 = vadd.f32 %v6391, %v6479
        %v6481 = vpop.f32.mrf.mxu0
        %v6482 = vadd.f32 %v6393, %v6481
        %6483 = vmatmul.bf16.gmra.mxu0 %v6123
        %v6484 = vpop.f32.mrf.mxu0
        %v6485 = vadd.f32 %v6396, %v6484
        %v6486 = vpop.f32.mrf.mxu0
        %v6487 = vadd.f32 %v6398, %v6486
        %6488 = vmatmul.bf16.gmra.mxu0 %v6126
        %v6489 = vpop.f32.mrf.mxu0
        %v6490 = vadd.f32 %v6401, %v6489
        %v6491 = vpop.f32.mrf.mxu0
        %v6492 = vadd.f32 %v6403, %v6491
        %6493 = vmatmul.bf16.gmra.mxu0 %v6129
        %v6494 = vpop.f32.mrf.mxu0
        %v6495 = vadd.f32 %v6406, %v6494
        %v6496 = vpop.f32.mrf.mxu0
        %v6497 = vadd.f32 %v6408, %v6496
        %6498 = vmatmul.bf16.gmra.mxu0 %v6132
        %v6499 = vpop.f32.mrf.mxu0
        %v6500 = vadd.f32 %v6411, %v6499
        %v6501 = vpop.f32.mrf.mxu0
        %v6502 = vadd.f32 %v6413, %v6501
        %6503 = vdwg.mxu0
        %6504 = vmatpush.bf16.msra.mxu0 %v6301
        %6505 = vmatpush.bf16.msra.mxu0 %v6300
        %6506 = vmatpush.bf16.msra.mxu0 %v6299
        %6507 = vmatpush.bf16.msra.mxu0 %v6298
        %6508 = vmatpush.bf16.msra.mxu0 %v6297
        %6509 = vmatpush.bf16.msra.mxu0 %v6296
        %6510 = vmatpush.bf16.msra.mxu0 %v6295
        %6511 = vmatpush.bf16.msra.mxu0 %v6294
        %6512 = vmatmul.bf16.gmra.mxu0 %v6088
        %v6513 = vpop.f32.mrf.mxu0
        %v6514 = vadd.f32 %v6425, %v6513
        %v6515 = vpop.f32.mrf.mxu0
        %v6516 = vadd.f32 %v6427, %v6515
        %6517 = vmatmul.bf16.gmra.mxu0 %v6091
        %v6518 = vpop.f32.mrf.mxu0
        %v6519 = vadd.f32 %v6430, %v6518
        %v6520 = vpop.f32.mrf.mxu0
        %v6521 = vadd.f32 %v6432, %v6520
        %6522 = vmatmul.bf16.gmra.mxu0 %v6094
        %v6523 = vpop.f32.mrf.mxu0
        %v6524 = vadd.f32 %v6435, %v6523
        %v6525 = vpop.f32.mrf.mxu0
        %v6526 = vadd.f32 %v6437, %v6525
        %6527 = vmatmul.bf16.gmra.mxu0 %v6097
        %v6528 = vpop.f32.mrf.mxu0
        %v6529 = vadd.f32 %v6440, %v6528
        %v6530 = vpop.f32.mrf.mxu0
        %v6531 = vadd.f32 %v6442, %v6530
        %6532 = vmatmul.bf16.gmra.mxu0 %v6100
        %v6533 = vpop.f32.mrf.mxu0
        %v6534 = vadd.f32 %v6445, %v6533
        %v6535 = vpop.f32.mrf.mxu0
        %v6536 = vadd.f32 %v6447, %v6535
        %6537 = vmatmul.bf16.gmra.mxu0 %v6103
        %v6538 = vpop.f32.mrf.mxu0
        %v6539 = vadd.f32 %v6450, %v6538
        %v6540 = vpop.f32.mrf.mxu0
        %v6541 = vadd.f32 %v6452, %v6540
        %6542 = vmatmul.bf16.gmra.mxu0 %v6106
        %v6543 = vpop.f32.mrf.mxu0
        %v6544 = vadd.f32 %v6455, %v6543
        %v6545 = vpop.f32.mrf.mxu0
        %v6546 = vadd.f32 %v6457, %v6545
        %6547 = vmatmul.bf16.gmra.mxu0 %v6109
        %v6548 = vpop.f32.mrf.mxu0
        %v6549 = vadd.f32 %v6460, %v6548
        %v6550 = vpop.f32.mrf.mxu0
        %v6551 = vadd.f32 %v6462, %v6550
        %6552 = vmatmul.bf16.gmra.mxu0 %v6112
        %v6553 = vpop.f32.mrf.mxu0
        %v6554 = vadd.f32 %v6465, %v6553
        %v6555 = vpop.f32.mrf.mxu0
        %v6556 = vadd.f32 %v6467, %v6555
        %6557 = vmatmul.bf16.gmra.mxu0 %v6115
        %v6558 = vpop.f32.mrf.mxu0
        %v6559 = vadd.f32 %v6470, %v6558
        %v6560 = vpop.f32.mrf.mxu0
        %v6561 = vadd.f32 %v6472, %v6560
        %6562 = vmatmul.bf16.gmra.mxu0 %v6118
        %v6563 = vpop.f32.mrf.mxu0
        %v6564 = vadd.f32 %v6475, %v6563
        %v6565 = vpop.f32.mrf.mxu0
        %v6566 = vadd.f32 %v6477, %v6565
        %6567 = vmatmul.bf16.gmra.mxu0 %v6121
        %v6568 = vpop.f32.mrf.mxu0
        %v6569 = vadd.f32 %v6480, %v6568
        %v6570 = vpop.f32.mrf.mxu0
        %v6571 = vadd.f32 %v6482, %v6570
        %6572 = vmatmul.bf16.gmra.mxu0 %v6124
        %v6573 = vpop.f32.mrf.mxu0
        %v6574 = vadd.f32 %v6485, %v6573
        %v6575 = vpop.f32.mrf.mxu0
        %v6576 = vadd.f32 %v6487, %v6575
        %6577 = vmatmul.bf16.gmra.mxu0 %v6127
        %v6578 = vpop.f32.mrf.mxu0
        %v6579 = vadd.f32 %v6490, %v6578
        %v6580 = vpop.f32.mrf.mxu0
        %v6581 = vadd.f32 %v6492, %v6580
        %6582 = vmatmul.bf16.gmra.mxu0 %v6130
        %v6583 = vpop.f32.mrf.mxu0
        %v6584 = vadd.f32 %v6495, %v6583
        %v6585 = vpop.f32.mrf.mxu0
        %v6586 = vadd.f32 %v6497, %v6585
        %6587 = vmatmul.bf16.gmra.mxu0 %v6133
        %v6588 = vpop.f32.mrf.mxu0
        %v6589 = vadd.f32 %v6500, %v6588
        %v6590 = vpop.f32.mrf.mxu0
        %v6591 = vadd.f32 %v6502, %v6590
        %6592 = vdwg.mxu0
        %v6593 = vadd.f32 %v5734, %v6514
        %v6594 = vadd.f32 %v5736, %v6516
        %v6595 = vadd.f32 %v5739, %v6519
        %v6596 = vadd.f32 %v5741, %v6521
        %v6597 = vadd.f32 %v5744, %v6524
        %v6598 = vadd.f32 %v5746, %v6526
        %v6599 = vadd.f32 %v5749, %v6529
        %v6600 = vadd.f32 %v5751, %v6531
        %v6601 = vadd.f32 %v5754, %v6534
        %v6602 = vadd.f32 %v5756, %v6536
        %v6603 = vadd.f32 %v5759, %v6539
        %v6604 = vadd.f32 %v5761, %v6541
        %v6605 = vadd.f32 %v5764, %v6544
        %v6606 = vadd.f32 %v5766, %v6546
        %v6607 = vadd.f32 %v5769, %v6549
        %v6608 = vadd.f32 %v5771, %v6551
        %v6609 = vadd.f32 %v5774, %v6554
        %v6610 = vadd.f32 %v5776, %v6556
        %v6611 = vadd.f32 %v5779, %v6559
        %v6612 = vadd.f32 %v5781, %v6561
        %v6613 = vadd.f32 %v5784, %v6564
        %v6614 = vadd.f32 %v5786, %v6566
        %v6615 = vadd.f32 %v5789, %v6569
        %v6616 = vadd.f32 %v5791, %v6571
        %v6617 = vadd.f32 %v5794, %v6574
        %v6618 = vadd.f32 %v5796, %v6576
        %v6619 = vadd.f32 %v5799, %v6579
        %v6620 = vadd.f32 %v5801, %v6581
        %v6621 = vadd.f32 %v5804, %v6584
        %v6622 = vadd.f32 %v5806, %v6586
        %v6623 = vadd.f32 %v5809, %v6589
        %v6624 = vadd.f32 %v5811, %v6591
        %v6625 = vld [vmem:[%s5] sm:$0x1]
        %v6627 = vperm.slane %v6625, 0
        %v6629 = vmul.f32 %v6593, %v6627
        %v6630 = vmul.f32 %v6594, %v6627
        %v6631 = vmul.f32 %v6595, %v6627
        %v6632 = vmul.f32 %v6596, %v6627
        %v6633 = vmul.f32 %v6597, %v6627
        %v6634 = vmul.f32 %v6598, %v6627
        %v6635 = vmul.f32 %v6599, %v6627
        %v6636 = vmul.f32 %v6600, %v6627
        %v6637 = vmul.f32 %v6601, %v6627
        %v6638 = vmul.f32 %v6602, %v6627
        %v6639 = vmul.f32 %v6603, %v6627
        %v6640 = vmul.f32 %v6604, %v6627
        %v6641 = vmul.f32 %v6605, %v6627
        %v6642 = vmul.f32 %v6606, %v6627
        %v6643 = vmul.f32 %v6607, %v6627
        %v6644 = vmul.f32 %v6608, %v6627
        %v6645 = vmul.f32 %v6609, %v6627
        %v6646 = vmul.f32 %v6610, %v6627
        %v6647 = vmul.f32 %v6611, %v6627
        %v6648 = vmul.f32 %v6612, %v6627
        %v6649 = vmul.f32 %v6613, %v6627
        %v6650 = vmul.f32 %v6614, %v6627
        %v6651 = vmul.f32 %v6615, %v6627
        %v6652 = vmul.f32 %v6616, %v6627
        %v6653 = vmul.f32 %v6617, %v6627
        %v6654 = vmul.f32 %v6618, %v6627
        %v6655 = vmul.f32 %v6619, %v6627
        %v6656 = vmul.f32 %v6620, %v6627
        %v6657 = vmul.f32 %v6621, %v6627
        %v6658 = vmul.f32 %v6622, %v6627
        %v6659 = vmul.f32 %v6623, %v6627
        %v6660 = vmul.f32 %v6624, %v6627
        %v6661 = vld [vmem:[%s6] sm:$0x1]
        %v6663 = vperm.slane %v6661, 0
        %v6665 = vadd.f32 %v6629, %v6663
        %v6666 = vadd.f32 %v6630, %v6663
        %v6667 = vadd.f32 %v6631, %v6663
        %v6668 = vadd.f32 %v6632, %v6663
        %v6669 = vadd.f32 %v6633, %v6663
        %v6670 = vadd.f32 %v6634, %v6663
        %v6671 = vadd.f32 %v6635, %v6663
        %v6672 = vadd.f32 %v6636, %v6663
        %v6673 = vadd.f32 %v6637, %v6663
        %v6674 = vadd.f32 %v6638, %v6663
        %v6675 = vadd.f32 %v6639, %v6663
        %v6676 = vadd.f32 %v6640, %v6663
        %v6677 = vadd.f32 %v6641, %v6663
        %v6678 = vadd.f32 %v6642, %v6663
        %v6679 = vadd.f32 %v6643, %v6663
        %v6680 = vadd.f32 %v6644, %v6663
        %v6681 = vadd.f32 %v6645, %v6663
        %v6682 = vadd.f32 %v6646, %v6663
        %v6683 = vadd.f32 %v6647, %v6663
        %v6684 = vadd.f32 %v6648, %v6663
        %v6685 = vadd.f32 %v6649, %v6663
        %v6686 = vadd.f32 %v6650, %v6663
        %v6687 = vadd.f32 %v6651, %v6663
        %v6688 = vadd.f32 %v6652, %v6663
        %v6689 = vadd.f32 %v6653, %v6663
        %v6690 = vadd.f32 %v6654, %v6663
        %v6691 = vadd.f32 %v6655, %v6663
        %v6692 = vadd.f32 %v6656, %v6663
        %v6693 = vadd.f32 %v6657, %v6663
        %v6694 = vadd.f32 %v6658, %v6663
        %v6695 = vadd.f32 %v6659, %v6663
        %v6696 = vadd.f32 %v6660, %v6663
        %v6697 = vld [vmem:[%s290] sm:$0xf]
        %v6698 = vld [vmem:[%s290 + $0x4] sm:$0xf]
        %v6699 = vld [vmem:[%s290 + $0x8] sm:$0xf]
        %v6700 = vld [vmem:[%s290 + $0xc] sm:$0xf]
        %v6701 = vld [vmem:[%s290 + $0x10] sm:$0xf]
        %v6702 = vld [vmem:[%s290 + $0x14] sm:$0xf]
        %v6703 = vld [vmem:[%s290 + $0x18] sm:$0xf]
        %v6704 = vld [vmem:[%s290 + $0x1c] sm:$0xf]
        %v6705 = vld [vmem:[%s290 + $0x20] sm:$0xf]
        %v6706 = vld [vmem:[%s290 + $0x24] sm:$0xf]
        %v6707 = vld [vmem:[%s290 + $0x28] sm:$0xf]
        %v6708 = vld [vmem:[%s290 + $0x2c] sm:$0xf]
        %v6709 = vld [vmem:[%s290 + $0x30] sm:$0xf]
        %v6710 = vld [vmem:[%s290 + $0x34] sm:$0xf]
        %v6711 = vld [vmem:[%s290 + $0x38] sm:$0xf]
        %v6712 = vld [vmem:[%s290 + $0x3c] sm:$0xf]
        %v6713 = vld [vmem:[%s290 + $0x40] sm:$0xf]
        %v6714 = vld [vmem:[%s290 + $0x44] sm:$0xf]
        %v6715 = vld [vmem:[%s290 + $0x48] sm:$0xf]
        %v6716 = vld [vmem:[%s290 + $0x4c] sm:$0xf]
        %v6717 = vld [vmem:[%s290 + $0x50] sm:$0xf]
        %v6718 = vld [vmem:[%s290 + $0x54] sm:$0xf]
        %v6719 = vld [vmem:[%s290 + $0x58] sm:$0xf]
        %v6720 = vld [vmem:[%s290 + $0x5c] sm:$0xf]
        %v6721 = vld [vmem:[%s290 + $0x60] sm:$0xf]
        %v6722 = vld [vmem:[%s290 + $0x64] sm:$0xf]
        %v6723 = vld [vmem:[%s290 + $0x68] sm:$0xf]
        %v6724 = vld [vmem:[%s290 + $0x6c] sm:$0xf]
        %v6725 = vld [vmem:[%s290 + $0x70] sm:$0xf]
        %v6726 = vld [vmem:[%s290 + $0x74] sm:$0xf]
        %v6727 = vld [vmem:[%s290 + $0x78] sm:$0xf]
        %v6728 = vld [vmem:[%s290 + $0x7c] sm:$0xf]
        %v6729 = vunpack.c.l.bf16 %v6697
        %v6730 = vunpack.c.l.bf16 %v6698
        %v6731 = vunpack.c.l.bf16 %v6699
        %v6732 = vunpack.c.l.bf16 %v6700
        %v6733 = vunpack.c.l.bf16 %v6701
        %v6734 = vunpack.c.l.bf16 %v6702
        %v6735 = vunpack.c.l.bf16 %v6703
        %v6736 = vunpack.c.l.bf16 %v6704
        %v6737 = vunpack.c.l.bf16 %v6705
        %v6738 = vunpack.c.l.bf16 %v6706
        %v6739 = vunpack.c.l.bf16 %v6707
        %v6740 = vunpack.c.l.bf16 %v6708
        %v6741 = vunpack.c.l.bf16 %v6709
        %v6742 = vunpack.c.l.bf16 %v6710
        %v6743 = vunpack.c.l.bf16 %v6711
        %v6744 = vunpack.c.l.bf16 %v6712
        %v6745 = vunpack.c.l.bf16 %v6713
        %v6746 = vunpack.c.l.bf16 %v6714
        %v6747 = vunpack.c.l.bf16 %v6715
        %v6748 = vunpack.c.l.bf16 %v6716
        %v6749 = vunpack.c.l.bf16 %v6717
        %v6750 = vunpack.c.l.bf16 %v6718
        %v6751 = vunpack.c.l.bf16 %v6719
        %v6752 = vunpack.c.l.bf16 %v6720
        %v6753 = vunpack.c.l.bf16 %v6721
        %v6754 = vunpack.c.l.bf16 %v6722
        %v6755 = vunpack.c.l.bf16 %v6723
        %v6756 = vunpack.c.l.bf16 %v6724
        %v6757 = vunpack.c.l.bf16 %v6725
        %v6758 = vunpack.c.l.bf16 %v6726
        %v6759 = vunpack.c.l.bf16 %v6727
        %v6760 = vunpack.c.l.bf16 %v6728
        %v6761 = vadd.f32 %v6665, %v6729
        %v6762 = vadd.f32 %v6666, %v6730
        %v6763 = vadd.f32 %v6667, %v6731
        %v6764 = vadd.f32 %v6668, %v6732
        %v6765 = vadd.f32 %v6669, %v6733
        %v6766 = vadd.f32 %v6670, %v6734
        %v6767 = vadd.f32 %v6671, %v6735
        %v6768 = vadd.f32 %v6672, %v6736
        %v6769 = vadd.f32 %v6673, %v6737
        %v6770 = vadd.f32 %v6674, %v6738
        %v6771 = vadd.f32 %v6675, %v6739
        %v6772 = vadd.f32 %v6676, %v6740
        %v6773 = vadd.f32 %v6677, %v6741
        %v6774 = vadd.f32 %v6678, %v6742
        %v6775 = vadd.f32 %v6679, %v6743
        %v6776 = vadd.f32 %v6680, %v6744
        %v6777 = vadd.f32 %v6681, %v6745
        %v6778 = vadd.f32 %v6682, %v6746
        %v6779 = vadd.f32 %v6683, %v6747
        %v6780 = vadd.f32 %v6684, %v6748
        %v6781 = vadd.f32 %v6685, %v6749
        %v6782 = vadd.f32 %v6686, %v6750
        %v6783 = vadd.f32 %v6687, %v6751
        %v6784 = vadd.f32 %v6688, %v6752
        %v6785 = vadd.f32 %v6689, %v6753
        %v6786 = vadd.f32 %v6690, %v6754
        %v6787 = vadd.f32 %v6691, %v6755
        %v6788 = vadd.f32 %v6692, %v6756
        %v6789 = vadd.f32 %v6693, %v6757
        %v6790 = vadd.f32 %v6694, %v6758
        %v6791 = vadd.f32 %v6695, %v6759
        %v6792 = vadd.f32 %v6696, %v6760
        %v6793 = vmax.f32 %v6761, 0.0
        %v6794 = vmax.f32 %v6762, 0.0
        %v6795 = vmax.f32 %v6763, 0.0
        %v6796 = vmax.f32 %v6764, 0.0
        %v6797 = vmax.f32 %v6765, 0.0
        %v6798 = vmax.f32 %v6766, 0.0
        %v6799 = vmax.f32 %v6767, 0.0
        %v6800 = vmax.f32 %v6768, 0.0
        %v6801 = vmax.f32 %v6769, 0.0
        %v6802 = vmax.f32 %v6770, 0.0
        %v6803 = vmax.f32 %v6771, 0.0
        %v6804 = vmax.f32 %v6772, 0.0
        %v6805 = vmax.f32 %v6773, 0.0
        %v6806 = vmax.f32 %v6774, 0.0
        %v6807 = vmax.f32 %v6775, 0.0
        %v6808 = vmax.f32 %v6776, 0.0
        %v6809 = vmax.f32 %v6777, 0.0
        %v6810 = vmax.f32 %v6778, 0.0
        %v6811 = vmax.f32 %v6779, 0.0
        %v6812 = vmax.f32 %v6780, 0.0
        %v6813 = vmax.f32 %v6781, 0.0
        %v6814 = vmax.f32 %v6782, 0.0
        %v6815 = vmax.f32 %v6783, 0.0
        %v6816 = vmax.f32 %v6784, 0.0
        %v6817 = vmax.f32 %v6785, 0.0
        %v6818 = vmax.f32 %v6786, 0.0
        %v6819 = vmax.f32 %v6787, 0.0
        %v6820 = vmax.f32 %v6788, 0.0
        %v6821 = vmax.f32 %v6789, 0.0
        %v6822 = vmax.f32 %v6790, 0.0
        %v6823 = vmax.f32 %v6791, 0.0
        %v6824 = vmax.f32 %v6792, 0.0
        %6825 = vst [vmem:[%s331] sm:$0xff] %v6793
        %6826 = vst [vmem:[%s331 + $0x8] sm:$0xff] %v6794
        %6827 = vst [vmem:[%s331 + $0x10] sm:$0xff] %v6795
        %6828 = vst [vmem:[%s331 + $0x18] sm:$0xff] %v6796
        %6829 = vst [vmem:[%s331 + $0x20] sm:$0xff] %v6797
        %6830 = vst [vmem:[%s331 + $0x28] sm:$0xff] %v6798
        %6831 = vst [vmem:[%s331 + $0x30] sm:$0xff] %v6799
        %6832 = vst [vmem:[%s331 + $0x38] sm:$0xff] %v6800
        %6833 = vst [vmem:[%s331 + $0x40] sm:$0xff] %v6801
        %6834 = vst [vmem:[%s331 + $0x48] sm:$0xff] %v6802
        %6835 = vst [vmem:[%s331 + $0x50] sm:$0xff] %v6803
        %6836 = vst [vmem:[%s331 + $0x58] sm:$0xff] %v6804
        %6837 = vst [vmem:[%s331 + $0x60] sm:$0xff] %v6805
        %6838 = vst [vmem:[%s331 + $0x68] sm:$0xff] %v6806
        %6839 = vst [vmem:[%s331 + $0x70] sm:$0xff] %v6807
        %6840 = vst [vmem:[%s331 + $0x78] sm:$0xff] %v6808
        %6841 = vst [vmem:[%s331 + $0x80] sm:$0xff] %v6809
        %6842 = vst [vmem:[%s331 + $0x88] sm:$0xff] %v6810
        %6843 = vst [vmem:[%s331 + $0x90] sm:$0xff] %v6811
        %6844 = vst [vmem:[%s331 + $0x98] sm:$0xff] %v6812
        %6845 = vst [vmem:[%s331 + $0xa0] sm:$0xff] %v6813
        %6846 = vst [vmem:[%s331 + $0xa8] sm:$0xff] %v6814
        %6847 = vst [vmem:[%s331 + $0xb0] sm:$0xff] %v6815
        %6848 = vst [vmem:[%s331 + $0xb8] sm:$0xff] %v6816
        %6849 = vst [vmem:[%s331 + $0xc0] sm:$0xff] %v6817
        %6850 = vst [vmem:[%s331 + $0xc8] sm:$0xff] %v6818
        %6851 = vst [vmem:[%s331 + $0xd0] sm:$0xff] %v6819
        %6852 = vst [vmem:[%s331 + $0xd8] sm:$0xff] %v6820
        %6853 = vst [vmem:[%s331 + $0xe0] sm:$0xff] %v6821
        %6854 = vst [vmem:[%s331 + $0xe8] sm:$0xff] %v6822
        %6855 = vst [vmem:[%s331 + $0xf0] sm:$0xff] %v6823
        %6856 = vst [vmem:[%s331 + $0xf8] sm:$0xff] %v6824
        %s6857 = sand.u32 %s185, 1
        %s6858 = scalar_lea.sflag [#allocation5], %s6857
        %s6859 = sand.u32 %s185, 1
        %s6860 = smul.addr %s6859, 256
        %s6861 = scalar_lea.vmem [#allocation9], %s6860
        // Predicated region
        $region61: #{tpu_custom_call.1} parent=47 // pred_check
          %p6862 = pneg %p195
        $region62: #{tpu_custom_call.1} parent=47 // pred_check_branch
          %6864 = sbr.rel (%p6862) target = $region64
        $region63: #{tpu_custom_call.1} parent=47 // pred_region
          %6866 = vsyncadd %s6858, 0
          %s6867 = smul.addr %s25, 32
          %s6868 = smul.addr %s6867, 8
          %s6869 = scalar_lea.hbm %s7, %s6868
          %s6870 = sshll.u32 %s6861, 4
          %s6871 = int_to_ptr.vmem [resolvable:$true] %s6870
          %s6872 = sshll.u32 %s6869, 4
          %s6873 = int_to_ptr.hbm [resolvable:$true] %s6872
          %6878 = dma.vmem_to_hbm [thread:$0]  %s6871, 4096, %s6873, %s6858, 128, 128, 8
        $region64: #{tpu_custom_call.1} parent=47 // pred_fallthru
          _
      $region48: #{tpu_custom_call.1} parent=5 // pred_fallthru
        _
      %p6879 = scmp.le.s32.totalorder 2, %s20
      // Predicated region
      $region65: #{tpu_custom_call.1} parent=5 // pred_check
        %p6880 = pneg %p6879
      $region66: #{tpu_custom_call.1} parent=5 // pred_check_branch
        %6882 = sbr.rel (%p6880) target = $region68
      $region67: #{tpu_custom_call.1} parent=5 // pred_region
        %s6883 = ssub.s32 %s20, 2
        // Predicated region
        $region69: #{tpu_custom_call.1} parent=67 // pred_check
          %p6884 = pneg %p201
        $region70: #{tpu_custom_call.1} parent=67 // pred_check_branch
          %6886 = sbr.rel (%p6884) target = $region72
        $region71: #{tpu_custom_call.1} parent=67 // pred_region
          %s6887 = sand.u32 %s186, 1
          %s6888 = scalar_lea.sflag [#allocation5], %s6887
          %s6889 = sand.u32 %s186, 1
          %s6890 = smul.addr %s6889, 256
          %s6891 = scalar_lea.vmem [#allocation9], %s6890
          %6893 = dma.done %s6888, 4096
        $region72: #{tpu_custom_call.1} parent=67 // pred_fallthru
          _
      $region68: #{tpu_custom_call.1} parent=5 // pred_fallthru
        _
    $region6: #{tpu_custom_call.1} parent=1 // loop_footer
      %s24 = sadd.s32 1, %s20
    $region7: #{tpu_custom_call.1} parent=1 // loop_footer_branch
      %19 = sbr.rel target = $region3
    $region8: #{tpu_custom_call.1} parent=1 // loop_exit
      _
    %6894 = vsyncpa [#allocation4], 1
    %s6895 = scalar_lea.sflag [#allocation4], 1
    %6896 = vsyncpa %s6895, 1
    %6897 = vsyncpa [#allocation7], 1
    %6898 = vsyncpa [#allocation5], 1
    %s6899 = scalar_lea.sflag [#allocation5], 1
    %6900 = vsyncpa %s6899, 1

</llo_original>
